<compile_context>
chip_gen: v7x
topology: tpu7x:2x2x1
jax: 0.10.0
libtpu: 0.0.40
codegen_flags: <defaults>
</compile_context>

<pallas_src>
import functools

import jax
import jax.numpy as jnp
from jax import lax
from jax.experimental import pallas as pl
from jax.experimental.pallas import tpu as pltpu


# ----------------------------------------------------------------------------
# Pallas kernel: fused  (patches_bf16 @ weight_bf16) + bias  [+ ReLU]
# ----------------------------------------------------------------------------
def _fused_gemm_kernel(p_ref, w_ref, b_ref, o_ref, *, relu):
    # bf16 x bf16 MXU matmul with f32 accumulation; epilogue stays f32.
    acc = jnp.dot(p_ref[...], w_ref[...], preferred_element_type=jnp.float32)
    y = acc + b_ref[...]
    if relu:
        y = jnp.maximum(y, 0.0)
    o_ref[...] = y


def gemm_bias_act(p, w, b, *, relu):
    """p: (M, K) bf16, w: (K, Np) bf16, b: (1, Np) f32 -> (M, Np) f32.

    Np is a multiple of 128 (lane-dense output stores)."""
    M, K = p.shape
    Kw, Np = w.shape
    assert K == Kw and Np % 128 == 0, (p.shape, w.shape)

    Mp = ((M + 7) // 8) * 8
    if Mp != M:  # not hit at these shapes; kept only for odd-M generality
        p = jnp.pad(p, ((0, Mp - M), (0, 0)))

    # >= 2 row tiles when possible so both TensorCores get work on v7x; tiles
    # stay large (M/2 rows, whole K and N) so DMA / per-step overheads are
    # amortized and everything fits comfortably in VMEM.
    if Mp >= 16 and (Mp // 2) % 8 == 0:
        tm = Mp // 2
    else:
        tm = Mp
    grid_m = Mp // tm

    out = pl.pallas_call(
        functools.partial(_fused_gemm_kernel, relu=relu),
        out_shape=jax.ShapeDtypeStruct((Mp, Np), jnp.float32),
        grid=(grid_m,),
        in_specs=[
            pl.BlockSpec((tm, K), lambda i: (i, 0)),
            pl.BlockSpec((K, Np), lambda i: (0, 0)),
            pl.BlockSpec((1, Np), lambda i: (0, 0)),
        ],
        out_specs=pl.BlockSpec((tm, Np), lambda i: (i, 0)),
        compiler_params=pltpu.CompilerParams(
            dimension_semantics=("parallel",)),
    )(p, w, b)
    return out if Mp == M else out[:M]


# ----------------------------------------------------------------------------
# JAX glue: NHWC im2col (K order = (di, dj, ci)), conv wrapper, 2x upsample
# ----------------------------------------------------------------------------
def im2col_nhwc(x, kh, kw, stride, pad):
    """x: (N, H, W, C) -> patches (N*Ho*Wo, kh*kw*C) with (di, dj, ci) K order."""
    N, H, W, C = x.shape
    xp = jnp.pad(x, ((0, 0), (pad, pad), (pad, pad), (0, 0)))
    Ho = (H + 2 * pad - kh) // stride + 1
    Wo = (W + 2 * pad - kw) // stride + 1
    cols = [
        xp[:, di:di + stride * Ho:stride, dj:dj + stride * Wo:stride, :]
        for di in range(kh) for dj in range(kw)
    ]
    patches = jnp.stack(cols, axis=3)          # (N, Ho, Wo, kh*kw, C)
    return patches.reshape(N * Ho * Wo, kh * kw * C), Ho, Wo


def conv_bn_relu(x, layer, *, cout, k, stride, pad, relu):
    """NHWC Conv2d(bias=False) + folded BN + optional ReLU via the Pallas GEMM."""
    N = x.shape[0]
    patches, Ho, Wo = im2col_nhwc(x.astype(jnp.bfloat16), k, k, stride, pad)
    assert patches.shape[1] == layer["wk"].shape[0], (patches.shape, layer["wk"].shape)
    out = gemm_bias_act(patches, layer["wk"], layer["b"], relu=relu)
    # Slice off the channel padding (fuses into the next layer's im2col).
    return out.reshape(N, Ho, Wo, out.shape[-1])[..., :cout]


def _up2x_axis(v, axis):
    """Exact-2x bilinear (align_corners=False) upsample along `axis`."""
    n = v.shape[axis]
    prev = jnp.concatenate(
        [lax.slice_in_dim(v, 0, 1, axis=axis),
         lax.slice_in_dim(v, 0, n - 1, axis=axis)], axis=axis)
    nxt = jnp.concatenate(
        [lax.slice_in_dim(v, 1, n, axis=axis),
         lax.slice_in_dim(v, n - 1, n, axis=axis)], axis=axis)
    even = 0.25 * prev + 0.75 * v          # output index 2m
    odd = 0.75 * v + 0.25 * nxt            # output index 2m+1
    out = jnp.stack([even, odd], axis=axis + 1)
    shp = list(v.shape)
    shp[axis] = 2 * n
    return out.reshape(shp)


def upsample2x_bilinear(x):
    """NHWC 2x bilinear upsample matching PyTorch align_corners=False."""
    return _up2x_axis(_up2x_axis(x, 1), 2)


# ----------------------------------------------------------------------------
# Parameters (deterministic init) and kernel-ready preparation
# ----------------------------------------------------------------------------
def init_params(key, inner=32, in_ch=1, out_ch=1):
    specs = {  # name: (Cout, Cin, k)
        "down1": (inner // 4, in_ch, 4),
        "down2": (inner // 2, inner // 4, 4),
        "down3": (inner, inner // 2, 4),
        "up1": (inner // 2, inner, 3),
        "up2": (inner // 4, inner // 2 + inner // 2, 3),
        "up3": (inner // 8, inner // 4 + inner // 4, 3),
    }
    params = {}
    eps = 1e-5
    for name, (co, ci, k) in specs.items():
        key, k1, k2, k3, k4, k5 = jax.random.split(key, 6)
        w = jax.random.normal(k1, (co, ci, k, k), jnp.float32) * 0.1
        gamma = 1.0 + 0.1 * jax.random.normal(k2, (co,), jnp.float32)
        beta = 0.1 * jax.random.normal(k3, (co,), jnp.float32)
        mean = 0.1 * jax.random.normal(k4, (co,), jnp.float32)
        var = 1.0 + 0.1 * jax.random.uniform(k5, (co,), jnp.float32)
        scale = gamma / jnp.sqrt(var + eps)
        bias = beta - mean * scale
        params[name] = dict(w=w, scale=scale, bias=bias)
    key, k1, k2 = jax.random.split(key, 3)
    w = jax.random.normal(k1, (out_ch, inner // 8, 1, 1), jnp.float32) * 0.1
    b = 0.1 * jax.random.normal(k2, (out_ch,), jnp.float32)
    params["out"] = dict(w=w, scale=jnp.ones((out_ch,), jnp.float32), bias=b)
    return params


def prepare_kernel_params(params):
    """Fold BN scale into weights, reorder to (di,dj,ci)xCout, pad Cout to 128,
    cast matmul operands to bf16. Bias stays f32."""
    prepared = {}
    for name, pr in params.items():
        w = pr["w"] * pr["scale"][:, None, None, None]        # fold BN scale
        cout, cin, kh, kw = w.shape
        wk = jnp.transpose(w, (2, 3, 1, 0)).reshape(kh * kw * cin, cout)
        npad = (-cout) % 128                                   # lane-dense out
        wk = jnp.pad(wk, ((0, 0), (0, npad))).astype(jnp.bfloat16)
        b = jnp.pad(pr["bias"], (0, npad)).reshape(1, -1).astype(jnp.float32)
        prepared[name] = dict(wk=wk, b=b)
    return prepared


# ----------------------------------------------------------------------------
# Full forward (Pallas path, NHWC internally)
# ----------------------------------------------------------------------------
def fcn_forward(params, x, *, img_size, inner, out_ch):
    # Exact-2x upsampling requires the down path sizes to halve cleanly.
    assert img_size % 8 == 0, "img_size must be a multiple of 8"
    x = jnp.transpose(x, (0, 2, 3, 1))                         # NCHW -> NHWC

    d1 = conv_bn_relu(x, params["down1"], cout=inner // 4, k=4, stride=2, pad=1, relu=True)
    d2 = conv_bn_relu(d1, params["down2"], cout=inner // 2, k=4, stride=2, pad=1, relu=True)
    mid = conv_bn_relu(d2, params["down3"], cout=inner, k=4, stride=2, pad=1, relu=True)

    u1 = conv_bn_relu(mid, params["up1"], cout=inner // 2, k=3, stride=1, pad=1, relu=True)
    u1 = jnp.concatenate([upsample2x_bilinear(u1), d2], axis=-1)
    u2 = conv_bn_relu(u1, params["up2"], cout=inner // 4, k=3, stride=1, pad=1, relu=True)
    u2 = jnp.concatenate([upsample2x_bilinear(u2), d1], axis=-1)
    u3 = conv_bn_relu(u2, params["up3"], cout=inner // 8, k=3, stride=1, pad=1, relu=True)
    u3 = upsample2x_bilinear(u3)

    out = conv_bn_relu(u3, params["out"], cout=out_ch, k=1, stride=1, pad=0, relu=False)
    return jnp.transpose(out, (0, 3, 1, 2))                    # NHWC -> NCHW


# ----------------------------------------------------------------------------
# Independent reference (lax.conv, NCHW, gather-based general bilinear).
# Operands are bf16-rounded exactly like the kernel path (f32 accumulate).
# ----------------------------------------------------------------------------
def _conv_ref(x, w, scale, bias, stride, pad, relu):
    wf = (w * scale[:, None, None, None]).astype(jnp.bfloat16)
    y = jax.lax.conv_general_dilated(
        x.astype(jnp.bfloat16), wf, (stride, stride), [(pad, pad), (pad, pad)],
        dimension_numbers=("NCHW", "OIHW", "NCHW"),
        preferred_element_type=jnp.float32)
    y = y + bias[None, :, None, None]
    return jnp.maximum(y, 0.0) if relu else y


def _lin_idx_w(out_size, in_size):
    scale = in_size / out_size
    src = (jnp.arange(out_size, dtype=jnp.float32) + 0.5) * scale - 0.5
    src = jnp.clip(src, 0.0, None)
    i0 = jnp.clip(jnp.floor(src).astype(jnp.int32), 0, in_size - 1)
    i1 = jnp.clip(i0 + 1, 0, in_size - 1)
    lam = src - i0.astype(jnp.float32)
    return i0, i1, lam


def bilinear_resize_ref(x, out_h, out_w):
    """General gather-based F.interpolate(mode='bilinear', align_corners=False)."""
    hi0, hi1, hl = _lin_idx_w(out_h, x.shape[2])
    wi0, wi1, wl = _lin_idx_w(out_w, x.shape[3])
    xh = (x[:, :, hi0, :] * (1.0 - hl)[None, None, :, None]
          + x[:, :, hi1, :] * hl[None, None, :, None])
    y = (xh[:, :, :, wi0] * (1.0 - wl)[None, None, None, :]
         + xh[:, :, :, wi1] * wl[None, None, None, :])
    return y


def fcn_forward_ref(params, x, img_size):
    d1 = _conv_ref(x, **params["down1"], stride=2, pad=1, relu=True)
    d2 = _conv_ref(d1, **params["down2"], stride=2, pad=1, relu=True)
    mid = _conv_ref(d2, **params["down3"], stride=2, pad=1, relu=True)
    u1 = _conv_ref(mid, **params["up1"], stride=1, pad=1, relu=True)
    u1 = jnp.concatenate([bilinear_resize_ref(u1, img_size // 4, img_size // 4), d2], 1)
    u2 = _conv_ref(u1, **params["up2"], stride=1, pad=1, relu=True)
    u2 = jnp.concatenate([bilinear_resize_ref(u2, img_size // 2, img_size // 2), d1], 1)
    u3 = _conv_ref(u2, **params["up3"], stride=1, pad=1, relu=True)
    u3 = bilinear_resize_ref(u3, img_size, img_size)
    return _conv_ref(u3, **params["out"], stride=1, pad=0, relu=False)


if __name__ == "__main__":
    batch, in_ch, out_ch, inner, img_size = 2, 1, 1, 32, 32

    key = jax.random.PRNGKey(0)
    pkey, xkey = jax.random.split(key)
    params = init_params(pkey, inner=inner, in_ch=in_ch, out_ch=out_ch)
    kparams = prepare_kernel_params(params)
    x = jax.random.normal(xkey, (batch, in_ch, img_size, img_size), jnp.float32)

    fwd = jax.jit(functools.partial(
        fcn_forward, img_size=img_size, inner=inner, out_ch=out_ch))
    out = jax.block_until_ready(fwd(kparams, x))

    ref = jax.block_until_ready(fcn_forward_ref(params, x, img_size))
    assert out.shape == (batch, out_ch, img_size, img_size), out.shape
    max_err = float(jnp.max(jnp.abs(out - ref)))
    assert jnp.allclose(out, ref, atol=1e-2, rtol=1e-2), max_err

    print("KERNEL_OK")
</pallas_src>

<mosaic_0001>
module attributes {stable_mosaic.version = 11 : i64} {
  func.func @_fused_gemm_kernel(%arg0: i32, %arg1: memref<256x16xbf16, #tpu.memory_space<vmem>>, %arg2: memref<16x128xbf16, #tpu.memory_space<vmem>>, %arg3: memref<1x128xf32, #tpu.memory_space<vmem>>, %arg4: memref<256x128xf32, #tpu.memory_space<vmem>>) attributes {dimension_semantics = [#tpu.dimension_semantics<parallel>], iteration_bounds = array<i64: 2>, scalar_prefetch = 0 : i64, scratch_operands = 0 : i64, tpu.core_type = #tpu.core_type<tc>, window_params = [{transform_indices = @transform_0, window_bounds = array<i64: 256, 16>}, {pipeline_mode = #tpu.pipeline_mode<synchronous>, transform_indices = @transform_1, window_bounds = array<i64: 16, 128>}, {pipeline_mode = #tpu.pipeline_mode<synchronous>, transform_indices = @transform_2, window_bounds = array<i64: 1, 128>}, {transform_indices = @transform_3, window_bounds = array<i64: 256, 128>}]} {
    %c0 = arith.constant 0 : index
    %c0_0 = arith.constant 0 : index
    %0 = vector.load %arg1[%c0, %c0_0] : memref<256x16xbf16, #tpu.memory_space<vmem>>, vector<256x16xbf16>
    %c0_1 = arith.constant 0 : index
    %c0_2 = arith.constant 0 : index
    %1 = vector.load %arg2[%c0_1, %c0_2] : memref<16x128xbf16, #tpu.memory_space<vmem>>, vector<16x128xbf16>
    %cst = arith.constant dense<0.000000e+00> : vector<256x128xf32>
    %2 = tpu.matmul %0, %1, %cst {dimension_numbers = #tpu.dot_dimension_numbers<[1], [0], [0], [1], [0, 0, 1, 1], [], []>} : vector<256x16xbf16>, vector<16x128xbf16>, vector<256x128xf32> -> vector<256x128xf32>
    %c0_3 = arith.constant 0 : index
    %c0_4 = arith.constant 0 : index
    %3 = vector.load %arg3[%c0_3, %c0_4] : memref<1x128xf32, #tpu.memory_space<vmem>>, vector<1x128xf32>
    %4 = vector.broadcast %3 : vector<1x128xf32> to vector<256x128xf32>
    %5 = arith.addf %2, %4 : vector<256x128xf32>
    %cst_5 = arith.constant 0.000000e+00 : f32
    %6 = vector.broadcast %cst_5 : f32 to vector<256x128xf32>
    %7 = arith.maximumf %5, %6 : vector<256x128xf32>
    %c0_6 = arith.constant 0 : index
    %c0_7 = arith.constant 0 : index
    %8 = vector.load %arg4[%c0_6, %c0_7] : memref<256x128xf32, #tpu.memory_space<vmem>>, vector<256x128xf32>
    tpu.vector_store %arg4[%c0_6, %c0_7], %7 {strides = array<i32>} : memref<256x128xf32, #tpu.memory_space<vmem>>, vector<256x128xf32>,
    return
  }
  func.func @transform_0(%arg0: i32) -> (i32, i32) {
    %c0_i32 = arith.constant 0 : i32
    %c0_i32_0 = arith.constant 0 : i32
    return %arg0, %c0_i32 : i32, i32
  }
  func.func @transform_1(%arg0: i32) -> (i32, i32) {
    %c0_i32 = arith.constant 0 : i32
    %c0_i32_0 = arith.constant 0 : i32
    %c0_i32_1 = arith.constant 0 : i32
    return %c0_i32, %c0_i32_0 : i32, i32
  }
  func.func @transform_2(%arg0: i32) -> (i32, i32) {
    %c0_i32 = arith.constant 0 : i32
    %c0_i32_0 = arith.constant 0 : i32
    %c0_i32_1 = arith.constant 0 : i32
    return %c0_i32, %c0_i32_0 : i32, i32
  }
  func.func @transform_3(%arg0: i32) -> (i32, i32) {
    %c0_i32 = arith.constant 0 : i32
    %c0_i32_0 = arith.constant 0 : i32
    return %arg0, %c0_i32 : i32, i32
  }
}

module attributes {stable_mosaic.version = 11 : i64} {
  func.func @_fused_gemm_kernel(%arg0: i32, %arg1: memref<64x128xbf16, #tpu.memory_space<vmem>>, %arg2: memref<128x128xbf16, #tpu.memory_space<vmem>>, %arg3: memref<1x128xf32, #tpu.memory_space<vmem>>, %arg4: memref<64x128xf32, #tpu.memory_space<vmem>>) attributes {dimension_semantics = [#tpu.dimension_semantics<parallel>], iteration_bounds = array<i64: 2>, scalar_prefetch = 0 : i64, scratch_operands = 0 : i64, tpu.core_type = #tpu.core_type<tc>, window_params = [{transform_indices = @transform_0, window_bounds = array<i64: 64, 128>}, {pipeline_mode = #tpu.pipeline_mode<synchronous>, transform_indices = @transform_1, window_bounds = array<i64: 128, 128>}, {pipeline_mode = #tpu.pipeline_mode<synchronous>, transform_indices = @transform_2, window_bounds = array<i64: 1, 128>}, {transform_indices = @transform_3, window_bounds = array<i64: 64, 128>}]} {
    %c0 = arith.constant 0 : index
    %c0_0 = arith.constant 0 : index
    %0 = vector.load %arg1[%c0, %c0_0] : memref<64x128xbf16, #tpu.memory_space<vmem>>, vector<64x128xbf16>
    %c0_1 = arith.constant 0 : index
    %c0_2 = arith.constant 0 : index
    %1 = vector.load %arg2[%c0_1, %c0_2] : memref<128x128xbf16, #tpu.memory_space<vmem>>, vector<128x128xbf16>
    %cst = arith.constant dense<0.000000e+00> : vector<64x128xf32>
    %2 = tpu.matmul %0, %1, %cst {dimension_numbers = #tpu.dot_dimension_numbers<[1], [0], [0], [1], [0, 0, 1, 1], [], []>} : vector<64x128xbf16>, vector<128x128xbf16>, vector<64x128xf32> -> vector<64x128xf32>
    %c0_3 = arith.constant 0 : index
    %c0_4 = arith.constant 0 : index
    %3 = vector.load %arg3[%c0_3, %c0_4] : memref<1x128xf32, #tpu.memory_space<vmem>>, vector<1x128xf32>
    %4 = vector.broadcast %3 : vector<1x128xf32> to vector<64x128xf32>
    %5 = arith.addf %2, %4 : vector<64x128xf32>
    %cst_5 = arith.constant 0.000000e+00 : f32
    %6 = vector.broadcast %cst_5 : f32 to vector<64x128xf32>
    %7 = arith.maximumf %5, %6 : vector<64x128xf32>
    %c0_6 = arith.constant 0 : index
    %c0_7 = arith.constant 0 : index
    %8 = vector.load %arg4[%c0_6, %c0_7] : memref<64x128xf32, #tpu.memory_space<vmem>>, vector<64x128xf32>
    tpu.vector_store %arg4[%c0_6, %c0_7], %7 {strides = array<i32>} : memref<64x128xf32, #tpu.memory_space<vmem>>, vector<64x128xf32>,
    return
  }
  func.func @transform_0(%arg0: i32) -> (i32, i32) {
    %c0_i32 = arith.constant 0 : i32
    %c0_i32_0 = arith.constant 0 : i32
    return %arg0, %c0_i32 : i32, i32
  }
  func.func @transform_1(%arg0: i32) -> (i32, i32) {
    %c0_i32 = arith.constant 0 : i32
    %c0_i32_0 = arith.constant 0 : i32
    %c0_i32_1 = arith.constant 0 : i32
    return %c0_i32, %c0_i32_0 : i32, i32
  }
  func.func @transform_2(%arg0: i32) -> (i32, i32) {
    %c0_i32 = arith.constant 0 : i32
    %c0_i32_0 = arith.constant 0 : i32
    %c0_i32_1 = arith.constant 0 : i32
    return %c0_i32, %c0_i32_0 : i32, i32
  }
  func.func @transform_3(%arg0: i32) -> (i32, i32) {
    %c0_i32 = arith.constant 0 : i32
    %c0_i32_0 = arith.constant 0 : i32
    return %arg0, %c0_i32 : i32, i32
  }
}

module attributes {stable_mosaic.version = 11 : i64} {
  func.func @_fused_gemm_kernel(%arg0: i32, %arg1: memref<16x256xbf16, #tpu.memory_space<vmem>>, %arg2: memref<256x128xbf16, #tpu.memory_space<vmem>>, %arg3: memref<1x128xf32, #tpu.memory_space<vmem>>, %arg4: memref<16x128xf32, #tpu.memory_space<vmem>>) attributes {dimension_semantics = [#tpu.dimension_semantics<parallel>], iteration_bounds = array<i64: 2>, scalar_prefetch = 0 : i64, scratch_operands = 0 : i64, tpu.core_type = #tpu.core_type<tc>, window_params = [{transform_indices = @transform_0, window_bounds = array<i64: 16, 256>}, {pipeline_mode = #tpu.pipeline_mode<synchronous>, transform_indices = @transform_1, window_bounds = array<i64: 256, 128>}, {pipeline_mode = #tpu.pipeline_mode<synchronous>, transform_indices = @transform_2, window_bounds = array<i64: 1, 128>}, {transform_indices = @transform_3, window_bounds = array<i64: 16, 128>}]} {
    %c0 = arith.constant 0 : index
    %c0_0 = arith.constant 0 : index
    %0 = vector.load %arg1[%c0, %c0_0] : memref<16x256xbf16, #tpu.memory_space<vmem>>, vector<16x256xbf16>
    %c0_1 = arith.constant 0 : index
    %c0_2 = arith.constant 0 : index
    %1 = vector.load %arg2[%c0_1, %c0_2] : memref<256x128xbf16, #tpu.memory_space<vmem>>, vector<256x128xbf16>
    %cst = arith.constant dense<0.000000e+00> : vector<16x128xf32>
    %2 = tpu.matmul %0, %1, %cst {dimension_numbers = #tpu.dot_dimension_numbers<[1], [0], [0], [1], [0, 0, 1, 1], [], []>} : vector<16x256xbf16>, vector<256x128xbf16>, vector<16x128xf32> -> vector<16x128xf32>
    %c0_3 = arith.constant 0 : index
    %c0_4 = arith.constant 0 : index
    %3 = vector.load %arg3[%c0_3, %c0_4] : memref<1x128xf32, #tpu.memory_space<vmem>>, vector<1x128xf32>
    %4 = vector.broadcast %3 : vector<1x128xf32> to vector<16x128xf32>
    %5 = arith.addf %2, %4 : vector<16x128xf32>
    %cst_5 = arith.constant 0.000000e+00 : f32
    %6 = vector.broadcast %cst_5 : f32 to vector<16x128xf32>
    %7 = arith.maximumf %5, %6 : vector<16x128xf32>
    %c0_6 = arith.constant 0 : index
    %c0_7 = arith.constant 0 : index
    %8 = vector.load %arg4[%c0_6, %c0_7] : memref<16x128xf32, #tpu.memory_space<vmem>>, vector<16x128xf32>
    tpu.vector_store %arg4[%c0_6, %c0_7], %7 {strides = array<i32>} : memref<16x128xf32, #tpu.memory_space<vmem>>, vector<16x128xf32>,
    return
  }
  func.func @transform_0(%arg0: i32) -> (i32, i32) {
    %c0_i32 = arith.constant 0 : i32
    %c0_i32_0 = arith.constant 0 : i32
    return %arg0, %c0_i32 : i32, i32
  }
  func.func @transform_1(%arg0: i32) -> (i32, i32) {
    %c0_i32 = arith.constant 0 : i32
    %c0_i32_0 = arith.constant 0 : i32
    %c0_i32_1 = arith.constant 0 : i32
    return %c0_i32, %c0_i32_0 : i32, i32
  }
  func.func @transform_2(%arg0: i32) -> (i32, i32) {
    %c0_i32 = arith.constant 0 : i32
    %c0_i32_0 = arith.constant 0 : i32
    %c0_i32_1 = arith.constant 0 : i32
    return %c0_i32, %c0_i32_0 : i32, i32
  }
  func.func @transform_3(%arg0: i32) -> (i32, i32) {
    %c0_i32 = arith.constant 0 : i32
    %c0_i32_0 = arith.constant 0 : i32
    return %arg0, %c0_i32 : i32, i32
  }
}

module attributes {stable_mosaic.version = 11 : i64} {
  func.func @_fused_gemm_kernel(%arg0: i32, %arg1: memref<16x288xbf16, #tpu.memory_space<vmem>>, %arg2: memref<288x128xbf16, #tpu.memory_space<vmem>>, %arg3: memref<1x128xf32, #tpu.memory_space<vmem>>, %arg4: memref<16x128xf32, #tpu.memory_space<vmem>>) attributes {dimension_semantics = [#tpu.dimension_semantics<parallel>], iteration_bounds = array<i64: 2>, scalar_prefetch = 0 : i64, scratch_operands = 0 : i64, tpu.core_type = #tpu.core_type<tc>, window_params = [{transform_indices = @transform_0, window_bounds = array<i64: 16, 288>}, {pipeline_mode = #tpu.pipeline_mode<synchronous>, transform_indices = @transform_1, window_bounds = array<i64: 288, 128>}, {pipeline_mode = #tpu.pipeline_mode<synchronous>, transform_indices = @transform_2, window_bounds = array<i64: 1, 128>}, {transform_indices = @transform_3, window_bounds = array<i64: 16, 128>}]} {
    %c0 = arith.constant 0 : index
    %c0_0 = arith.constant 0 : index
    %0 = vector.load %arg1[%c0, %c0_0] : memref<16x288xbf16, #tpu.memory_space<vmem>>, vector<16x288xbf16>
    %c0_1 = arith.constant 0 : index
    %c0_2 = arith.constant 0 : index
    %1 = vector.load %arg2[%c0_1, %c0_2] : memref<288x128xbf16, #tpu.memory_space<vmem>>, vector<288x128xbf16>
    %cst = arith.constant dense<0.000000e+00> : vector<16x128xf32>
    %2 = tpu.matmul %0, %1, %cst {dimension_numbers = #tpu.dot_dimension_numbers<[1], [0], [0], [1], [0, 0, 1, 1], [], []>} : vector<16x288xbf16>, vector<288x128xbf16>, vector<16x128xf32> -> vector<16x128xf32>
    %c0_3 = arith.constant 0 : index
    %c0_4 = arith.constant 0 : index
    %3 = vector.load %arg3[%c0_3, %c0_4] : memref<1x128xf32, #tpu.memory_space<vmem>>, vector<1x128xf32>
    %4 = vector.broadcast %3 : vector<1x128xf32> to vector<16x128xf32>
    %5 = arith.addf %2, %4 : vector<16x128xf32>
    %cst_5 = arith.constant 0.000000e+00 : f32
    %6 = vector.broadcast %cst_5 : f32 to vector<16x128xf32>
    %7 = arith.maximumf %5, %6 : vector<16x128xf32>
    %c0_6 = arith.constant 0 : index
    %c0_7 = arith.constant 0 : index
    %8 = vector.load %arg4[%c0_6, %c0_7] : memref<16x128xf32, #tpu.memory_space<vmem>>, vector<16x128xf32>
    tpu.vector_store %arg4[%c0_6, %c0_7], %7 {strides = array<i32>} : memref<16x128xf32, #tpu.memory_space<vmem>>, vector<16x128xf32>,
    return
  }
  func.func @transform_0(%arg0: i32) -> (i32, i32) {
    %c0_i32 = arith.constant 0 : i32
    %c0_i32_0 = arith.constant 0 : i32
    return %arg0, %c0_i32 : i32, i32
  }
  func.func @transform_1(%arg0: i32) -> (i32, i32) {
    %c0_i32 = arith.constant 0 : i32
    %c0_i32_0 = arith.constant 0 : i32
    %c0_i32_1 = arith.constant 0 : i32
    return %c0_i32, %c0_i32_0 : i32, i32
  }
  func.func @transform_2(%arg0: i32) -> (i32, i32) {
    %c0_i32 = arith.constant 0 : i32
    %c0_i32_0 = arith.constant 0 : i32
    %c0_i32_1 = arith.constant 0 : i32
    return %c0_i32, %c0_i32_0 : i32, i32
  }
  func.func @transform_3(%arg0: i32) -> (i32, i32) {
    %c0_i32 = arith.constant 0 : i32
    %c0_i32_0 = arith.constant 0 : i32
    return %arg0, %c0_i32 : i32, i32
  }
}

module attributes {stable_mosaic.version = 11 : i64} {
  func.func @_fused_gemm_kernel(%arg0: i32, %arg1: memref<64x288xbf16, #tpu.memory_space<vmem>>, %arg2: memref<288x128xbf16, #tpu.memory_space<vmem>>, %arg3: memref<1x128xf32, #tpu.memory_space<vmem>>, %arg4: memref<64x128xf32, #tpu.memory_space<vmem>>) attributes {dimension_semantics = [#tpu.dimension_semantics<parallel>], iteration_bounds = array<i64: 2>, scalar_prefetch = 0 : i64, scratch_operands = 0 : i64, tpu.core_type = #tpu.core_type<tc>, window_params = [{transform_indices = @transform_0, window_bounds = array<i64: 64, 288>}, {pipeline_mode = #tpu.pipeline_mode<synchronous>, transform_indices = @transform_1, window_bounds = array<i64: 288, 128>}, {pipeline_mode = #tpu.pipeline_mode<synchronous>, transform_indices = @transform_2, window_bounds = array<i64: 1, 128>}, {transform_indices = @transform_3, window_bounds = array<i64: 64, 128>}]} {
    %c0 = arith.constant 0 : index
    %c0_0 = arith.constant 0 : index
    %0 = vector.load %arg1[%c0, %c0_0] : memref<64x288xbf16, #tpu.memory_space<vmem>>, vector<64x288xbf16>
    %c0_1 = arith.constant 0 : index
    %c0_2 = arith.constant 0 : index
    %1 = vector.load %arg2[%c0_1, %c0_2] : memref<288x128xbf16, #tpu.memory_space<vmem>>, vector<288x128xbf16>
    %cst = arith.constant dense<0.000000e+00> : vector<64x128xf32>
    %2 = tpu.matmul %0, %1, %cst {dimension_numbers = #tpu.dot_dimension_numbers<[1], [0], [0], [1], [0, 0, 1, 1], [], []>} : vector<64x288xbf16>, vector<288x128xbf16>, vector<64x128xf32> -> vector<64x128xf32>
    %c0_3 = arith.constant 0 : index
    %c0_4 = arith.constant 0 : index
    %3 = vector.load %arg3[%c0_3, %c0_4] : memref<1x128xf32, #tpu.memory_space<vmem>>, vector<1x128xf32>
    %4 = vector.broadcast %3 : vector<1x128xf32> to vector<64x128xf32>
    %5 = arith.addf %2, %4 : vector<64x128xf32>
    %cst_5 = arith.constant 0.000000e+00 : f32
    %6 = vector.broadcast %cst_5 : f32 to vector<64x128xf32>
    %7 = arith.maximumf %5, %6 : vector<64x128xf32>
    %c0_6 = arith.constant 0 : index
    %c0_7 = arith.constant 0 : index
    %8 = vector.load %arg4[%c0_6, %c0_7] : memref<64x128xf32, #tpu.memory_space<vmem>>, vector<64x128xf32>
    tpu.vector_store %arg4[%c0_6, %c0_7], %7 {strides = array<i32>} : memref<64x128xf32, #tpu.memory_space<vmem>>, vector<64x128xf32>,
    return
  }
  func.func @transform_0(%arg0: i32) -> (i32, i32) {
    %c0_i32 = arith.constant 0 : i32
    %c0_i32_0 = arith.constant 0 : i32
    return %arg0, %c0_i32 : i32, i32
  }
  func.func @transform_1(%arg0: i32) -> (i32, i32) {
    %c0_i32 = arith.constant 0 : i32
    %c0_i32_0 = arith.constant 0 : i32
    %c0_i32_1 = arith.constant 0 : i32
    return %c0_i32, %c0_i32_0 : i32, i32
  }
  func.func @transform_2(%arg0: i32) -> (i32, i32) {
    %c0_i32 = arith.constant 0 : i32
    %c0_i32_0 = arith.constant 0 : i32
    %c0_i32_1 = arith.constant 0 : i32
    return %c0_i32, %c0_i32_0 : i32, i32
  }
  func.func @transform_3(%arg0: i32) -> (i32, i32) {
    %c0_i32 = arith.constant 0 : i32
    %c0_i32_0 = arith.constant 0 : i32
    return %arg0, %c0_i32 : i32, i32
  }
}

module attributes {stable_mosaic.version = 11 : i64} {
  func.func @_fused_gemm_kernel(%arg0: i32, %arg1: memref<256x144xbf16, #tpu.memory_space<vmem>>, %arg2: memref<144x128xbf16, #tpu.memory_space<vmem>>, %arg3: memref<1x128xf32, #tpu.memory_space<vmem>>, %arg4: memref<256x128xf32, #tpu.memory_space<vmem>>) attributes {dimension_semantics = [#tpu.dimension_semantics<parallel>], iteration_bounds = array<i64: 2>, scalar_prefetch = 0 : i64, scratch_operands = 0 : i64, tpu.core_type = #tpu.core_type<tc>, window_params = [{transform_indices = @transform_0, window_bounds = array<i64: 256, 144>}, {pipeline_mode = #tpu.pipeline_mode<synchronous>, transform_indices = @transform_1, window_bounds = array<i64: 144, 128>}, {pipeline_mode = #tpu.pipeline_mode<synchronous>, transform_indices = @transform_2, window_bounds = array<i64: 1, 128>}, {transform_indices = @transform_3, window_bounds = array<i64: 256, 128>}]} {
    %c0 = arith.constant 0 : index
    %c0_0 = arith.constant 0 : index
    %0 = vector.load %arg1[%c0, %c0_0] : memref<256x144xbf16, #tpu.memory_space<vmem>>, vector<256x144xbf16>
    %c0_1 = arith.constant 0 : index
    %c0_2 = arith.constant 0 : index
    %1 = vector.load %arg2[%c0_1, %c0_2] : memref<144x128xbf16, #tpu.memory_space<vmem>>, vector<144x128xbf16>
    %cst = arith.constant dense<0.000000e+00> : vector<256x128xf32>
    %2 = tpu.matmul %0, %1, %cst {dimension_numbers = #tpu.dot_dimension_numbers<[1], [0], [0], [1], [0, 0, 1, 1], [], []>} : vector<256x144xbf16>, vector<144x128xbf16>, vector<256x128xf32> -> vector<256x128xf32>
    %c0_3 = arith.constant 0 : index
    %c0_4 = arith.constant 0 : index
    %3 = vector.load %arg3[%c0_3, %c0_4] : memref<1x128xf32, #tpu.memory_space<vmem>>, vector<1x128xf32>
    %4 = vector.broadcast %3 : vector<1x128xf32> to vector<256x128xf32>
    %5 = arith.addf %2, %4 : vector<256x128xf32>
    %cst_5 = arith.constant 0.000000e+00 : f32
    %6 = vector.broadcast %cst_5 : f32 to vector<256x128xf32>
    %7 = arith.maximumf %5, %6 : vector<256x128xf32>
    %c0_6 = arith.constant 0 : index
    %c0_7 = arith.constant 0 : index
    %8 = vector.load %arg4[%c0_6, %c0_7] : memref<256x128xf32, #tpu.memory_space<vmem>>, vector<256x128xf32>
    tpu.vector_store %arg4[%c0_6, %c0_7], %7 {strides = array<i32>} : memref<256x128xf32, #tpu.memory_space<vmem>>, vector<256x128xf32>,
    return
  }
  func.func @transform_0(%arg0: i32) -> (i32, i32) {
    %c0_i32 = arith.constant 0 : i32
    %c0_i32_0 = arith.constant 0 : i32
    return %arg0, %c0_i32 : i32, i32
  }
  func.func @transform_1(%arg0: i32) -> (i32, i32) {
    %c0_i32 = arith.constant 0 : i32
    %c0_i32_0 = arith.constant 0 : i32
    %c0_i32_1 = arith.constant 0 : i32
    return %c0_i32, %c0_i32_0 : i32, i32
  }
  func.func @transform_2(%arg0: i32) -> (i32, i32) {
    %c0_i32 = arith.constant 0 : i32
    %c0_i32_0 = arith.constant 0 : i32
    %c0_i32_1 = arith.constant 0 : i32
    return %c0_i32, %c0_i32_0 : i32, i32
  }
  func.func @transform_3(%arg0: i32) -> (i32, i32) {
    %c0_i32 = arith.constant 0 : i32
    %c0_i32_0 = arith.constant 0 : i32
    return %arg0, %c0_i32 : i32, i32
  }
}

module attributes {stable_mosaic.version = 11 : i64} {
  func.func @_fused_gemm_kernel(%arg0: i32, %arg1: memref<1024x4xbf16, #tpu.memory_space<vmem>>, %arg2: memref<4x128xbf16, #tpu.memory_space<vmem>>, %arg3: memref<1x128xf32, #tpu.memory_space<vmem>>, %arg4: memref<1024x128xf32, #tpu.memory_space<vmem>>) attributes {dimension_semantics = [#tpu.dimension_semantics<parallel>], iteration_bounds = array<i64: 2>, scalar_prefetch = 0 : i64, scratch_operands = 0 : i64, tpu.core_type = #tpu.core_type<tc>, window_params = [{transform_indices = @transform_0, window_bounds = array<i64: 1024, 4>}, {pipeline_mode = #tpu.pipeline_mode<synchronous>, transform_indices = @transform_1, window_bounds = array<i64: 4, 128>}, {pipeline_mode = #tpu.pipeline_mode<synchronous>, transform_indices = @transform_2, window_bounds = array<i64: 1, 128>}, {transform_indices = @transform_3, window_bounds = array<i64: 1024, 128>}]} {
    %c0 = arith.constant 0 : index
    %c0_0 = arith.constant 0 : index
    %0 = vector.load %arg1[%c0, %c0_0] : memref<1024x4xbf16, #tpu.memory_space<vmem>>, vector<1024x4xbf16>
    %c0_1 = arith.constant 0 : index
    %c0_2 = arith.constant 0 : index
    %1 = vector.load %arg2[%c0_1, %c0_2] : memref<4x128xbf16, #tpu.memory_space<vmem>>, vector<4x128xbf16>
    %cst = arith.constant dense<0.000000e+00> : vector<1024x128xf32>
    %2 = tpu.matmul %0, %1, %cst {dimension_numbers = #tpu.dot_dimension_numbers<[1], [0], [0], [1], [0, 0, 1, 1], [], []>} : vector<1024x4xbf16>, vector<4x128xbf16>, vector<1024x128xf32> -> vector<1024x128xf32>
    %c0_3 = arith.constant 0 : index
    %c0_4 = arith.constant 0 : index
    %3 = vector.load %arg3[%c0_3, %c0_4] : memref<1x128xf32, #tpu.memory_space<vmem>>, vector<1x128xf32>
    %4 = vector.broadcast %3 : vector<1x128xf32> to vector<1024x128xf32>
    %5 = arith.addf %2, %4 : vector<1024x128xf32>
    %c0_5 = arith.constant 0 : index
    %c0_6 = arith.constant 0 : index
    %6 = vector.load %arg4[%c0_5, %c0_6] : memref<1024x128xf32, #tpu.memory_space<vmem>>, vector<1024x128xf32>
    tpu.vector_store %arg4[%c0_5, %c0_6], %5 {strides = array<i32>} : memref<1024x128xf32, #tpu.memory_space<vmem>>, vector<1024x128xf32>,
    return
  }
  func.func @transform_0(%arg0: i32) -> (i32, i32) {
    %c0_i32 = arith.constant 0 : i32
    %c0_i32_0 = arith.constant 0 : i32
    return %arg0, %c0_i32 : i32, i32
  }
  func.func @transform_1(%arg0: i32) -> (i32, i32) {
    %c0_i32 = arith.constant 0 : i32
    %c0_i32_0 = arith.constant 0 : i32
    %c0_i32_1 = arith.constant 0 : i32
    return %c0_i32, %c0_i32_0 : i32, i32
  }
  func.func @transform_2(%arg0: i32) -> (i32, i32) {
    %c0_i32 = arith.constant 0 : i32
    %c0_i32_0 = arith.constant 0 : i32
    %c0_i32_1 = arith.constant 0 : i32
    return %c0_i32, %c0_i32_0 : i32, i32
  }
  func.func @transform_3(%arg0: i32) -> (i32, i32) {
    %c0_i32 = arith.constant 0 : i32
    %c0_i32_0 = arith.constant 0 : i32
    return %arg0, %c0_i32 : i32, i32
  }
}

</mosaic_0001>

<llo_original>
// kernel: fcn_forward.7
$region0: #{fcn_forward.7}
  #allocation0 [shape = 'u32[]', space=smem, size = 0x4, offset = 0x4, fixed_abs, tag = 'smem constant byte address 0x4 - core index']
  #allocation1 [shape = 'u32[144,128]{1,0:T(1,128)}', space=vmem, size = 0x12000, scoped, tag = 'internal scratch']
  %s0 = inlined_call_operand.vmem [shape: bf16[512,16], index: 0, kind: input, shape index: {}]
  %s1 = inlined_call_operand.hbm [shape: bf16[16,128], index: 1, kind: input, shape index: {}]
  %s2 = inlined_call_operand.hbm [shape: f32[1,128], index: 2, kind: input, shape index: {}]
  %s3 = inlined_call_operand.vmem [shape: f32[512,128], index: 3, kind: output, shape index: {}]
  %s4 = sld [smem:[#allocation0]]
  $region53: #{fcn_forward.7} parent=0
    _
  %s6 = ssub.s32 1, %s4
  %s7 = scalar_select 0, %s6, %s4
  $region1: #{fcn_forward.7} parent=0
    #allocation2 [shape = 'u8[4096]{0}', space=vmem, size = 0x1000, scoped, tag = 'input window, operand 1, single buffered']
    #allocation3 [shape = 's32[2]{0}', space=sflag, size = 0x8, scoped, tag = 'scoped memory for fcn_forward.7']
    #allocation4 [shape = 'u8[512]{0}', space=vmem, size = 0x400, scoped, tag = 'input window, operand 2, single buffered']
    #allocation5 [shape = 's32[1]{0}', space=sflag, size = 0x4, scoped, tag = 'scoped memory for fcn_forward.7']
    %8 = vsyncpa [#allocation3], 0
    %9 = vsyncpa [#allocation5], 0
    loop: start=0, step=1, limit=4
    $region2: #{fcn_forward.7} parent=1 // loop_pre_header
      _
    $region3: #{fcn_forward.7} parent=1 // loop_header
      %s11 = sphi 0, %s15
      %p12 = scmp.ge.s32.totalorder %s11, 4
      %s21 = sphi 0, %s23
      %s24 = sphi 0, %s21
      %s25 = sphi 0, %s24
      %s41 = sphi 0, %s25
      %s45 = sphi 0, %s45
      %s47 = sphi 0, %s45
      %s48 = sphi 0, %s47
      %s62 = sphi 0, %s48
      %s66 = sphi 0, %s66
      %s68 = sphi 0, %s66
      %s69 = sphi 0, %s68
      %s83 = sphi 0, %s69
      %s89 = sphi 0, %s91
      %s92 = sphi 0, %s89
      %s93 = sphi 0, %s92
      %s109 = sphi 0, %s93
    $region4: #{fcn_forward.7} parent=1 // loop_header_branch
      %14 = sbr.rel (%p12) target = $region8
    $region5: #{fcn_forward.7} parent=1 // loop_body
      %s16 = ssub.s32 %s11, 1
      %s17 = ssub.s32 %s11, 2
      %s18 = sadd.s32 %s11, 1
      %s19 = ssub.s32 %s11, %s18
      %p20 = scmp.eq.s32.totalorder %s19, 0
      %s22 = sadd.s32 %s21, 1
      %s23 = scalar_select %p20, %s21, %s22
      %p26 = pneg %p20
      %p27 = scmp.eq.s32.totalorder %s11, 1
      %p28 = por %p26, %p27
      %p29 = scmp.ne.s32.totalorder %s21, %s24
      %p30 = scmp.eq.s32.totalorder %s11, 0
      %p31 = por %p29, %p30
      %p32 = scmp.ne.s32.totalorder %s21, %s24
      %p33 = scmp.eq.s32.totalorder %s16, 1
      %p34 = por %p32, %p33
      %p35 = scmp.ne.s32.totalorder %s24, %s25
      %p36 = scmp.eq.s32.totalorder %s16, 0
      %p37 = por %p35, %p36
      %p38 = scmp.ne.s32.totalorder %s24, %s25
      %p39 = scmp.eq.s32.totalorder %s17, 1
      %p40 = por %p38, %p39
      %p42 = scmp.ne.s32.totalorder %s25, %s41
      %p43 = scmp.eq.s32.totalorder %s17, 0
      %p44 = por %p42, %p43
      %s46 = sadd.s32 %s45, 1
      %p49 = scmp.eq.s32.totalorder %s11, 1
      %p50 = scmp.ne.s32.totalorder %s45, %s47
      %p51 = scmp.eq.s32.totalorder %s11, 0
      %p52 = por %p50, %p51
      %p53 = scmp.ne.s32.totalorder %s45, %s47
      %p54 = scmp.eq.s32.totalorder %s16, 1
      %p55 = por %p53, %p54
      %p56 = scmp.ne.s32.totalorder %s47, %s48
      %p57 = scmp.eq.s32.totalorder %s16, 0
      %p58 = por %p56, %p57
      %p59 = scmp.ne.s32.totalorder %s47, %s48
      %p60 = scmp.eq.s32.totalorder %s17, 1
      %p61 = por %p59, %p60
      %p63 = scmp.ne.s32.totalorder %s48, %s62
      %p64 = scmp.eq.s32.totalorder %s17, 0
      %p65 = por %p63, %p64
      %s67 = sadd.s32 %s66, 1
      %p70 = scmp.eq.s32.totalorder %s11, 1
      %p71 = scmp.ne.s32.totalorder %s66, %s68
      %p72 = scmp.eq.s32.totalorder %s11, 0
      %p73 = por %p71, %p72
      %p74 = scmp.ne.s32.totalorder %s66, %s68
      %p75 = scmp.eq.s32.totalorder %s16, 1
      %p76 = por %p74, %p75
      %p77 = scmp.ne.s32.totalorder %s68, %s69
      %p78 = scmp.eq.s32.totalorder %s16, 0
      %p79 = por %p77, %p78
      %p80 = scmp.ne.s32.totalorder %s68, %s69
      %p81 = scmp.eq.s32.totalorder %s17, 1
      %p82 = por %p80, %p81
      %p84 = scmp.ne.s32.totalorder %s69, %s83
      %p85 = scmp.eq.s32.totalorder %s17, 0
      %p86 = por %p84, %p85
      %s87 = ssub.s32 %s11, %s18
      %p88 = scmp.eq.s32.totalorder %s87, 0
      %s90 = sadd.s32 %s89, 1
      %s91 = scalar_select %p88, %s89, %s90
      %p94 = pneg %p88
      %p95 = scmp.eq.s32.totalorder %s11, 1
      %p96 = por %p94, %p95
      %p97 = scmp.ne.s32.totalorder %s89, %s92
      %p98 = scmp.eq.s32.totalorder %s11, 0
      %p99 = por %p97, %p98
      %p100 = scmp.ne.s32.totalorder %s89, %s92
      %p101 = scmp.eq.s32.totalorder %s16, 1
      %p102 = por %p100, %p101
      %p103 = scmp.ne.s32.totalorder %s92, %s93
      %p104 = scmp.eq.s32.totalorder %s16, 0
      %p105 = por %p103, %p104
      %p106 = scmp.ne.s32.totalorder %s92, %s93
      %p107 = scmp.eq.s32.totalorder %s17, 1
      %p108 = por %p106, %p107
      %p110 = scmp.ne.s32.totalorder %s93, %s109
      %p111 = scmp.eq.s32.totalorder %s17, 0
      %p112 = por %p110, %p111
      %p113 = scmp.le.s32.totalorder 1, %s11
      %p114 = scmp.lt.s32.totalorder %s11, 3
      %p115 = pnand %p113, %p114
      %p116 = pneg %p115
      // Predicated region
      $region9: #{fcn_forward.7} parent=5 // pred_check
        _
      $region10: #{fcn_forward.7} parent=5 // pred_check_branch
        %118 = sbr.rel (%p115) target = $region12
      $region11: #{fcn_forward.7} parent=5 // pred_region
        %s119 = ssub.s32 %s11, 1
        // Predicated region
        $region13: #{fcn_forward.7} parent=11 // pred_check
          %p120 = pneg %p58
        $region14: #{fcn_forward.7} parent=11 // pred_check_branch
          %122 = sbr.rel (%p120) target = $region16
        $region15: #{fcn_forward.7} parent=11 // pred_region
          %s124 = ssub.s32 128, 128
          %125 = vsyncadd [#allocation3], %s124
          %s126 = sshll.u32 [#allocation2], 4
          %s127 = int_to_ptr.vmem [resolvable:$true] %s126
          %132 = dma.hbm_to_vmem [thread:$0]  %s1, 128, %s127, [#allocation3], 64, 64, 4
        $region16: #{fcn_forward.7} parent=11 // pred_fallthru
          _
        // Predicated region
        $region17: #{fcn_forward.7} parent=11 // pred_check
          %p133 = pneg %p79
        $region18: #{fcn_forward.7} parent=11 // pred_check_branch
          %135 = sbr.rel (%p133) target = $region20
        $region19: #{fcn_forward.7} parent=11 // pred_region
          %s137 = ssub.s32 16, 16
          %138 = vsyncadd [#allocation5], %s137
          %s140 = sshll.u32 [#allocation4], 4
          %s141 = int_to_ptr.vmem [resolvable:$true] %s140
          %143 = dma.hbm_to_vmem [thread:$0]  %s2, 16, %s141, [#allocation5]
        $region20: #{fcn_forward.7} parent=11 // pred_fallthru
          _
      $region12: #{fcn_forward.7} parent=5 // pred_fallthru
        _
      %p144 = scmp.lt.s32.totalorder %s11, 2
      // Predicated region
      $region21: #{fcn_forward.7} parent=5 // pred_check
        %p145 = pneg %p144
      $region22: #{fcn_forward.7} parent=5 // pred_check_branch
        %147 = sbr.rel (%p145) target = $region24
      $region23: #{fcn_forward.7} parent=5 // pred_region
        // Predicated region
        $region25: #{fcn_forward.7} parent=23 // pred_check
          %p148 = pneg %p31
        $region26: #{fcn_forward.7} parent=23 // pred_check_branch
          %150 = sbr.rel (%p148) target = $region28
        $region27: #{fcn_forward.7} parent=23 // pred_region
          %s151 = smul.u32 32, %s11
          %p152 = scmp.lt.s32.totalorder %s151, 63
          %s153 = scalar_select %p152, %s151, 63
          %s154 = smul.addr %s153, 4
          %s155 = scalar_lea.vmem %s0, %s154
          %s156 = smul.u32 32, %s11
        $region28: #{fcn_forward.7} parent=23 // pred_fallthru
          _
      $region24: #{fcn_forward.7} parent=5 // pred_fallthru
        _
      %p157 = scmp.le.s32.totalorder 1, %s11
      %p158 = scmp.lt.s32.totalorder %s11, 3
      %p159 = pnand %p157, %p158
      %p160 = pneg %p159
      // Predicated region
      $region29: #{fcn_forward.7} parent=5 // pred_check
        _
      $region30: #{fcn_forward.7} parent=5 // pred_check_branch
        %162 = sbr.rel (%p159) target = $region32
      $region31: #{fcn_forward.7} parent=5 // pred_region
        %s163 = ssub.s32 %s11, 1
        // Predicated region
        $region33: #{fcn_forward.7} parent=31 // pred_check
          %p164 = pneg %p58
        $region34: #{fcn_forward.7} parent=31 // pred_check_branch
          %166 = sbr.rel (%p164) target = $region36
        $region35: #{fcn_forward.7} parent=31 // pred_region
          %167 = dma.done [#allocation3], 128
        $region36: #{fcn_forward.7} parent=31 // pred_fallthru
          _
        // Predicated region
        $region37: #{fcn_forward.7} parent=31 // pred_check
          %p168 = pneg %p79
        $region38: #{fcn_forward.7} parent=31 // pred_check_branch
          %170 = sbr.rel (%p168) target = $region40
        $region39: #{fcn_forward.7} parent=31 // pred_region
          %171 = dma.done [#allocation5], 16
        $region40: #{fcn_forward.7} parent=31 // pred_fallthru
          _
        %s172 = smul.u32 32, %s16
        %p173 = scmp.lt.s32.totalorder %s172, 63
        %s174 = scalar_select %p173, %s172, 63
        %s175 = smul.addr %s174, 4
        %s176 = scalar_lea.vmem %s0, %s175
        %p177 = pneg %p37
        %p178 = pneg %p34
        %p179 = pneg %p58
        %p180 = pneg %p55
        %p181 = pneg %p79
        %p182 = pneg %p76
        %p183 = pneg %p105
        %p184 = pneg %p102
        %s185 = smul.u32 32, %s16
        %p186 = scmp.lt.s32.totalorder %s185, 63
        %s187 = scalar_select %p186, %s185, 63
        %s188 = smul.addr %s187, 8
        %s189 = scalar_lea.vmem %s3, %s188
        %s190 = smul.u32 32, %s16
        %p191 = scmp.lt.s32.totalorder %s190, 63
        %s192 = scalar_select %p191, %s190, 63
        %s193 = smul.addr %s192, 4
        %s194 = scalar_lea.vmem %s0, %s193
        %s195 = smul.u32 32, %s16
        %s196 = smul.u32 32, %s16
        %p197 = scmp.lt.s32.totalorder %s196, 63
        %s198 = scalar_select %p197, %s196, 63
        %s199 = smul.addr %s198, 8
        %s200 = scalar_lea.vmem %s3, %s199
        %s201 = smul.u32 32, %s16
        %v203 = vld [vmem:[%s194] sm:$0xf]
        %v204 = vld [vmem:[%s194 + $0x4] sm:$0xf]
        %v205 = vld [vmem:[%s194 + $0x8] sm:$0xf]
        %v206 = vld [vmem:[%s194 + $0xc] sm:$0xf]
        %v207 = vld [vmem:[%s194 + $0x10] sm:$0xf]
        %v208 = vld [vmem:[%s194 + $0x14] sm:$0xf]
        %v209 = vld [vmem:[%s194 + $0x18] sm:$0xf]
        %v210 = vld [vmem:[%s194 + $0x1c] sm:$0xf]
        %v211 = vld [vmem:[%s194 + $0x20] sm:$0xf]
        %v212 = vld [vmem:[%s194 + $0x24] sm:$0xf]
        %v213 = vld [vmem:[%s194 + $0x28] sm:$0xf]
        %v214 = vld [vmem:[%s194 + $0x2c] sm:$0xf]
        %v215 = vld [vmem:[%s194 + $0x30] sm:$0xf]
        %v216 = vld [vmem:[%s194 + $0x34] sm:$0xf]
        %v217 = vld [vmem:[%s194 + $0x38] sm:$0xf]
        %v218 = vld [vmem:[%s194 + $0x3c] sm:$0xf]
        %v219 = vld [vmem:[%s194 + $0x40] sm:$0xf]
        %v220 = vld [vmem:[%s194 + $0x44] sm:$0xf]
        %v221 = vld [vmem:[%s194 + $0x48] sm:$0xf]
        %v222 = vld [vmem:[%s194 + $0x4c] sm:$0xf]
        %v223 = vld [vmem:[%s194 + $0x50] sm:$0xf]
        %v224 = vld [vmem:[%s194 + $0x54] sm:$0xf]
        %v225 = vld [vmem:[%s194 + $0x58] sm:$0xf]
        %v226 = vld [vmem:[%s194 + $0x5c] sm:$0xf]
        %v227 = vld [vmem:[%s194 + $0x60] sm:$0xf]
        %v228 = vld [vmem:[%s194 + $0x64] sm:$0xf]
        %v229 = vld [vmem:[%s194 + $0x68] sm:$0xf]
        %v230 = vld [vmem:[%s194 + $0x6c] sm:$0xf]
        %v231 = vld [vmem:[%s194 + $0x70] sm:$0xf]
        %v232 = vld [vmem:[%s194 + $0x74] sm:$0xf]
        %v233 = vld [vmem:[%s194 + $0x78] sm:$0xf]
        %v234 = vld [vmem:[%s194 + $0x7c] sm:$0xf]
        %v235 = vld [vmem:[#allocation2] sm:$0xf]
        %v236 = vld [vmem:[#allocation2 + $0x4] sm:$0xf]
        %v237 = vld [vmem:[#allocation4] sm:$0x1]
        %v239 = vlaneseq
        %v240 = vshrl.u32 %v239, 7
        %v241 = vsub.s32 0, %v240
        %v242 = vrot.slane %v237, %v241
        %v276 = vunpack.c.l.b16 %v203
        %v277 = vunpack.c.l.b16 %v204
        %v278 = vunpack.c.l.b16 %v205
        %v279 = vunpack.c.l.b16 %v206
        %v280 = vunpack.c.l.b16 %v207
        %v281 = vunpack.c.l.b16 %v208
        %v282 = vunpack.c.l.b16 %v209
        %v283 = vunpack.c.l.b16 %v210
        %v284 = vunpack.c.l.b16 %v211
        %v285 = vunpack.c.l.b16 %v212
        %v286 = vunpack.c.l.b16 %v213
        %v287 = vunpack.c.l.b16 %v214
        %v288 = vunpack.c.l.b16 %v215
        %v289 = vunpack.c.l.b16 %v216
        %v290 = vunpack.c.l.b16 %v217
        %v291 = vunpack.c.l.b16 %v218
        %v292 = vunpack.c.l.b16 %v219
        %v293 = vunpack.c.l.b16 %v220
        %v294 = vunpack.c.l.b16 %v221
        %v295 = vunpack.c.l.b16 %v222
        %v296 = vunpack.c.l.b16 %v223
        %v297 = vunpack.c.l.b16 %v224
        %v298 = vunpack.c.l.b16 %v225
        %v299 = vunpack.c.l.b16 %v226
        %v300 = vunpack.c.l.b16 %v227
        %v301 = vunpack.c.l.b16 %v228
        %v302 = vunpack.c.l.b16 %v229
        %v303 = vunpack.c.l.b16 %v230
        %v304 = vunpack.c.l.b16 %v231
        %v305 = vunpack.c.l.b16 %v232
        %v306 = vunpack.c.l.b16 %v233
        %v307 = vunpack.c.l.b16 %v234
        %v308 = vpack.c.b16 %v277, %v276
        %v309 = vpack.c.b16 %v279, %v278
        %v310 = vpack.c.b16 %v281, %v280
        %v311 = vpack.c.b16 %v283, %v282
        %v312 = vpack.c.b16 %v285, %v284
        %v313 = vpack.c.b16 %v287, %v286
        %v314 = vpack.c.b16 %v289, %v288
        %v315 = vpack.c.b16 %v291, %v290
        %v316 = vpack.c.b16 %v293, %v292
        %v317 = vpack.c.b16 %v295, %v294
        %v318 = vpack.c.b16 %v297, %v296
        %v319 = vpack.c.b16 %v299, %v298
        %v320 = vpack.c.b16 %v301, %v300
        %v321 = vpack.c.b16 %v303, %v302
        %v322 = vpack.c.b16 %v305, %v304
        %v323 = vpack.c.b16 %v307, %v306
        %v326 = vunpack.c.l.b16 %v235
        %v327 = vunpack.c.l.b16 %v236
        %v328 = vpack.c.b16 %v327, %v326
        %vm330 = vcmask 130048
        %v332 = vsel %vm330, %v308, 0
        %v335 = vsel %vm330, %v309, 0
        %v338 = vsel %vm330, %v310, 0
        %v341 = vsel %vm330, %v311, 0
        %v344 = vsel %vm330, %v312, 0
        %v347 = vsel %vm330, %v313, 0
        %v350 = vsel %vm330, %v314, 0
        %v353 = vsel %vm330, %v315, 0
        %v356 = vsel %vm330, %v316, 0
        %v359 = vsel %vm330, %v317, 0
        %v362 = vsel %vm330, %v318, 0
        %v365 = vsel %vm330, %v319, 0
        %v368 = vsel %vm330, %v320, 0
        %v371 = vsel %vm330, %v321, 0
        %v374 = vsel %vm330, %v322, 0
        %v377 = vsel %vm330, %v323, 0
        %379 = vmatprep.subr.bf16.mxu0 0
        %380 = vmatpush1.bf16.msra.mxu0 %v328
        %381 = vmatprep.subr.bf16.mxu0 0
        %382 = vmatpush1.bf16.msra.mxu0 0
        %383 = vmatprep.subr.bf16.mxu0 0
        %384 = vmatpush1.bf16.msra.mxu0 0
        %385 = vmatprep.subr.bf16.mxu0 0
        %386 = vmatpush1.bf16.msra.mxu0 0
        %387 = vmatprep.subr.bf16.mxu0 0
        %388 = vmatpush1.bf16.msra.mxu0 0
        %389 = vmatprep.subr.bf16.mxu0 0
        %390 = vmatpush1.bf16.msra.mxu0 0
        %391 = vmatprep.subr.bf16.mxu0 0
        %392 = vmatpush1.bf16.msra.mxu0 0
        %393 = vmatprep.subr.bf16.mxu0 0
        %394 = vmatpush1.bf16.msra.mxu0 0
        %395 = vmatprep.subr.bf16.mxu0 0
        %396 = vmatpush1.bf16.msra.mxu0 0
        %397 = vmatprep.subr.bf16.mxu0 0
        %398 = vmatpush1.bf16.msra.mxu0 0
        %399 = vmatprep.subr.bf16.mxu0 0
        %400 = vmatpush1.bf16.msra.mxu0 0
        %401 = vmatprep.subr.bf16.mxu0 0
        %402 = vmatpush1.bf16.msra.mxu0 0
        %403 = vmatprep.subr.bf16.mxu0 0
        %404 = vmatpush1.bf16.msra.mxu0 0
        %405 = vmatprep.subr.bf16.mxu0 0
        %406 = vmatpush1.bf16.msra.mxu0 0
        %407 = vmatprep.subr.bf16.mxu0 0
        %408 = vmatpush1.bf16.msra.mxu0 0
        %409 = vmatprep.subr.bf16.mxu0 0
        %410 = vmatpush1.bf16.msra.mxu0 0
        %411 = vmatprep.mubr.bf16.mxu0 0
        %412 = vmatmul.mubr.bf16.gmra.mrb[0].mxu0 %v332
        %v413 = vpop.f32.mrb[0].mxu0
        %v414 = vadd.f32 %v242, %v413
        %v415 = vpop.f32.mrb[0].mxu0
        %v416 = vpop.f32.mrb[0].mxu0
        %v417 = vadd.f32 %v242, %v416
        %v418 = vpop.f32.mrb[0].mxu0
        %419 = vmatprep.mubr.bf16.mxu0 0
        %420 = vmatmul.mubr.bf16.gmra.mrb[0].mxu0 %v335
        %v421 = vpop.f32.mrb[0].mxu0
        %v422 = vadd.f32 %v242, %v421
        %v423 = vpop.f32.mrb[0].mxu0
        %v424 = vpop.f32.mrb[0].mxu0
        %v425 = vadd.f32 %v242, %v424
        %v426 = vpop.f32.mrb[0].mxu0
        %427 = vmatprep.mubr.bf16.mxu0 0
        %428 = vmatmul.mubr.bf16.gmra.mrb[0].mxu0 %v338
        %v429 = vpop.f32.mrb[0].mxu0
        %v430 = vadd.f32 %v242, %v429
        %v431 = vpop.f32.mrb[0].mxu0
        %v432 = vpop.f32.mrb[0].mxu0
        %v433 = vadd.f32 %v242, %v432
        %v434 = vpop.f32.mrb[0].mxu0
        %435 = vmatprep.mubr.bf16.mxu0 0
        %436 = vmatmul.mubr.bf16.gmra.mrb[0].mxu0 %v341
        %v437 = vpop.f32.mrb[0].mxu0
        %v438 = vadd.f32 %v242, %v437
        %v439 = vpop.f32.mrb[0].mxu0
        %v440 = vpop.f32.mrb[0].mxu0
        %v441 = vadd.f32 %v242, %v440
        %v442 = vpop.f32.mrb[0].mxu0
        %443 = vmatprep.mubr.bf16.mxu0 0
        %444 = vmatmul.mubr.bf16.gmra.mrb[0].mxu0 %v344
        %v445 = vpop.f32.mrb[0].mxu0
        %v446 = vadd.f32 %v242, %v445
        %v447 = vpop.f32.mrb[0].mxu0
        %v448 = vpop.f32.mrb[0].mxu0
        %v449 = vadd.f32 %v242, %v448
        %v450 = vpop.f32.mrb[0].mxu0
        %451 = vmatprep.mubr.bf16.mxu0 0
        %452 = vmatmul.mubr.bf16.gmra.mrb[0].mxu0 %v347
        %v453 = vpop.f32.mrb[0].mxu0
        %v454 = vadd.f32 %v242, %v453
        %v455 = vpop.f32.mrb[0].mxu0
        %v456 = vpop.f32.mrb[0].mxu0
        %v457 = vadd.f32 %v242, %v456
        %v458 = vpop.f32.mrb[0].mxu0
        %459 = vmatprep.mubr.bf16.mxu0 0
        %460 = vmatmul.mubr.bf16.gmra.mrb[0].mxu0 %v350
        %v461 = vpop.f32.mrb[0].mxu0
        %v462 = vadd.f32 %v242, %v461
        %v463 = vpop.f32.mrb[0].mxu0
        %v464 = vpop.f32.mrb[0].mxu0
        %v465 = vadd.f32 %v242, %v464
        %v466 = vpop.f32.mrb[0].mxu0
        %467 = vmatprep.mubr.bf16.mxu0 0
        %468 = vmatmul.mubr.bf16.gmra.mrb[0].mxu0 %v353
        %v469 = vpop.f32.mrb[0].mxu0
        %v470 = vadd.f32 %v242, %v469
        %v471 = vpop.f32.mrb[0].mxu0
        %v472 = vpop.f32.mrb[0].mxu0
        %v473 = vadd.f32 %v242, %v472
        %v474 = vpop.f32.mrb[0].mxu0
        %475 = vmatprep.mubr.bf16.mxu0 0
        %476 = vmatmul.mubr.bf16.gmra.mrb[0].mxu0 %v356
        %v477 = vpop.f32.mrb[0].mxu0
        %v478 = vadd.f32 %v242, %v477
        %v479 = vpop.f32.mrb[0].mxu0
        %v480 = vpop.f32.mrb[0].mxu0
        %v481 = vadd.f32 %v242, %v480
        %v482 = vpop.f32.mrb[0].mxu0
        %483 = vmatprep.mubr.bf16.mxu0 0
        %484 = vmatmul.mubr.bf16.gmra.mrb[0].mxu0 %v359
        %v485 = vpop.f32.mrb[0].mxu0
        %v486 = vadd.f32 %v242, %v485
        %v487 = vpop.f32.mrb[0].mxu0
        %v488 = vpop.f32.mrb[0].mxu0
        %v489 = vadd.f32 %v242, %v488
        %v490 = vpop.f32.mrb[0].mxu0
        %491 = vmatprep.mubr.bf16.mxu0 0
        %492 = vmatmul.mubr.bf16.gmra.mrb[0].mxu0 %v362
        %v493 = vpop.f32.mrb[0].mxu0
        %v494 = vadd.f32 %v242, %v493
        %v495 = vpop.f32.mrb[0].mxu0
        %v496 = vpop.f32.mrb[0].mxu0
        %v497 = vadd.f32 %v242, %v496
        %v498 = vpop.f32.mrb[0].mxu0
        %499 = vmatprep.mubr.bf16.mxu0 0
        %500 = vmatmul.mubr.bf16.gmra.mrb[0].mxu0 %v365
        %v501 = vpop.f32.mrb[0].mxu0
        %v502 = vadd.f32 %v242, %v501
        %v503 = vpop.f32.mrb[0].mxu0
        %v504 = vpop.f32.mrb[0].mxu0
        %v505 = vadd.f32 %v242, %v504
        %v506 = vpop.f32.mrb[0].mxu0
        %507 = vmatprep.mubr.bf16.mxu0 0
        %508 = vmatmul.mubr.bf16.gmra.mrb[0].mxu0 %v368
        %v509 = vpop.f32.mrb[0].mxu0
        %v510 = vadd.f32 %v242, %v509
        %v511 = vpop.f32.mrb[0].mxu0
        %v512 = vpop.f32.mrb[0].mxu0
        %v513 = vadd.f32 %v242, %v512
        %v514 = vpop.f32.mrb[0].mxu0
        %515 = vmatprep.mubr.bf16.mxu0 0
        %516 = vmatmul.mubr.bf16.gmra.mrb[0].mxu0 %v371
        %v517 = vpop.f32.mrb[0].mxu0
        %v518 = vadd.f32 %v242, %v517
        %v519 = vpop.f32.mrb[0].mxu0
        %v520 = vpop.f32.mrb[0].mxu0
        %v521 = vadd.f32 %v242, %v520
        %v522 = vpop.f32.mrb[0].mxu0
        %523 = vmatprep.mubr.bf16.mxu0 0
        %524 = vmatmul.mubr.bf16.gmra.mrb[0].mxu0 %v374
        %v525 = vpop.f32.mrb[0].mxu0
        %v526 = vadd.f32 %v242, %v525
        %v527 = vpop.f32.mrb[0].mxu0
        %v528 = vpop.f32.mrb[0].mxu0
        %v529 = vadd.f32 %v242, %v528
        %v530 = vpop.f32.mrb[0].mxu0
        %531 = vmatprep.mubr.bf16.mxu0 0
        %532 = vmatmul.mubr.bf16.gmra.mrb[0].mxu0 %v377
        %v533 = vpop.f32.mrb[0].mxu0
        %v534 = vadd.f32 %v242, %v533
        %v535 = vpop.f32.mrb[0].mxu0
        %v536 = vpop.f32.mrb[0].mxu0
        %v537 = vadd.f32 %v242, %v536
        %v538 = vpop.f32.mrb[0].mxu0
        %539 = vdwg.mxu0
        %v540 = vmax.f32 %v414, 0.0
        %v541 = vmax.f32 %v417, 0.0
        %v542 = vmax.f32 %v422, 0.0
        %v543 = vmax.f32 %v425, 0.0
        %v544 = vmax.f32 %v430, 0.0
        %v545 = vmax.f32 %v433, 0.0
        %v546 = vmax.f32 %v438, 0.0
        %v547 = vmax.f32 %v441, 0.0
        %v548 = vmax.f32 %v446, 0.0
        %v549 = vmax.f32 %v449, 0.0
        %v550 = vmax.f32 %v454, 0.0
        %v551 = vmax.f32 %v457, 0.0
        %v552 = vmax.f32 %v462, 0.0
        %v553 = vmax.f32 %v465, 0.0
        %v554 = vmax.f32 %v470, 0.0
        %v555 = vmax.f32 %v473, 0.0
        %v556 = vmax.f32 %v478, 0.0
        %v557 = vmax.f32 %v481, 0.0
        %v558 = vmax.f32 %v486, 0.0
        %v559 = vmax.f32 %v489, 0.0
        %v560 = vmax.f32 %v494, 0.0
        %v561 = vmax.f32 %v497, 0.0
        %v562 = vmax.f32 %v502, 0.0
        %v563 = vmax.f32 %v505, 0.0
        %v564 = vmax.f32 %v510, 0.0
        %v565 = vmax.f32 %v513, 0.0
        %v566 = vmax.f32 %v518, 0.0
        %v567 = vmax.f32 %v521, 0.0
        %v568 = vmax.f32 %v526, 0.0
        %v569 = vmax.f32 %v529, 0.0
        %v570 = vmax.f32 %v534, 0.0
        %v571 = vmax.f32 %v537, 0.0
        %572 = vst [vmem:[%s200] sm:$0xff] %v540
        %573 = vst [vmem:[%s200 + $0x8] sm:$0xff] %v541
        %574 = vst [vmem:[%s200 + $0x10] sm:$0xff] %v542
        %575 = vst [vmem:[%s200 + $0x18] sm:$0xff] %v543
        %576 = vst [vmem:[%s200 + $0x20] sm:$0xff] %v544
        %577 = vst [vmem:[%s200 + $0x28] sm:$0xff] %v545
        %578 = vst [vmem:[%s200 + $0x30] sm:$0xff] %v546
        %579 = vst [vmem:[%s200 + $0x38] sm:$0xff] %v547
        %580 = vst [vmem:[%s200 + $0x40] sm:$0xff] %v548
        %581 = vst [vmem:[%s200 + $0x48] sm:$0xff] %v549
        %582 = vst [vmem:[%s200 + $0x50] sm:$0xff] %v550
        %583 = vst [vmem:[%s200 + $0x58] sm:$0xff] %v551
        %584 = vst [vmem:[%s200 + $0x60] sm:$0xff] %v552
        %585 = vst [vmem:[%s200 + $0x68] sm:$0xff] %v553
        %586 = vst [vmem:[%s200 + $0x70] sm:$0xff] %v554
        %587 = vst [vmem:[%s200 + $0x78] sm:$0xff] %v555
        %588 = vst [vmem:[%s200 + $0x80] sm:$0xff] %v556
        %589 = vst [vmem:[%s200 + $0x88] sm:$0xff] %v557
        %590 = vst [vmem:[%s200 + $0x90] sm:$0xff] %v558
        %591 = vst [vmem:[%s200 + $0x98] sm:$0xff] %v559
        %592 = vst [vmem:[%s200 + $0xa0] sm:$0xff] %v560
        %593 = vst [vmem:[%s200 + $0xa8] sm:$0xff] %v561
        %594 = vst [vmem:[%s200 + $0xb0] sm:$0xff] %v562
        %595 = vst [vmem:[%s200 + $0xb8] sm:$0xff] %v563
        %596 = vst [vmem:[%s200 + $0xc0] sm:$0xff] %v564
        %597 = vst [vmem:[%s200 + $0xc8] sm:$0xff] %v565
        %598 = vst [vmem:[%s200 + $0xd0] sm:$0xff] %v566
        %599 = vst [vmem:[%s200 + $0xd8] sm:$0xff] %v567
        %600 = vst [vmem:[%s200 + $0xe0] sm:$0xff] %v568
        %601 = vst [vmem:[%s200 + $0xe8] sm:$0xff] %v569
        %602 = vst [vmem:[%s200 + $0xf0] sm:$0xff] %v570
        %603 = vst [vmem:[%s200 + $0xf8] sm:$0xff] %v571
        %s604 = smul.u32 32, %s16
        %p605 = scmp.lt.s32.totalorder %s604, 63
        %s606 = scalar_select %p605, %s604, 63
        %s607 = smul.addr %s606, 8
        %s608 = scalar_lea.vmem %s3, %s607
        // Predicated region
        $region41: #{fcn_forward.7} parent=31 // pred_check
          %p609 = pneg %p102
        $region42: #{fcn_forward.7} parent=31 // pred_check_branch
          %611 = sbr.rel (%p609) target = $region44
        $region43: #{fcn_forward.7} parent=31 // pred_region
          %s612 = smul.u32 32, %s16
        $region44: #{fcn_forward.7} parent=31 // pred_fallthru
          _
      $region32: #{fcn_forward.7} parent=5 // pred_fallthru
        _
      %p613 = scmp.le.s32.totalorder 2, %s11
      // Predicated region
      $region45: #{fcn_forward.7} parent=5 // pred_check
        %p614 = pneg %p613
      $region46: #{fcn_forward.7} parent=5 // pred_check_branch
        %616 = sbr.rel (%p614) target = $region48
      $region47: #{fcn_forward.7} parent=5 // pred_region
        %s617 = ssub.s32 %s11, 2
        // Predicated region
        $region49: #{fcn_forward.7} parent=47 // pred_check
          %p618 = pneg %p108
        $region50: #{fcn_forward.7} parent=47 // pred_check_branch
          %620 = sbr.rel (%p618) target = $region52
        $region51: #{fcn_forward.7} parent=47 // pred_region
          %s621 = smul.u32 32, %s17
          %p622 = scmp.lt.s32.totalorder %s621, 63
          %s623 = scalar_select %p622, %s621, 63
          %s624 = smul.addr %s623, 8
          %s625 = scalar_lea.vmem %s3, %s624
        $region52: #{fcn_forward.7} parent=47 // pred_fallthru
          _
      $region48: #{fcn_forward.7} parent=5 // pred_fallthru
        _
    $region6: #{fcn_forward.7} parent=1 // loop_footer
      %s15 = sadd.s32 1, %s11
    $region7: #{fcn_forward.7} parent=1 // loop_footer_branch
      %10 = sbr.rel target = $region3
    $region8: #{fcn_forward.7} parent=1 // loop_exit
      _
    %626 = vsyncpa [#allocation3], 1
    %s627 = scalar_lea.sflag [#allocation3], 1
    %628 = vsyncpa %s627, 1
    %629 = vsyncpa [#allocation5], 1

// kernel: fcn_forward.8
$region0: #{fcn_forward.8}
  #allocation0 [shape = 'u32[]', space=smem, size = 0x4, offset = 0x4, fixed_abs, tag = 'smem constant byte address 0x4 - core index']
  #allocation1 [shape = 'u32[144,128]{1,0:T(1,128)}', space=vmem, size = 0x12000, scoped, tag = 'internal scratch']
  %s0 = inlined_call_operand.vmem [shape: bf16[128,128], index: 0, kind: input, shape index: {}]
  %s1 = inlined_call_operand.vmem [shape: bf16[128,128], index: 1, kind: input, shape index: {}]
  %s2 = inlined_call_operand.vmem [shape: f32[1,128], index: 2, kind: input, shape index: {}]
  %s3 = inlined_call_operand.vmem [shape: f32[128,128], index: 3, kind: output, shape index: {}]
  %s4 = sld [smem:[#allocation0]]
  $region45: #{fcn_forward.8} parent=0
    _
  %s6 = ssub.s32 1, %s4
  %s7 = scalar_select 0, %s6, %s4
  loop: start=0, step=1, limit=4
  $region2: #{fcn_forward.8} parent=0 // loop_pre_header
    _
  $region3: #{fcn_forward.8} parent=0 // loop_header
    %s9 = sphi 0, %s13
    %p10 = scmp.ge.s32.totalorder %s9, 4
    %s19 = sphi 0, %s21
    %s22 = sphi 0, %s19
    %s23 = sphi 0, %s22
    %s39 = sphi 0, %s23
    %s43 = sphi 0, %s43
    %s45 = sphi 0, %s43
    %s46 = sphi 0, %s45
    %s60 = sphi 0, %s46
    %s64 = sphi 0, %s64
    %s66 = sphi 0, %s64
    %s67 = sphi 0, %s66
    %s81 = sphi 0, %s67
    %s87 = sphi 0, %s89
    %s90 = sphi 0, %s87
    %s91 = sphi 0, %s90
    %s107 = sphi 0, %s91
  $region4: #{fcn_forward.8} parent=0 // loop_header_branch
    %12 = sbr.rel (%p10) target = $region8
  $region5: #{fcn_forward.8} parent=0 // loop_body
    %s14 = ssub.s32 %s9, 1
    %s15 = ssub.s32 %s9, 2
    %s16 = sadd.s32 %s9, 1
    %s17 = ssub.s32 %s9, %s16
    %p18 = scmp.eq.s32.totalorder %s17, 0
    %s20 = sadd.s32 %s19, 1
    %s21 = scalar_select %p18, %s19, %s20
    %p24 = pneg %p18
    %p25 = scmp.eq.s32.totalorder %s9, 1
    %p26 = por %p24, %p25
    %p27 = scmp.ne.s32.totalorder %s19, %s22
    %p28 = scmp.eq.s32.totalorder %s9, 0
    %p29 = por %p27, %p28
    %p30 = scmp.ne.s32.totalorder %s19, %s22
    %p31 = scmp.eq.s32.totalorder %s14, 1
    %p32 = por %p30, %p31
    %p33 = scmp.ne.s32.totalorder %s22, %s23
    %p34 = scmp.eq.s32.totalorder %s14, 0
    %p35 = por %p33, %p34
    %p36 = scmp.ne.s32.totalorder %s22, %s23
    %p37 = scmp.eq.s32.totalorder %s15, 1
    %p38 = por %p36, %p37
    %p40 = scmp.ne.s32.totalorder %s23, %s39
    %p41 = scmp.eq.s32.totalorder %s15, 0
    %p42 = por %p40, %p41
    %s44 = sadd.s32 %s43, 1
    %p47 = scmp.eq.s32.totalorder %s9, 1
    %p48 = scmp.ne.s32.totalorder %s43, %s45
    %p49 = scmp.eq.s32.totalorder %s9, 0
    %p50 = por %p48, %p49
    %p51 = scmp.ne.s32.totalorder %s43, %s45
    %p52 = scmp.eq.s32.totalorder %s14, 1
    %p53 = por %p51, %p52
    %p54 = scmp.ne.s32.totalorder %s45, %s46
    %p55 = scmp.eq.s32.totalorder %s14, 0
    %p56 = por %p54, %p55
    %p57 = scmp.ne.s32.totalorder %s45, %s46
    %p58 = scmp.eq.s32.totalorder %s15, 1
    %p59 = por %p57, %p58
    %p61 = scmp.ne.s32.totalorder %s46, %s60
    %p62 = scmp.eq.s32.totalorder %s15, 0
    %p63 = por %p61, %p62
    %s65 = sadd.s32 %s64, 1
    %p68 = scmp.eq.s32.totalorder %s9, 1
    %p69 = scmp.ne.s32.totalorder %s64, %s66
    %p70 = scmp.eq.s32.totalorder %s9, 0
    %p71 = por %p69, %p70
    %p72 = scmp.ne.s32.totalorder %s64, %s66
    %p73 = scmp.eq.s32.totalorder %s14, 1
    %p74 = por %p72, %p73
    %p75 = scmp.ne.s32.totalorder %s66, %s67
    %p76 = scmp.eq.s32.totalorder %s14, 0
    %p77 = por %p75, %p76
    %p78 = scmp.ne.s32.totalorder %s66, %s67
    %p79 = scmp.eq.s32.totalorder %s15, 1
    %p80 = por %p78, %p79
    %p82 = scmp.ne.s32.totalorder %s67, %s81
    %p83 = scmp.eq.s32.totalorder %s15, 0
    %p84 = por %p82, %p83
    %s85 = ssub.s32 %s9, %s16
    %p86 = scmp.eq.s32.totalorder %s85, 0
    %s88 = sadd.s32 %s87, 1
    %s89 = scalar_select %p86, %s87, %s88
    %p92 = pneg %p86
    %p93 = scmp.eq.s32.totalorder %s9, 1
    %p94 = por %p92, %p93
    %p95 = scmp.ne.s32.totalorder %s87, %s90
    %p96 = scmp.eq.s32.totalorder %s9, 0
    %p97 = por %p95, %p96
    %p98 = scmp.ne.s32.totalorder %s87, %s90
    %p99 = scmp.eq.s32.totalorder %s14, 1
    %p100 = por %p98, %p99
    %p101 = scmp.ne.s32.totalorder %s90, %s91
    %p102 = scmp.eq.s32.totalorder %s14, 0
    %p103 = por %p101, %p102
    %p104 = scmp.ne.s32.totalorder %s90, %s91
    %p105 = scmp.eq.s32.totalorder %s15, 1
    %p106 = por %p104, %p105
    %p108 = scmp.ne.s32.totalorder %s91, %s107
    %p109 = scmp.eq.s32.totalorder %s15, 0
    %p110 = por %p108, %p109
    %p111 = scmp.le.s32.totalorder 1, %s9
    %p112 = scmp.lt.s32.totalorder %s9, 3
    %p113 = pnand %p111, %p112
    %p114 = pneg %p113
    // Predicated region
    $region9: #{fcn_forward.8} parent=5 // pred_check
      _
    $region10: #{fcn_forward.8} parent=5 // pred_check_branch
      %116 = sbr.rel (%p113) target = $region12
    $region11: #{fcn_forward.8} parent=5 // pred_region
      %s117 = ssub.s32 %s9, 1
      // Predicated region
      $region13: #{fcn_forward.8} parent=11 // pred_check
        %p118 = pneg %p56
      $region14: #{fcn_forward.8} parent=11 // pred_check_branch
        %120 = sbr.rel (%p118) target = $region16
      $region15: #{fcn_forward.8} parent=11 // pred_region
        _
      $region16: #{fcn_forward.8} parent=11 // pred_fallthru
        _
      // Predicated region
      $region17: #{fcn_forward.8} parent=11 // pred_check
        %p121 = pneg %p77
      $region18: #{fcn_forward.8} parent=11 // pred_check_branch
        %123 = sbr.rel (%p121) target = $region20
      $region19: #{fcn_forward.8} parent=11 // pred_region
        _
      $region20: #{fcn_forward.8} parent=11 // pred_fallthru
        _
    $region12: #{fcn_forward.8} parent=5 // pred_fallthru
      _
    %p124 = scmp.lt.s32.totalorder %s9, 2
    // Predicated region
    $region21: #{fcn_forward.8} parent=5 // pred_check
      %p125 = pneg %p124
    $region22: #{fcn_forward.8} parent=5 // pred_check_branch
      %127 = sbr.rel (%p125) target = $region24
    $region23: #{fcn_forward.8} parent=5 // pred_region
      // Predicated region
      $region25: #{fcn_forward.8} parent=23 // pred_check
        %p128 = pneg %p29
      $region26: #{fcn_forward.8} parent=23 // pred_check_branch
        %130 = sbr.rel (%p128) target = $region28
      $region27: #{fcn_forward.8} parent=23 // pred_region
        %s131 = smul.u32 8, %s9
        %p132 = scmp.lt.s32.totalorder %s131, 15
        %s133 = scalar_select %p132, %s131, 15
        %s134 = smul.addr %s133, 4
        %s135 = scalar_lea.vmem %s0, %s134
        %s136 = smul.u32 8, %s9
      $region28: #{fcn_forward.8} parent=23 // pred_fallthru
        _
    $region24: #{fcn_forward.8} parent=5 // pred_fallthru
      _
    %p137 = scmp.le.s32.totalorder 1, %s9
    %p138 = scmp.lt.s32.totalorder %s9, 3
    %p139 = pnand %p137, %p138
    %p140 = pneg %p139
    // Predicated region
    $region29: #{fcn_forward.8} parent=5 // pred_check
      _
    $region30: #{fcn_forward.8} parent=5 // pred_check_branch
      %142 = sbr.rel (%p139) target = $region32
    $region31: #{fcn_forward.8} parent=5 // pred_region
      %s143 = ssub.s32 %s9, 1
      %s144 = smul.u32 8, %s14
      %p145 = scmp.lt.s32.totalorder %s144, 15
      %s146 = scalar_select %p145, %s144, 15
      %s147 = smul.addr %s146, 4
      %s148 = scalar_lea.vmem %s0, %s147
      %p149 = pneg %p35
      %p150 = pneg %p32
      %p151 = pneg %p56
      %p152 = pneg %p53
      %p153 = pneg %p77
      %p154 = pneg %p74
      %p155 = pneg %p103
      %p156 = pneg %p100
      %s157 = smul.u32 8, %s14
      %p158 = scmp.lt.s32.totalorder %s157, 15
      %s159 = scalar_select %p158, %s157, 15
      %s160 = smul.addr %s159, 8
      %s161 = scalar_lea.vmem %s3, %s160
      %s162 = smul.u32 8, %s14
      %p163 = scmp.lt.s32.totalorder %s162, 15
      %s164 = scalar_select %p163, %s162, 15
      %s165 = smul.addr %s164, 4
      %s166 = scalar_lea.vmem %s0, %s165
      %s167 = smul.u32 8, %s14
      %s168 = smul.u32 8, %s14
      %p169 = scmp.lt.s32.totalorder %s168, 15
      %s170 = scalar_select %p169, %s168, 15
      %s171 = smul.addr %s170, 8
      %s172 = scalar_lea.vmem %s3, %s171
      %s173 = smul.u32 8, %s14
      %v175 = vld [vmem:[%s166] sm:$0xf]
      %v176 = vld [vmem:[%s166 + $0x4] sm:$0xf]
      %v177 = vld [vmem:[%s166 + $0x8] sm:$0xf]
      %v178 = vld [vmem:[%s166 + $0xc] sm:$0xf]
      %v179 = vld [vmem:[%s166 + $0x10] sm:$0xf]
      %v180 = vld [vmem:[%s166 + $0x14] sm:$0xf]
      %v181 = vld [vmem:[%s166 + $0x18] sm:$0xf]
      %v182 = vld [vmem:[%s166 + $0x1c] sm:$0xf]
      %v183 = vld [vmem:[%s1] sm:$0xf]
      %v184 = vld [vmem:[%s1 + $0x4] sm:$0xf]
      %v185 = vld [vmem:[%s1 + $0x8] sm:$0xf]
      %v186 = vld [vmem:[%s1 + $0xc] sm:$0xf]
      %v187 = vld [vmem:[%s1 + $0x10] sm:$0xf]
      %v188 = vld [vmem:[%s1 + $0x14] sm:$0xf]
      %v189 = vld [vmem:[%s1 + $0x18] sm:$0xf]
      %v190 = vld [vmem:[%s1 + $0x1c] sm:$0xf]
      %v191 = vld [vmem:[%s1 + $0x20] sm:$0xf]
      %v192 = vld [vmem:[%s1 + $0x24] sm:$0xf]
      %v193 = vld [vmem:[%s1 + $0x28] sm:$0xf]
      %v194 = vld [vmem:[%s1 + $0x2c] sm:$0xf]
      %v195 = vld [vmem:[%s1 + $0x30] sm:$0xf]
      %v196 = vld [vmem:[%s1 + $0x34] sm:$0xf]
      %v197 = vld [vmem:[%s1 + $0x38] sm:$0xf]
      %v198 = vld [vmem:[%s1 + $0x3c] sm:$0xf]
      %v199 = vld [vmem:[%s2] sm:$0x1]
      %v201 = vlaneseq
      %v202 = vshrl.u32 %v201, 7
      %v203 = vsub.s32 0, %v202
      %v204 = vrot.slane %v199, %v203
      %v214 = vunpack.c.l.b16 %v175
      %v215 = vunpack.c.l.b16 %v176
      %v216 = vunpack.c.l.b16 %v177
      %v217 = vunpack.c.l.b16 %v178
      %v218 = vunpack.c.l.b16 %v179
      %v219 = vunpack.c.l.b16 %v180
      %v220 = vunpack.c.l.b16 %v181
      %v221 = vunpack.c.l.b16 %v182
      %v222 = vpack.c.b16 %v215, %v214
      %v223 = vpack.c.b16 %v217, %v216
      %v224 = vpack.c.b16 %v219, %v218
      %v225 = vpack.c.b16 %v221, %v220
      %v246 = vunpack.c.l.b16 %v183
      %v247 = vunpack.c.l.b16 %v184
      %v248 = vunpack.c.l.b16 %v185
      %v249 = vunpack.c.l.b16 %v186
      %v250 = vunpack.c.l.b16 %v187
      %v251 = vunpack.c.l.b16 %v188
      %v252 = vunpack.c.l.b16 %v189
      %v253 = vunpack.c.l.b16 %v190
      %v254 = vunpack.c.l.b16 %v191
      %v255 = vunpack.c.l.b16 %v192
      %v256 = vunpack.c.l.b16 %v193
      %v257 = vunpack.c.l.b16 %v194
      %v258 = vunpack.c.l.b16 %v195
      %v259 = vunpack.c.l.b16 %v196
      %v260 = vunpack.c.l.b16 %v197
      %v261 = vunpack.c.l.b16 %v198
      %v262 = vpack.c.b16 %v247, %v246
      %v263 = vpack.c.b16 %v249, %v248
      %v264 = vpack.c.b16 %v251, %v250
      %v265 = vpack.c.b16 %v253, %v252
      %v266 = vpack.c.b16 %v255, %v254
      %v267 = vpack.c.b16 %v257, %v256
      %v268 = vpack.c.b16 %v259, %v258
      %v269 = vpack.c.b16 %v261, %v260
      %278 = vmatprep.subr.bf16.mxu0 0
      %279 = vmatpush1.bf16.msra.mxu0 %v262
      %280 = vmatprep.subr.bf16.mxu0 0
      %281 = vmatpush1.bf16.msra.mxu0 %v263
      %282 = vmatprep.subr.bf16.mxu0 0
      %283 = vmatpush1.bf16.msra.mxu0 %v264
      %284 = vmatprep.subr.bf16.mxu0 0
      %285 = vmatpush1.bf16.msra.mxu0 %v265
      %286 = vmatprep.subr.bf16.mxu0 0
      %287 = vmatpush1.bf16.msra.mxu0 %v266
      %288 = vmatprep.subr.bf16.mxu0 0
      %289 = vmatpush1.bf16.msra.mxu0 %v267
      %290 = vmatprep.subr.bf16.mxu0 0
      %291 = vmatpush1.bf16.msra.mxu0 %v268
      %292 = vmatprep.subr.bf16.mxu0 0
      %293 = vmatpush1.bf16.msra.mxu0 %v269
      %294 = vmatprep.subr.bf16.mxu0 0
      %295 = vmatpush1.bf16.msra.mxu0 0
      %296 = vmatprep.subr.bf16.mxu0 0
      %297 = vmatpush1.bf16.msra.mxu0 0
      %298 = vmatprep.subr.bf16.mxu0 0
      %299 = vmatpush1.bf16.msra.mxu0 0
      %300 = vmatprep.subr.bf16.mxu0 0
      %301 = vmatpush1.bf16.msra.mxu0 0
      %302 = vmatprep.subr.bf16.mxu0 0
      %303 = vmatpush1.bf16.msra.mxu0 0
      %304 = vmatprep.subr.bf16.mxu0 0
      %305 = vmatpush1.bf16.msra.mxu0 0
      %306 = vmatprep.subr.bf16.mxu0 0
      %307 = vmatpush1.bf16.msra.mxu0 0
      %308 = vmatprep.subr.bf16.mxu0 0
      %309 = vmatpush1.bf16.msra.mxu0 0
      %310 = vmatprep.mubr.bf16.mxu0 0
      %311 = vmatmul.mubr.bf16.gmra.mrb[0].mxu0 %v222
      %v312 = vpop.f32.mrb[0].mxu0
      %v313 = vadd.f32 %v204, %v312
      %v314 = vpop.f32.mrb[0].mxu0
      %v315 = vpop.f32.mrb[0].mxu0
      %v316 = vadd.f32 %v204, %v315
      %v317 = vpop.f32.mrb[0].mxu0
      %318 = vmatprep.mubr.bf16.mxu0 0
      %319 = vmatmul.mubr.bf16.gmra.mrb[0].mxu0 %v223
      %v320 = vpop.f32.mrb[0].mxu0
      %v321 = vadd.f32 %v204, %v320
      %v322 = vpop.f32.mrb[0].mxu0
      %v323 = vpop.f32.mrb[0].mxu0
      %v324 = vadd.f32 %v204, %v323
      %v325 = vpop.f32.mrb[0].mxu0
      %326 = vmatprep.mubr.bf16.mxu0 0
      %327 = vmatmul.mubr.bf16.gmra.mrb[0].mxu0 %v224
      %v328 = vpop.f32.mrb[0].mxu0
      %v329 = vadd.f32 %v204, %v328
      %v330 = vpop.f32.mrb[0].mxu0
      %v331 = vpop.f32.mrb[0].mxu0
      %v332 = vadd.f32 %v204, %v331
      %v333 = vpop.f32.mrb[0].mxu0
      %334 = vmatprep.mubr.bf16.mxu0 0
      %335 = vmatmul.mubr.bf16.gmra.mrb[0].mxu0 %v225
      %v336 = vpop.f32.mrb[0].mxu0
      %v337 = vadd.f32 %v204, %v336
      %v338 = vpop.f32.mrb[0].mxu0
      %v339 = vpop.f32.mrb[0].mxu0
      %v340 = vadd.f32 %v204, %v339
      %v341 = vpop.f32.mrb[0].mxu0
      %342 = vdwg.mxu0
      %v343 = vmax.f32 %v313, 0.0
      %v344 = vmax.f32 %v316, 0.0
      %v345 = vmax.f32 %v321, 0.0
      %v346 = vmax.f32 %v324, 0.0
      %v347 = vmax.f32 %v329, 0.0
      %v348 = vmax.f32 %v332, 0.0
      %v349 = vmax.f32 %v337, 0.0
      %v350 = vmax.f32 %v340, 0.0
      %351 = vst [vmem:[%s172] sm:$0xff] %v343
      %352 = vst [vmem:[%s172 + $0x8] sm:$0xff] %v344
      %353 = vst [vmem:[%s172 + $0x10] sm:$0xff] %v345
      %354 = vst [vmem:[%s172 + $0x18] sm:$0xff] %v346
      %355 = vst [vmem:[%s172 + $0x20] sm:$0xff] %v347
      %356 = vst [vmem:[%s172 + $0x28] sm:$0xff] %v348
      %357 = vst [vmem:[%s172 + $0x30] sm:$0xff] %v349
      %358 = vst [vmem:[%s172 + $0x38] sm:$0xff] %v350
      %s359 = smul.u32 8, %s14
      %p360 = scmp.lt.s32.totalorder %s359, 15
      %s361 = scalar_select %p360, %s359, 15
      %s362 = smul.addr %s361, 8
      %s363 = scalar_lea.vmem %s3, %s362
      // Predicated region
      $region33: #{fcn_forward.8} parent=31 // pred_check
        %p364 = pneg %p100
      $region34: #{fcn_forward.8} parent=31 // pred_check_branch
        %366 = sbr.rel (%p364) target = $region36
      $region35: #{fcn_forward.8} parent=31 // pred_region
        %s367 = smul.u32 8, %s14
      $region36: #{fcn_forward.8} parent=31 // pred_fallthru
        _
    $region32: #{fcn_forward.8} parent=5 // pred_fallthru
      _
    %p368 = scmp.le.s32.totalorder 2, %s9
    // Predicated region
    $region37: #{fcn_forward.8} parent=5 // pred_check
      %p369 = pneg %p368
    $region38: #{fcn_forward.8} parent=5 // pred_check_branch
      %371 = sbr.rel (%p369) target = $region40
    $region39: #{fcn_forward.8} parent=5 // pred_region
      %s372 = ssub.s32 %s9, 2
      // Predicated region
      $region41: #{fcn_forward.8} parent=39 // pred_check
        %p373 = pneg %p106
      $region42: #{fcn_forward.8} parent=39 // pred_check_branch
        %375 = sbr.rel (%p373) target = $region44
      $region43: #{fcn_forward.8} parent=39 // pred_region
        %s376 = smul.u32 8, %s15
        %p377 = scmp.lt.s32.totalorder %s376, 15
        %s378 = scalar_select %p377, %s376, 15
        %s379 = smul.addr %s378, 8
        %s380 = scalar_lea.vmem %s3, %s379
      $region44: #{fcn_forward.8} parent=39 // pred_fallthru
        _
    $region40: #{fcn_forward.8} parent=5 // pred_fallthru
      _
  $region6: #{fcn_forward.8} parent=0 // loop_footer
    %s13 = sadd.s32 1, %s9
  $region7: #{fcn_forward.8} parent=0 // loop_footer_branch
    %8 = sbr.rel target = $region3
  $region8: #{fcn_forward.8} parent=0 // loop_exit
    _

// kernel: fcn_forward.9
$region0: #{fcn_forward.9}
  #allocation0 [shape = 'u32[]', space=smem, size = 0x4, offset = 0x4, fixed_abs, tag = 'smem constant byte address 0x4 - core index']
  #allocation1 [shape = 'u32[144,128]{1,0:T(1,128)}', space=vmem, size = 0x12000, scoped, tag = 'internal scratch']
  %s0 = inlined_call_operand.vmem [shape: bf16[32,256], index: 0, kind: input, shape index: {}]
  %s1 = inlined_call_operand.vmem [shape: bf16[256,128], index: 1, kind: input, shape index: {}]
  %s2 = inlined_call_operand.vmem [shape: f32[1,128], index: 2, kind: input, shape index: {}]
  %s3 = inlined_call_operand.vmem [shape: f32[32,128], index: 3, kind: output, shape index: {}]
  %s4 = sld [smem:[#allocation0]]
  $region45: #{fcn_forward.9} parent=0
    _
  %s6 = ssub.s32 1, %s4
  %s7 = scalar_select 0, %s6, %s4
  loop: start=0, step=1, limit=4
  $region2: #{fcn_forward.9} parent=0 // loop_pre_header
    _
  $region3: #{fcn_forward.9} parent=0 // loop_header
    %s9 = sphi 0, %s13
    %p10 = scmp.ge.s32.totalorder %s9, 4
    %s19 = sphi 0, %s21
    %s22 = sphi 0, %s19
    %s23 = sphi 0, %s22
    %s39 = sphi 0, %s23
    %s43 = sphi 0, %s43
    %s45 = sphi 0, %s43
    %s46 = sphi 0, %s45
    %s60 = sphi 0, %s46
    %s64 = sphi 0, %s64
    %s66 = sphi 0, %s64
    %s67 = sphi 0, %s66
    %s81 = sphi 0, %s67
    %s87 = sphi 0, %s89
    %s90 = sphi 0, %s87
    %s91 = sphi 0, %s90
    %s107 = sphi 0, %s91
  $region4: #{fcn_forward.9} parent=0 // loop_header_branch
    %12 = sbr.rel (%p10) target = $region8
  $region5: #{fcn_forward.9} parent=0 // loop_body
    %s14 = ssub.s32 %s9, 1
    %s15 = ssub.s32 %s9, 2
    %s16 = sadd.s32 %s9, 1
    %s17 = ssub.s32 %s9, %s16
    %p18 = scmp.eq.s32.totalorder %s17, 0
    %s20 = sadd.s32 %s19, 1
    %s21 = scalar_select %p18, %s19, %s20
    %p24 = pneg %p18
    %p25 = scmp.eq.s32.totalorder %s9, 1
    %p26 = por %p24, %p25
    %p27 = scmp.ne.s32.totalorder %s19, %s22
    %p28 = scmp.eq.s32.totalorder %s9, 0
    %p29 = por %p27, %p28
    %p30 = scmp.ne.s32.totalorder %s19, %s22
    %p31 = scmp.eq.s32.totalorder %s14, 1
    %p32 = por %p30, %p31
    %p33 = scmp.ne.s32.totalorder %s22, %s23
    %p34 = scmp.eq.s32.totalorder %s14, 0
    %p35 = por %p33, %p34
    %p36 = scmp.ne.s32.totalorder %s22, %s23
    %p37 = scmp.eq.s32.totalorder %s15, 1
    %p38 = por %p36, %p37
    %p40 = scmp.ne.s32.totalorder %s23, %s39
    %p41 = scmp.eq.s32.totalorder %s15, 0
    %p42 = por %p40, %p41
    %s44 = sadd.s32 %s43, 1
    %p47 = scmp.eq.s32.totalorder %s9, 1
    %p48 = scmp.ne.s32.totalorder %s43, %s45
    %p49 = scmp.eq.s32.totalorder %s9, 0
    %p50 = por %p48, %p49
    %p51 = scmp.ne.s32.totalorder %s43, %s45
    %p52 = scmp.eq.s32.totalorder %s14, 1
    %p53 = por %p51, %p52
    %p54 = scmp.ne.s32.totalorder %s45, %s46
    %p55 = scmp.eq.s32.totalorder %s14, 0
    %p56 = por %p54, %p55
    %p57 = scmp.ne.s32.totalorder %s45, %s46
    %p58 = scmp.eq.s32.totalorder %s15, 1
    %p59 = por %p57, %p58
    %p61 = scmp.ne.s32.totalorder %s46, %s60
    %p62 = scmp.eq.s32.totalorder %s15, 0
    %p63 = por %p61, %p62
    %s65 = sadd.s32 %s64, 1
    %p68 = scmp.eq.s32.totalorder %s9, 1
    %p69 = scmp.ne.s32.totalorder %s64, %s66
    %p70 = scmp.eq.s32.totalorder %s9, 0
    %p71 = por %p69, %p70
    %p72 = scmp.ne.s32.totalorder %s64, %s66
    %p73 = scmp.eq.s32.totalorder %s14, 1
    %p74 = por %p72, %p73
    %p75 = scmp.ne.s32.totalorder %s66, %s67
    %p76 = scmp.eq.s32.totalorder %s14, 0
    %p77 = por %p75, %p76
    %p78 = scmp.ne.s32.totalorder %s66, %s67
    %p79 = scmp.eq.s32.totalorder %s15, 1
    %p80 = por %p78, %p79
    %p82 = scmp.ne.s32.totalorder %s67, %s81
    %p83 = scmp.eq.s32.totalorder %s15, 0
    %p84 = por %p82, %p83
    %s85 = ssub.s32 %s9, %s16
    %p86 = scmp.eq.s32.totalorder %s85, 0
    %s88 = sadd.s32 %s87, 1
    %s89 = scalar_select %p86, %s87, %s88
    %p92 = pneg %p86
    %p93 = scmp.eq.s32.totalorder %s9, 1
    %p94 = por %p92, %p93
    %p95 = scmp.ne.s32.totalorder %s87, %s90
    %p96 = scmp.eq.s32.totalorder %s9, 0
    %p97 = por %p95, %p96
    %p98 = scmp.ne.s32.totalorder %s87, %s90
    %p99 = scmp.eq.s32.totalorder %s14, 1
    %p100 = por %p98, %p99
    %p101 = scmp.ne.s32.totalorder %s90, %s91
    %p102 = scmp.eq.s32.totalorder %s14, 0
    %p103 = por %p101, %p102
    %p104 = scmp.ne.s32.totalorder %s90, %s91
    %p105 = scmp.eq.s32.totalorder %s15, 1
    %p106 = por %p104, %p105
    %p108 = scmp.ne.s32.totalorder %s91, %s107
    %p109 = scmp.eq.s32.totalorder %s15, 0
    %p110 = por %p108, %p109
    %p111 = scmp.le.s32.totalorder 1, %s9
    %p112 = scmp.lt.s32.totalorder %s9, 3
    %p113 = pnand %p111, %p112
    %p114 = pneg %p113
    // Predicated region
    $region9: #{fcn_forward.9} parent=5 // pred_check
      _
    $region10: #{fcn_forward.9} parent=5 // pred_check_branch
      %116 = sbr.rel (%p113) target = $region12
    $region11: #{fcn_forward.9} parent=5 // pred_region
      %s117 = ssub.s32 %s9, 1
      // Predicated region
      $region13: #{fcn_forward.9} parent=11 // pred_check
        %p118 = pneg %p56
      $region14: #{fcn_forward.9} parent=11 // pred_check_branch
        %120 = sbr.rel (%p118) target = $region16
      $region15: #{fcn_forward.9} parent=11 // pred_region
        _
      $region16: #{fcn_forward.9} parent=11 // pred_fallthru
        _
      // Predicated region
      $region17: #{fcn_forward.9} parent=11 // pred_check
        %p121 = pneg %p77
      $region18: #{fcn_forward.9} parent=11 // pred_check_branch
        %123 = sbr.rel (%p121) target = $region20
      $region19: #{fcn_forward.9} parent=11 // pred_region
        _
      $region20: #{fcn_forward.9} parent=11 // pred_fallthru
        _
    $region12: #{fcn_forward.9} parent=5 // pred_fallthru
      _
    %p124 = scmp.lt.s32.totalorder %s9, 2
    // Predicated region
    $region21: #{fcn_forward.9} parent=5 // pred_check
      %p125 = pneg %p124
    $region22: #{fcn_forward.9} parent=5 // pred_check_branch
      %127 = sbr.rel (%p125) target = $region24
    $region23: #{fcn_forward.9} parent=5 // pred_region
      // Predicated region
      $region25: #{fcn_forward.9} parent=23 // pred_check
        %p128 = pneg %p29
      $region26: #{fcn_forward.9} parent=23 // pred_check_branch
        %130 = sbr.rel (%p128) target = $region28
      $region27: #{fcn_forward.9} parent=23 // pred_region
        %s131 = smul.u32 2, %s9
        %p132 = scmp.lt.s32.totalorder %s131, 3
        %s133 = scalar_select %p132, %s131, 3
        %s134 = smul.addr %s133, 2
        %s135 = smul.addr %s134, 4
        %s136 = scalar_lea.vmem %s0, %s135
        %s137 = smul.u32 2, %s9
      $region28: #{fcn_forward.9} parent=23 // pred_fallthru
        _
    $region24: #{fcn_forward.9} parent=5 // pred_fallthru
      _
    %p138 = scmp.le.s32.totalorder 1, %s9
    %p139 = scmp.lt.s32.totalorder %s9, 3
    %p140 = pnand %p138, %p139
    %p141 = pneg %p140
    // Predicated region
    $region29: #{fcn_forward.9} parent=5 // pred_check
      _
    $region30: #{fcn_forward.9} parent=5 // pred_check_branch
      %143 = sbr.rel (%p140) target = $region32
    $region31: #{fcn_forward.9} parent=5 // pred_region
      %s144 = ssub.s32 %s9, 1
      %s145 = smul.u32 2, %s14
      %p146 = scmp.lt.s32.totalorder %s145, 3
      %s147 = scalar_select %p146, %s145, 3
      %s148 = smul.addr %s147, 2
      %s149 = smul.addr %s148, 4
      %s150 = scalar_lea.vmem %s0, %s149
      %p151 = pneg %p35
      %p152 = pneg %p32
      %p153 = pneg %p56
      %p154 = pneg %p53
      %p155 = pneg %p77
      %p156 = pneg %p74
      %p157 = pneg %p103
      %p158 = pneg %p100
      %s159 = smul.u32 2, %s14
      %p160 = scmp.lt.s32.totalorder %s159, 3
      %s161 = scalar_select %p160, %s159, 3
      %s162 = smul.addr %s161, 8
      %s163 = scalar_lea.vmem %s3, %s162
      %s164 = smul.u32 2, %s14
      %p165 = scmp.lt.s32.totalorder %s164, 3
      %s166 = scalar_select %p165, %s164, 3
      %s167 = smul.addr %s166, 2
      %s168 = smul.addr %s167, 4
      %s169 = scalar_lea.vmem %s0, %s168
      %s170 = smul.u32 2, %s14
      %s171 = smul.u32 2, %s14
      %p172 = scmp.lt.s32.totalorder %s171, 3
      %s173 = scalar_select %p172, %s171, 3
      %s174 = smul.addr %s173, 8
      %s175 = scalar_lea.vmem %s3, %s174
      %s176 = smul.u32 2, %s14
      %v178 = vld [vmem:[%s169] sm:$0xff]
      %v179 = vld [vmem:[%s169 + $0x8] sm:$0xff]
      %v180 = vld [vmem:[%s1] sm:$0xf]
      %v181 = vld [vmem:[%s1 + $0x4] sm:$0xf]
      %v182 = vld [vmem:[%s1 + $0x8] sm:$0xf]
      %v183 = vld [vmem:[%s1 + $0xc] sm:$0xf]
      %v184 = vld [vmem:[%s1 + $0x10] sm:$0xf]
      %v185 = vld [vmem:[%s1 + $0x14] sm:$0xf]
      %v186 = vld [vmem:[%s1 + $0x18] sm:$0xf]
      %v187 = vld [vmem:[%s1 + $0x1c] sm:$0xf]
      %v188 = vld [vmem:[%s1 + $0x20] sm:$0xf]
      %v189 = vld [vmem:[%s1 + $0x24] sm:$0xf]
      %v190 = vld [vmem:[%s1 + $0x28] sm:$0xf]
      %v191 = vld [vmem:[%s1 + $0x2c] sm:$0xf]
      %v192 = vld [vmem:[%s1 + $0x30] sm:$0xf]
      %v193 = vld [vmem:[%s1 + $0x34] sm:$0xf]
      %v194 = vld [vmem:[%s1 + $0x38] sm:$0xf]
      %v195 = vld [vmem:[%s1 + $0x3c] sm:$0xf]
      %v196 = vld [vmem:[%s1 + $0x40] sm:$0xf]
      %v197 = vld [vmem:[%s1 + $0x44] sm:$0xf]
      %v198 = vld [vmem:[%s1 + $0x48] sm:$0xf]
      %v199 = vld [vmem:[%s1 + $0x4c] sm:$0xf]
      %v200 = vld [vmem:[%s1 + $0x50] sm:$0xf]
      %v201 = vld [vmem:[%s1 + $0x54] sm:$0xf]
      %v202 = vld [vmem:[%s1 + $0x58] sm:$0xf]
      %v203 = vld [vmem:[%s1 + $0x5c] sm:$0xf]
      %v204 = vld [vmem:[%s1 + $0x60] sm:$0xf]
      %v205 = vld [vmem:[%s1 + $0x64] sm:$0xf]
      %v206 = vld [vmem:[%s1 + $0x68] sm:$0xf]
      %v207 = vld [vmem:[%s1 + $0x6c] sm:$0xf]
      %v208 = vld [vmem:[%s1 + $0x70] sm:$0xf]
      %v209 = vld [vmem:[%s1 + $0x74] sm:$0xf]
      %v210 = vld [vmem:[%s1 + $0x78] sm:$0xf]
      %v211 = vld [vmem:[%s1 + $0x7c] sm:$0xf]
      %v212 = vld [vmem:[%s2] sm:$0x1]
      %v214 = vlaneseq
      %v215 = vshrl.u32 %v214, 7
      %v216 = vsub.s32 0, %v215
      %v217 = vrot.slane %v212, %v216
      %v221 = vunpack.c.l.b16 %v178
      %v222 = vunpack.c.h.b16 %v178
      %v223 = vunpack.c.l.b16 %v179
      %v224 = vunpack.c.h.b16 %v179
      %v225 = vpack.c.b16 %v223, %v221
      %v226 = vpack.c.b16 %v224, %v222
      %v261 = vunpack.c.l.b16 %v180
      %v262 = vunpack.c.l.b16 %v181
      %v263 = vunpack.c.l.b16 %v182
      %v264 = vunpack.c.l.b16 %v183
      %v265 = vunpack.c.l.b16 %v184
      %v266 = vunpack.c.l.b16 %v185
      %v267 = vunpack.c.l.b16 %v186
      %v268 = vunpack.c.l.b16 %v187
      %v269 = vunpack.c.l.b16 %v188
      %v270 = vunpack.c.l.b16 %v189
      %v271 = vunpack.c.l.b16 %v190
      %v272 = vunpack.c.l.b16 %v191
      %v273 = vunpack.c.l.b16 %v192
      %v274 = vunpack.c.l.b16 %v193
      %v275 = vunpack.c.l.b16 %v194
      %v276 = vunpack.c.l.b16 %v195
      %v277 = vunpack.c.l.b16 %v196
      %v278 = vunpack.c.l.b16 %v197
      %v279 = vunpack.c.l.b16 %v198
      %v280 = vunpack.c.l.b16 %v199
      %v281 = vunpack.c.l.b16 %v200
      %v282 = vunpack.c.l.b16 %v201
      %v283 = vunpack.c.l.b16 %v202
      %v284 = vunpack.c.l.b16 %v203
      %v285 = vunpack.c.l.b16 %v204
      %v286 = vunpack.c.l.b16 %v205
      %v287 = vunpack.c.l.b16 %v206
      %v288 = vunpack.c.l.b16 %v207
      %v289 = vunpack.c.l.b16 %v208
      %v290 = vunpack.c.l.b16 %v209
      %v291 = vunpack.c.l.b16 %v210
      %v292 = vunpack.c.l.b16 %v211
      %v293 = vpack.c.b16 %v262, %v261
      %v294 = vpack.c.b16 %v264, %v263
      %v295 = vpack.c.b16 %v266, %v265
      %v296 = vpack.c.b16 %v268, %v267
      %v297 = vpack.c.b16 %v270, %v269
      %v298 = vpack.c.b16 %v272, %v271
      %v299 = vpack.c.b16 %v274, %v273
      %v300 = vpack.c.b16 %v276, %v275
      %v301 = vpack.c.b16 %v278, %v277
      %v302 = vpack.c.b16 %v280, %v279
      %v303 = vpack.c.b16 %v282, %v281
      %v304 = vpack.c.b16 %v284, %v283
      %v305 = vpack.c.b16 %v286, %v285
      %v306 = vpack.c.b16 %v288, %v287
      %v307 = vpack.c.b16 %v290, %v289
      %v308 = vpack.c.b16 %v292, %v291
      %325 = vmatprep.subr.bf16.mxu0 0
      %326 = vmatpush1.bf16.msra.mxu0 %v293
      %327 = vmatprep.subr.bf16.mxu0 0
      %328 = vmatpush1.bf16.msra.mxu0 %v294
      %329 = vmatprep.subr.bf16.mxu0 0
      %330 = vmatpush1.bf16.msra.mxu0 %v295
      %331 = vmatprep.subr.bf16.mxu0 0
      %332 = vmatpush1.bf16.msra.mxu0 %v296
      %333 = vmatprep.subr.bf16.mxu0 0
      %334 = vmatpush1.bf16.msra.mxu0 %v297
      %335 = vmatprep.subr.bf16.mxu0 0
      %336 = vmatpush1.bf16.msra.mxu0 %v298
      %337 = vmatprep.subr.bf16.mxu0 0
      %338 = vmatpush1.bf16.msra.mxu0 %v299
      %339 = vmatprep.subr.bf16.mxu0 0
      %340 = vmatpush1.bf16.msra.mxu0 %v300
      %341 = vmatprep.subr.bf16.mxu0 0
      %342 = vmatpush1.bf16.msra.mxu0 %v301
      %343 = vmatprep.subr.bf16.mxu0 0
      %344 = vmatpush1.bf16.msra.mxu0 %v302
      %345 = vmatprep.subr.bf16.mxu0 0
      %346 = vmatpush1.bf16.msra.mxu0 %v303
      %347 = vmatprep.subr.bf16.mxu0 0
      %348 = vmatpush1.bf16.msra.mxu0 %v304
      %349 = vmatprep.subr.bf16.mxu0 0
      %350 = vmatpush1.bf16.msra.mxu0 %v305
      %351 = vmatprep.subr.bf16.mxu0 0
      %352 = vmatpush1.bf16.msra.mxu0 %v306
      %353 = vmatprep.subr.bf16.mxu0 0
      %354 = vmatpush1.bf16.msra.mxu0 %v307
      %355 = vmatprep.subr.bf16.mxu0 0
      %356 = vmatpush1.bf16.msra.mxu0 %v308
      %357 = vmatprep.mubr.bf16.mxu0 %v226
      %358 = vmatmul.mubr.bf16.gmra.mrb[0].mxu0 %v225
      %v359 = vpop.f32.mrb[0].mxu0
      %v360 = vadd.f32 %v217, %v359
      %v361 = vpop.f32.mrb[0].mxu0
      %v362 = vpop.f32.mrb[0].mxu0
      %v363 = vadd.f32 %v217, %v362
      %v364 = vpop.f32.mrb[0].mxu0
      %365 = vdwg.mxu0
      %v366 = vmax.f32 %v360, 0.0
      %v367 = vmax.f32 %v363, 0.0
      %368 = vst [vmem:[%s175] sm:$0xff] %v366
      %369 = vst [vmem:[%s175 + $0x8] sm:$0xff] %v367
      %s370 = smul.u32 2, %s14
      %p371 = scmp.lt.s32.totalorder %s370, 3
      %s372 = scalar_select %p371, %s370, 3
      %s373 = smul.addr %s372, 8
      %s374 = scalar_lea.vmem %s3, %s373
      // Predicated region
      $region33: #{fcn_forward.9} parent=31 // pred_check
        %p375 = pneg %p100
      $region34: #{fcn_forward.9} parent=31 // pred_check_branch
        %377 = sbr.rel (%p375) target = $region36
      $region35: #{fcn_forward.9} parent=31 // pred_region
        %s378 = smul.u32 2, %s14
      $region36: #{fcn_forward.9} parent=31 // pred_fallthru
        _
    $region32: #{fcn_forward.9} parent=5 // pred_fallthru
      _
    %p379 = scmp.le.s32.totalorder 2, %s9
    // Predicated region
    $region37: #{fcn_forward.9} parent=5 // pred_check
      %p380 = pneg %p379
    $region38: #{fcn_forward.9} parent=5 // pred_check_branch
      %382 = sbr.rel (%p380) target = $region40
    $region39: #{fcn_forward.9} parent=5 // pred_region
      %s383 = ssub.s32 %s9, 2
      // Predicated region
      $region41: #{fcn_forward.9} parent=39 // pred_check
        %p384 = pneg %p106
      $region42: #{fcn_forward.9} parent=39 // pred_check_branch
        %386 = sbr.rel (%p384) target = $region44
      $region43: #{fcn_forward.9} parent=39 // pred_region
        %s387 = smul.u32 2, %s15
        %p388 = scmp.lt.s32.totalorder %s387, 3
        %s389 = scalar_select %p388, %s387, 3
        %s390 = smul.addr %s389, 8
        %s391 = scalar_lea.vmem %s3, %s390
      $region44: #{fcn_forward.9} parent=39 // pred_fallthru
        _
    $region40: #{fcn_forward.9} parent=5 // pred_fallthru
      _
  $region6: #{fcn_forward.9} parent=0 // loop_footer
    %s13 = sadd.s32 1, %s9
  $region7: #{fcn_forward.9} parent=0 // loop_footer_branch
    %8 = sbr.rel target = $region3
  $region8: #{fcn_forward.9} parent=0 // loop_exit
    _

// kernel: fcn_forward.10
$region0: #{fcn_forward.10}
  #allocation0 [shape = 'u32[]', space=smem, size = 0x4, offset = 0x4, fixed_abs, tag = 'smem constant byte address 0x4 - core index']
  #allocation1 [shape = 'u32[144,128]{1,0:T(1,128)}', space=vmem, size = 0x12000, scoped, tag = 'internal scratch']
  %s0 = inlined_call_operand.vmem [shape: bf16[32,288], index: 0, kind: input, shape index: {}]
  %s1 = inlined_call_operand.vmem [shape: bf16[288,128], index: 1, kind: input, shape index: {}]
  %s2 = inlined_call_operand.vmem [shape: f32[1,128], index: 2, kind: input, shape index: {}]
  %s3 = inlined_call_operand.vmem [shape: f32[32,128], index: 3, kind: output, shape index: {}]
  %s4 = sld [smem:[#allocation0]]
  $region45: #{fcn_forward.10} parent=0
    _
  %s6 = ssub.s32 1, %s4
  %s7 = scalar_select 0, %s6, %s4
  loop: start=0, step=1, limit=4
  $region2: #{fcn_forward.10} parent=0 // loop_pre_header
    _
  $region3: #{fcn_forward.10} parent=0 // loop_header
    %s9 = sphi 0, %s13
    %p10 = scmp.ge.s32.totalorder %s9, 4
    %s19 = sphi 0, %s21
    %s22 = sphi 0, %s19
    %s23 = sphi 0, %s22
    %s39 = sphi 0, %s23
    %s43 = sphi 0, %s43
    %s45 = sphi 0, %s43
    %s46 = sphi 0, %s45
    %s60 = sphi 0, %s46
    %s64 = sphi 0, %s64
    %s66 = sphi 0, %s64
    %s67 = sphi 0, %s66
    %s81 = sphi 0, %s67
    %s87 = sphi 0, %s89
    %s90 = sphi 0, %s87
    %s91 = sphi 0, %s90
    %s107 = sphi 0, %s91
  $region4: #{fcn_forward.10} parent=0 // loop_header_branch
    %12 = sbr.rel (%p10) target = $region8
  $region5: #{fcn_forward.10} parent=0 // loop_body
    %s14 = ssub.s32 %s9, 1
    %s15 = ssub.s32 %s9, 2
    %s16 = sadd.s32 %s9, 1
    %s17 = ssub.s32 %s9, %s16
    %p18 = scmp.eq.s32.totalorder %s17, 0
    %s20 = sadd.s32 %s19, 1
    %s21 = scalar_select %p18, %s19, %s20
    %p24 = pneg %p18
    %p25 = scmp.eq.s32.totalorder %s9, 1
    %p26 = por %p24, %p25
    %p27 = scmp.ne.s32.totalorder %s19, %s22
    %p28 = scmp.eq.s32.totalorder %s9, 0
    %p29 = por %p27, %p28
    %p30 = scmp.ne.s32.totalorder %s19, %s22
    %p31 = scmp.eq.s32.totalorder %s14, 1
    %p32 = por %p30, %p31
    %p33 = scmp.ne.s32.totalorder %s22, %s23
    %p34 = scmp.eq.s32.totalorder %s14, 0
    %p35 = por %p33, %p34
    %p36 = scmp.ne.s32.totalorder %s22, %s23
    %p37 = scmp.eq.s32.totalorder %s15, 1
    %p38 = por %p36, %p37
    %p40 = scmp.ne.s32.totalorder %s23, %s39
    %p41 = scmp.eq.s32.totalorder %s15, 0
    %p42 = por %p40, %p41
    %s44 = sadd.s32 %s43, 1
    %p47 = scmp.eq.s32.totalorder %s9, 1
    %p48 = scmp.ne.s32.totalorder %s43, %s45
    %p49 = scmp.eq.s32.totalorder %s9, 0
    %p50 = por %p48, %p49
    %p51 = scmp.ne.s32.totalorder %s43, %s45
    %p52 = scmp.eq.s32.totalorder %s14, 1
    %p53 = por %p51, %p52
    %p54 = scmp.ne.s32.totalorder %s45, %s46
    %p55 = scmp.eq.s32.totalorder %s14, 0
    %p56 = por %p54, %p55
    %p57 = scmp.ne.s32.totalorder %s45, %s46
    %p58 = scmp.eq.s32.totalorder %s15, 1
    %p59 = por %p57, %p58
    %p61 = scmp.ne.s32.totalorder %s46, %s60
    %p62 = scmp.eq.s32.totalorder %s15, 0
    %p63 = por %p61, %p62
    %s65 = sadd.s32 %s64, 1
    %p68 = scmp.eq.s32.totalorder %s9, 1
    %p69 = scmp.ne.s32.totalorder %s64, %s66
    %p70 = scmp.eq.s32.totalorder %s9, 0
    %p71 = por %p69, %p70
    %p72 = scmp.ne.s32.totalorder %s64, %s66
    %p73 = scmp.eq.s32.totalorder %s14, 1
    %p74 = por %p72, %p73
    %p75 = scmp.ne.s32.totalorder %s66, %s67
    %p76 = scmp.eq.s32.totalorder %s14, 0
    %p77 = por %p75, %p76
    %p78 = scmp.ne.s32.totalorder %s66, %s67
    %p79 = scmp.eq.s32.totalorder %s15, 1
    %p80 = por %p78, %p79
    %p82 = scmp.ne.s32.totalorder %s67, %s81
    %p83 = scmp.eq.s32.totalorder %s15, 0
    %p84 = por %p82, %p83
    %s85 = ssub.s32 %s9, %s16
    %p86 = scmp.eq.s32.totalorder %s85, 0
    %s88 = sadd.s32 %s87, 1
    %s89 = scalar_select %p86, %s87, %s88
    %p92 = pneg %p86
    %p93 = scmp.eq.s32.totalorder %s9, 1
    %p94 = por %p92, %p93
    %p95 = scmp.ne.s32.totalorder %s87, %s90
    %p96 = scmp.eq.s32.totalorder %s9, 0
    %p97 = por %p95, %p96
    %p98 = scmp.ne.s32.totalorder %s87, %s90
    %p99 = scmp.eq.s32.totalorder %s14, 1
    %p100 = por %p98, %p99
    %p101 = scmp.ne.s32.totalorder %s90, %s91
    %p102 = scmp.eq.s32.totalorder %s14, 0
    %p103 = por %p101, %p102
    %p104 = scmp.ne.s32.totalorder %s90, %s91
    %p105 = scmp.eq.s32.totalorder %s15, 1
    %p106 = por %p104, %p105
    %p108 = scmp.ne.s32.totalorder %s91, %s107
    %p109 = scmp.eq.s32.totalorder %s15, 0
    %p110 = por %p108, %p109
    %p111 = scmp.le.s32.totalorder 1, %s9
    %p112 = scmp.lt.s32.totalorder %s9, 3
    %p113 = pnand %p111, %p112
    %p114 = pneg %p113
    // Predicated region
    $region9: #{fcn_forward.10} parent=5 // pred_check
      _
    $region10: #{fcn_forward.10} parent=5 // pred_check_branch
      %116 = sbr.rel (%p113) target = $region12
    $region11: #{fcn_forward.10} parent=5 // pred_region
      %s117 = ssub.s32 %s9, 1
      // Predicated region
      $region13: #{fcn_forward.10} parent=11 // pred_check
        %p118 = pneg %p56
      $region14: #{fcn_forward.10} parent=11 // pred_check_branch
        %120 = sbr.rel (%p118) target = $region16
      $region15: #{fcn_forward.10} parent=11 // pred_region
        _
      $region16: #{fcn_forward.10} parent=11 // pred_fallthru
        _
      // Predicated region
      $region17: #{fcn_forward.10} parent=11 // pred_check
        %p121 = pneg %p77
      $region18: #{fcn_forward.10} parent=11 // pred_check_branch
        %123 = sbr.rel (%p121) target = $region20
      $region19: #{fcn_forward.10} parent=11 // pred_region
        _
      $region20: #{fcn_forward.10} parent=11 // pred_fallthru
        _
    $region12: #{fcn_forward.10} parent=5 // pred_fallthru
      _
    %p124 = scmp.lt.s32.totalorder %s9, 2
    // Predicated region
    $region21: #{fcn_forward.10} parent=5 // pred_check
      %p125 = pneg %p124
    $region22: #{fcn_forward.10} parent=5 // pred_check_branch
      %127 = sbr.rel (%p125) target = $region24
    $region23: #{fcn_forward.10} parent=5 // pred_region
      // Predicated region
      $region25: #{fcn_forward.10} parent=23 // pred_check
        %p128 = pneg %p29
      $region26: #{fcn_forward.10} parent=23 // pred_check_branch
        %130 = sbr.rel (%p128) target = $region28
      $region27: #{fcn_forward.10} parent=23 // pred_region
        %s131 = smul.u32 2, %s9
        %p132 = scmp.lt.s32.totalorder %s131, 3
        %s133 = scalar_select %p132, %s131, 3
        %s134 = smul.addr %s133, 3
        %s135 = smul.addr %s134, 4
        %s136 = scalar_lea.vmem %s0, %s135
        %s137 = smul.u32 2, %s9
      $region28: #{fcn_forward.10} parent=23 // pred_fallthru
        _
    $region24: #{fcn_forward.10} parent=5 // pred_fallthru
      _
    %p138 = scmp.le.s32.totalorder 1, %s9
    %p139 = scmp.lt.s32.totalorder %s9, 3
    %p140 = pnand %p138, %p139
    %p141 = pneg %p140
    // Predicated region
    $region29: #{fcn_forward.10} parent=5 // pred_check
      _
    $region30: #{fcn_forward.10} parent=5 // pred_check_branch
      %143 = sbr.rel (%p140) target = $region32
    $region31: #{fcn_forward.10} parent=5 // pred_region
      %s144 = ssub.s32 %s9, 1
      %s145 = smul.u32 2, %s14
      %p146 = scmp.lt.s32.totalorder %s145, 3
      %s147 = scalar_select %p146, %s145, 3
      %s148 = smul.addr %s147, 3
      %s149 = smul.addr %s148, 4
      %s150 = scalar_lea.vmem %s0, %s149
      %p151 = pneg %p35
      %p152 = pneg %p32
      %p153 = pneg %p56
      %p154 = pneg %p53
      %p155 = pneg %p77
      %p156 = pneg %p74
      %p157 = pneg %p103
      %p158 = pneg %p100
      %s159 = smul.u32 2, %s14
      %p160 = scmp.lt.s32.totalorder %s159, 3
      %s161 = scalar_select %p160, %s159, 3
      %s162 = smul.addr %s161, 8
      %s163 = scalar_lea.vmem %s3, %s162
      %s164 = smul.u32 2, %s14
      %p165 = scmp.lt.s32.totalorder %s164, 3
      %s166 = scalar_select %p165, %s164, 3
      %s167 = smul.addr %s166, 3
      %s168 = smul.addr %s167, 4
      %s169 = scalar_lea.vmem %s0, %s168
      %s170 = smul.u32 2, %s14
      %s171 = smul.u32 2, %s14
      %p172 = scmp.lt.s32.totalorder %s171, 3
      %s173 = scalar_select %p172, %s171, 3
      %s174 = smul.addr %s173, 8
      %s175 = scalar_lea.vmem %s3, %s174
      %s176 = smul.u32 2, %s14
      %v178 = vld [vmem:[%s169] sm:$0xff]
      %v179 = vld [vmem:[%s169 + $0x8] sm:$0xf]
      %v180 = vld [vmem:[%s169 + $0xc] sm:$0xff]
      %v181 = vld [vmem:[%s169 + $0x14] sm:$0xf]
      %v182 = vld [vmem:[%s1] sm:$0xf]
      %v183 = vld [vmem:[%s1 + $0x4] sm:$0xf]
      %v184 = vld [vmem:[%s1 + $0x8] sm:$0xf]
      %v185 = vld [vmem:[%s1 + $0xc] sm:$0xf]
      %v186 = vld [vmem:[%s1 + $0x10] sm:$0xf]
      %v187 = vld [vmem:[%s1 + $0x14] sm:$0xf]
      %v188 = vld [vmem:[%s1 + $0x18] sm:$0xf]
      %v189 = vld [vmem:[%s1 + $0x1c] sm:$0xf]
      %v190 = vld [vmem:[%s1 + $0x20] sm:$0xf]
      %v191 = vld [vmem:[%s1 + $0x24] sm:$0xf]
      %v192 = vld [vmem:[%s1 + $0x28] sm:$0xf]
      %v193 = vld [vmem:[%s1 + $0x2c] sm:$0xf]
      %v194 = vld [vmem:[%s1 + $0x30] sm:$0xf]
      %v195 = vld [vmem:[%s1 + $0x34] sm:$0xf]
      %v196 = vld [vmem:[%s1 + $0x38] sm:$0xf]
      %v197 = vld [vmem:[%s1 + $0x3c] sm:$0xf]
      %v198 = vld [vmem:[%s1 + $0x40] sm:$0xf]
      %v199 = vld [vmem:[%s1 + $0x44] sm:$0xf]
      %v200 = vld [vmem:[%s1 + $0x48] sm:$0xf]
      %v201 = vld [vmem:[%s1 + $0x4c] sm:$0xf]
      %v202 = vld [vmem:[%s1 + $0x50] sm:$0xf]
      %v203 = vld [vmem:[%s1 + $0x54] sm:$0xf]
      %v204 = vld [vmem:[%s1 + $0x58] sm:$0xf]
      %v205 = vld [vmem:[%s1 + $0x5c] sm:$0xf]
      %v206 = vld [vmem:[%s1 + $0x60] sm:$0xf]
      %v207 = vld [vmem:[%s1 + $0x64] sm:$0xf]
      %v208 = vld [vmem:[%s1 + $0x68] sm:$0xf]
      %v209 = vld [vmem:[%s1 + $0x6c] sm:$0xf]
      %v210 = vld [vmem:[%s1 + $0x70] sm:$0xf]
      %v211 = vld [vmem:[%s1 + $0x74] sm:$0xf]
      %v212 = vld [vmem:[%s1 + $0x78] sm:$0xf]
      %v213 = vld [vmem:[%s1 + $0x7c] sm:$0xf]
      %v214 = vld [vmem:[%s1 + $0x80] sm:$0xf]
      %v215 = vld [vmem:[%s1 + $0x84] sm:$0xf]
      %v216 = vld [vmem:[%s1 + $0x88] sm:$0xf]
      %v217 = vld [vmem:[%s1 + $0x8c] sm:$0xf]
      %v218 = vld [vmem:[%s2] sm:$0x1]
      %v220 = vlaneseq
      %v221 = vshrl.u32 %v220, 7
      %v222 = vsub.s32 0, %v221
      %v223 = vrot.slane %v218, %v222
      %v229 = vunpack.c.l.b16 %v178
      %v230 = vunpack.c.h.b16 %v178
      %v231 = vunpack.c.l.b16 %v179
      %v232 = vunpack.c.l.b16 %v180
      %v233 = vunpack.c.h.b16 %v180
      %v234 = vunpack.c.l.b16 %v181
      %v235 = vpack.c.b16 %v232, %v229
      %v236 = vpack.c.b16 %v233, %v230
      %v237 = vpack.c.b16 %v234, %v231
      %v276 = vunpack.c.l.b16 %v182
      %v277 = vunpack.c.l.b16 %v183
      %v278 = vunpack.c.l.b16 %v184
      %v279 = vunpack.c.l.b16 %v185
      %v280 = vunpack.c.l.b16 %v186
      %v281 = vunpack.c.l.b16 %v187
      %v282 = vunpack.c.l.b16 %v188
      %v283 = vunpack.c.l.b16 %v189
      %v284 = vunpack.c.l.b16 %v190
      %v285 = vunpack.c.l.b16 %v191
      %v286 = vunpack.c.l.b16 %v192
      %v287 = vunpack.c.l.b16 %v193
      %v288 = vunpack.c.l.b16 %v194
      %v289 = vunpack.c.l.b16 %v195
      %v290 = vunpack.c.l.b16 %v196
      %v291 = vunpack.c.l.b16 %v197
      %v292 = vunpack.c.l.b16 %v198
      %v293 = vunpack.c.l.b16 %v199
      %v294 = vunpack.c.l.b16 %v200
      %v295 = vunpack.c.l.b16 %v201
      %v296 = vunpack.c.l.b16 %v202
      %v297 = vunpack.c.l.b16 %v203
      %v298 = vunpack.c.l.b16 %v204
      %v299 = vunpack.c.l.b16 %v205
      %v300 = vunpack.c.l.b16 %v206
      %v301 = vunpack.c.l.b16 %v207
      %v302 = vunpack.c.l.b16 %v208
      %v303 = vunpack.c.l.b16 %v209
      %v304 = vunpack.c.l.b16 %v210
      %v305 = vunpack.c.l.b16 %v211
      %v306 = vunpack.c.l.b16 %v212
      %v307 = vunpack.c.l.b16 %v213
      %v308 = vunpack.c.l.b16 %v214
      %v309 = vunpack.c.l.b16 %v215
      %v310 = vunpack.c.l.b16 %v216
      %v311 = vunpack.c.l.b16 %v217
      %v312 = vpack.c.b16 %v277, %v276
      %v313 = vpack.c.b16 %v279, %v278
      %v314 = vpack.c.b16 %v281, %v280
      %v315 = vpack.c.b16 %v283, %v282
      %v316 = vpack.c.b16 %v285, %v284
      %v317 = vpack.c.b16 %v287, %v286
      %v318 = vpack.c.b16 %v289, %v288
      %v319 = vpack.c.b16 %v291, %v290
      %v320 = vpack.c.b16 %v293, %v292
      %v321 = vpack.c.b16 %v295, %v294
      %v322 = vpack.c.b16 %v297, %v296
      %v323 = vpack.c.b16 %v299, %v298
      %v324 = vpack.c.b16 %v301, %v300
      %v325 = vpack.c.b16 %v303, %v302
      %v326 = vpack.c.b16 %v305, %v304
      %v327 = vpack.c.b16 %v307, %v306
      %v328 = vpack.c.b16 %v309, %v308
      %v329 = vpack.c.b16 %v311, %v310
      %vm348 = vcmask 261120
      %v350 = vsel %vm348, %v237, 0
      %352 = vmatprep.subr.bf16.mxu0 0
      %353 = vmatpush1.bf16.msra.mxu0 %v312
      %354 = vmatprep.subr.bf16.mxu0 0
      %355 = vmatpush1.bf16.msra.mxu0 %v313
      %356 = vmatprep.subr.bf16.mxu0 0
      %357 = vmatpush1.bf16.msra.mxu0 %v314
      %358 = vmatprep.subr.bf16.mxu0 0
      %359 = vmatpush1.bf16.msra.mxu0 %v315
      %360 = vmatprep.subr.bf16.mxu0 0
      %361 = vmatpush1.bf16.msra.mxu0 %v316
      %362 = vmatprep.subr.bf16.mxu0 0
      %363 = vmatpush1.bf16.msra.mxu0 %v317
      %364 = vmatprep.subr.bf16.mxu0 0
      %365 = vmatpush1.bf16.msra.mxu0 %v318
      %366 = vmatprep.subr.bf16.mxu0 0
      %367 = vmatpush1.bf16.msra.mxu0 %v319
      %368 = vmatprep.subr.bf16.mxu0 0
      %369 = vmatpush1.bf16.msra.mxu0 %v320
      %370 = vmatprep.subr.bf16.mxu0 0
      %371 = vmatpush1.bf16.msra.mxu0 %v321
      %372 = vmatprep.subr.bf16.mxu0 0
      %373 = vmatpush1.bf16.msra.mxu0 %v322
      %374 = vmatprep.subr.bf16.mxu0 0
      %375 = vmatpush1.bf16.msra.mxu0 %v323
      %376 = vmatprep.subr.bf16.mxu0 0
      %377 = vmatpush1.bf16.msra.mxu0 %v324
      %378 = vmatprep.subr.bf16.mxu0 0
      %379 = vmatpush1.bf16.msra.mxu0 %v325
      %380 = vmatprep.subr.bf16.mxu0 0
      %381 = vmatpush1.bf16.msra.mxu0 %v326
      %382 = vmatprep.subr.bf16.mxu0 0
      %383 = vmatpush1.bf16.msra.mxu0 %v327
      %384 = vmatprep.mubr.bf16.mxu0 %v236
      %385 = vmatmul.mubr.bf16.gmra.mrb[0].mxu0 %v235
      %v386 = vpop.f32.mrb[0].mxu0
      %v387 = vadd.f32 %v223, %v386
      %v388 = vpop.f32.mrb[0].mxu0
      %v389 = vpop.f32.mrb[0].mxu0
      %v390 = vadd.f32 %v223, %v389
      %v391 = vpop.f32.mrb[0].mxu0
      %392 = vdwg.mxu0
      %393 = vmatprep.subr.bf16.mxu0 0
      %394 = vmatpush1.bf16.msra.mxu0 %v328
      %395 = vmatprep.subr.bf16.mxu0 0
      %396 = vmatpush1.bf16.msra.mxu0 %v329
      %397 = vmatprep.subr.bf16.mxu0 0
      %398 = vmatpush1.bf16.msra.mxu0 0
      %399 = vmatprep.subr.bf16.mxu0 0
      %400 = vmatpush1.bf16.msra.mxu0 0
      %401 = vmatprep.subr.bf16.mxu0 0
      %402 = vmatpush1.bf16.msra.mxu0 0
      %403 = vmatprep.subr.bf16.mxu0 0
      %404 = vmatpush1.bf16.msra.mxu0 0
      %405 = vmatprep.subr.bf16.mxu0 0
      %406 = vmatpush1.bf16.msra.mxu0 0
      %407 = vmatprep.subr.bf16.mxu0 0
      %408 = vmatpush1.bf16.msra.mxu0 0
      %409 = vmatprep.subr.bf16.mxu0 0
      %410 = vmatpush1.bf16.msra.mxu0 0
      %411 = vmatprep.subr.bf16.mxu0 0
      %412 = vmatpush1.bf16.msra.mxu0 0
      %413 = vmatprep.subr.bf16.mxu0 0
      %414 = vmatpush1.bf16.msra.mxu0 0
      %415 = vmatprep.subr.bf16.mxu0 0
      %416 = vmatpush1.bf16.msra.mxu0 0
      %417 = vmatprep.subr.bf16.mxu0 0
      %418 = vmatpush1.bf16.msra.mxu0 0
      %419 = vmatprep.subr.bf16.mxu0 0
      %420 = vmatpush1.bf16.msra.mxu0 0
      %421 = vmatprep.subr.bf16.mxu0 0
      %422 = vmatpush1.bf16.msra.mxu0 0
      %423 = vmatprep.subr.bf16.mxu0 0
      %424 = vmatpush1.bf16.msra.mxu0 0
      %425 = vmatprep.mubr.bf16.mxu0 0
      %426 = vmatmul.mubr.bf16.gmra.mrb[0].mxu0 %v350
      %v427 = vpop.f32.mrb[0].mxu0
      %v428 = vadd.f32 %v387, %v427
      %v429 = vpop.f32.mrb[0].mxu0
      %v430 = vpop.f32.mrb[0].mxu0
      %v431 = vadd.f32 %v390, %v430
      %v432 = vpop.f32.mrb[0].mxu0
      %433 = vdwg.mxu0
      %v434 = vmax.f32 %v428, 0.0
      %v435 = vmax.f32 %v431, 0.0
      %436 = vst [vmem:[%s175] sm:$0xff] %v434
      %437 = vst [vmem:[%s175 + $0x8] sm:$0xff] %v435
      %s438 = smul.u32 2, %s14
      %p439 = scmp.lt.s32.totalorder %s438, 3
      %s440 = scalar_select %p439, %s438, 3
      %s441 = smul.addr %s440, 8
      %s442 = scalar_lea.vmem %s3, %s441
      // Predicated region
      $region33: #{fcn_forward.10} parent=31 // pred_check
        %p443 = pneg %p100
      $region34: #{fcn_forward.10} parent=31 // pred_check_branch
        %445 = sbr.rel (%p443) target = $region36
      $region35: #{fcn_forward.10} parent=31 // pred_region
        %s446 = smul.u32 2, %s14
      $region36: #{fcn_forward.10} parent=31 // pred_fallthru
        _
    $region32: #{fcn_forward.10} parent=5 // pred_fallthru
      _
    %p447 = scmp.le.s32.totalorder 2, %s9
    // Predicated region
    $region37: #{fcn_forward.10} parent=5 // pred_check
      %p448 = pneg %p447
    $region38: #{fcn_forward.10} parent=5 // pred_check_branch
      %450 = sbr.rel (%p448) target = $region40
    $region39: #{fcn_forward.10} parent=5 // pred_region
      %s451 = ssub.s32 %s9, 2
      // Predicated region
      $region41: #{fcn_forward.10} parent=39 // pred_check
        %p452 = pneg %p106
      $region42: #{fcn_forward.10} parent=39 // pred_check_branch
        %454 = sbr.rel (%p452) target = $region44
      $region43: #{fcn_forward.10} parent=39 // pred_region
        %s455 = smul.u32 2, %s15
        %p456 = scmp.lt.s32.totalorder %s455, 3
        %s457 = scalar_select %p456, %s455, 3
        %s458 = smul.addr %s457, 8
        %s459 = scalar_lea.vmem %s3, %s458
      $region44: #{fcn_forward.10} parent=39 // pred_fallthru
        _
    $region40: #{fcn_forward.10} parent=5 // pred_fallthru
      _
  $region6: #{fcn_forward.10} parent=0 // loop_footer
    %s13 = sadd.s32 1, %s9
  $region7: #{fcn_forward.10} parent=0 // loop_footer_branch
    %8 = sbr.rel target = $region3
  $region8: #{fcn_forward.10} parent=0 // loop_exit
    _

// kernel: fcn_forward.11
$region0: #{fcn_forward.11}
  #allocation0 [shape = 'u32[]', space=smem, size = 0x4, offset = 0x4, fixed_abs, tag = 'smem constant byte address 0x4 - core index']
  #allocation1 [shape = 'u32[144,128]{1,0:T(1,128)}', space=vmem, size = 0x12000, scoped, tag = 'internal scratch']
  %s0 = inlined_call_operand.vmem [shape: bf16[128,288], index: 0, kind: input, shape index: {}]
  %s1 = inlined_call_operand.vmem [shape: bf16[288,128], index: 1, kind: input, shape index: {}]
  %s2 = inlined_call_operand.vmem [shape: f32[1,128], index: 2, kind: input, shape index: {}]
  %s3 = inlined_call_operand.vmem [shape: f32[128,128], index: 3, kind: output, shape index: {}]
  %s4 = sld [smem:[#allocation0]]
  $region45: #{fcn_forward.11} parent=0
    _
  %s6 = ssub.s32 1, %s4
  %s7 = scalar_select 0, %s6, %s4
  loop: start=0, step=1, limit=4
  $region2: #{fcn_forward.11} parent=0 // loop_pre_header
    _
  $region3: #{fcn_forward.11} parent=0 // loop_header
    %s9 = sphi 0, %s13
    %p10 = scmp.ge.s32.totalorder %s9, 4
    %s19 = sphi 0, %s21
    %s22 = sphi 0, %s19
    %s23 = sphi 0, %s22
    %s39 = sphi 0, %s23
    %s43 = sphi 0, %s43
    %s45 = sphi 0, %s43
    %s46 = sphi 0, %s45
    %s60 = sphi 0, %s46
    %s64 = sphi 0, %s64
    %s66 = sphi 0, %s64
    %s67 = sphi 0, %s66
    %s81 = sphi 0, %s67
    %s87 = sphi 0, %s89
    %s90 = sphi 0, %s87
    %s91 = sphi 0, %s90
    %s107 = sphi 0, %s91
  $region4: #{fcn_forward.11} parent=0 // loop_header_branch
    %12 = sbr.rel (%p10) target = $region8
  $region5: #{fcn_forward.11} parent=0 // loop_body
    %s14 = ssub.s32 %s9, 1
    %s15 = ssub.s32 %s9, 2
    %s16 = sadd.s32 %s9, 1
    %s17 = ssub.s32 %s9, %s16
    %p18 = scmp.eq.s32.totalorder %s17, 0
    %s20 = sadd.s32 %s19, 1
    %s21 = scalar_select %p18, %s19, %s20
    %p24 = pneg %p18
    %p25 = scmp.eq.s32.totalorder %s9, 1
    %p26 = por %p24, %p25
    %p27 = scmp.ne.s32.totalorder %s19, %s22
    %p28 = scmp.eq.s32.totalorder %s9, 0
    %p29 = por %p27, %p28
    %p30 = scmp.ne.s32.totalorder %s19, %s22
    %p31 = scmp.eq.s32.totalorder %s14, 1
    %p32 = por %p30, %p31
    %p33 = scmp.ne.s32.totalorder %s22, %s23
    %p34 = scmp.eq.s32.totalorder %s14, 0
    %p35 = por %p33, %p34
    %p36 = scmp.ne.s32.totalorder %s22, %s23
    %p37 = scmp.eq.s32.totalorder %s15, 1
    %p38 = por %p36, %p37
    %p40 = scmp.ne.s32.totalorder %s23, %s39
    %p41 = scmp.eq.s32.totalorder %s15, 0
    %p42 = por %p40, %p41
    %s44 = sadd.s32 %s43, 1
    %p47 = scmp.eq.s32.totalorder %s9, 1
    %p48 = scmp.ne.s32.totalorder %s43, %s45
    %p49 = scmp.eq.s32.totalorder %s9, 0
    %p50 = por %p48, %p49
    %p51 = scmp.ne.s32.totalorder %s43, %s45
    %p52 = scmp.eq.s32.totalorder %s14, 1
    %p53 = por %p51, %p52
    %p54 = scmp.ne.s32.totalorder %s45, %s46
    %p55 = scmp.eq.s32.totalorder %s14, 0
    %p56 = por %p54, %p55
    %p57 = scmp.ne.s32.totalorder %s45, %s46
    %p58 = scmp.eq.s32.totalorder %s15, 1
    %p59 = por %p57, %p58
    %p61 = scmp.ne.s32.totalorder %s46, %s60
    %p62 = scmp.eq.s32.totalorder %s15, 0
    %p63 = por %p61, %p62
    %s65 = sadd.s32 %s64, 1
    %p68 = scmp.eq.s32.totalorder %s9, 1
    %p69 = scmp.ne.s32.totalorder %s64, %s66
    %p70 = scmp.eq.s32.totalorder %s9, 0
    %p71 = por %p69, %p70
    %p72 = scmp.ne.s32.totalorder %s64, %s66
    %p73 = scmp.eq.s32.totalorder %s14, 1
    %p74 = por %p72, %p73
    %p75 = scmp.ne.s32.totalorder %s66, %s67
    %p76 = scmp.eq.s32.totalorder %s14, 0
    %p77 = por %p75, %p76
    %p78 = scmp.ne.s32.totalorder %s66, %s67
    %p79 = scmp.eq.s32.totalorder %s15, 1
    %p80 = por %p78, %p79
    %p82 = scmp.ne.s32.totalorder %s67, %s81
    %p83 = scmp.eq.s32.totalorder %s15, 0
    %p84 = por %p82, %p83
    %s85 = ssub.s32 %s9, %s16
    %p86 = scmp.eq.s32.totalorder %s85, 0
    %s88 = sadd.s32 %s87, 1
    %s89 = scalar_select %p86, %s87, %s88
    %p92 = pneg %p86
    %p93 = scmp.eq.s32.totalorder %s9, 1
    %p94 = por %p92, %p93
    %p95 = scmp.ne.s32.totalorder %s87, %s90
    %p96 = scmp.eq.s32.totalorder %s9, 0
    %p97 = por %p95, %p96
    %p98 = scmp.ne.s32.totalorder %s87, %s90
    %p99 = scmp.eq.s32.totalorder %s14, 1
    %p100 = por %p98, %p99
    %p101 = scmp.ne.s32.totalorder %s90, %s91
    %p102 = scmp.eq.s32.totalorder %s14, 0
    %p103 = por %p101, %p102
    %p104 = scmp.ne.s32.totalorder %s90, %s91
    %p105 = scmp.eq.s32.totalorder %s15, 1
    %p106 = por %p104, %p105
    %p108 = scmp.ne.s32.totalorder %s91, %s107
    %p109 = scmp.eq.s32.totalorder %s15, 0
    %p110 = por %p108, %p109
    %p111 = scmp.le.s32.totalorder 1, %s9
    %p112 = scmp.lt.s32.totalorder %s9, 3
    %p113 = pnand %p111, %p112
    %p114 = pneg %p113
    // Predicated region
    $region9: #{fcn_forward.11} parent=5 // pred_check
      _
    $region10: #{fcn_forward.11} parent=5 // pred_check_branch
      %116 = sbr.rel (%p113) target = $region12
    $region11: #{fcn_forward.11} parent=5 // pred_region
      %s117 = ssub.s32 %s9, 1
      // Predicated region
      $region13: #{fcn_forward.11} parent=11 // pred_check
        %p118 = pneg %p56
      $region14: #{fcn_forward.11} parent=11 // pred_check_branch
        %120 = sbr.rel (%p118) target = $region16
      $region15: #{fcn_forward.11} parent=11 // pred_region
        _
      $region16: #{fcn_forward.11} parent=11 // pred_fallthru
        _
      // Predicated region
      $region17: #{fcn_forward.11} parent=11 // pred_check
        %p121 = pneg %p77
      $region18: #{fcn_forward.11} parent=11 // pred_check_branch
        %123 = sbr.rel (%p121) target = $region20
      $region19: #{fcn_forward.11} parent=11 // pred_region
        _
      $region20: #{fcn_forward.11} parent=11 // pred_fallthru
        _
    $region12: #{fcn_forward.11} parent=5 // pred_fallthru
      _
    %p124 = scmp.lt.s32.totalorder %s9, 2
    // Predicated region
    $region21: #{fcn_forward.11} parent=5 // pred_check
      %p125 = pneg %p124
    $region22: #{fcn_forward.11} parent=5 // pred_check_branch
      %127 = sbr.rel (%p125) target = $region24
    $region23: #{fcn_forward.11} parent=5 // pred_region
      // Predicated region
      $region25: #{fcn_forward.11} parent=23 // pred_check
        %p128 = pneg %p29
      $region26: #{fcn_forward.11} parent=23 // pred_check_branch
        %130 = sbr.rel (%p128) target = $region28
      $region27: #{fcn_forward.11} parent=23 // pred_region
        %s131 = smul.u32 8, %s9
        %p132 = scmp.lt.s32.totalorder %s131, 15
        %s133 = scalar_select %p132, %s131, 15
        %s134 = smul.addr %s133, 3
        %s135 = smul.addr %s134, 4
        %s136 = scalar_lea.vmem %s0, %s135
        %s137 = smul.u32 8, %s9
      $region28: #{fcn_forward.11} parent=23 // pred_fallthru
        _
    $region24: #{fcn_forward.11} parent=5 // pred_fallthru
      _
    %p138 = scmp.le.s32.totalorder 1, %s9
    %p139 = scmp.lt.s32.totalorder %s9, 3
    %p140 = pnand %p138, %p139
    %p141 = pneg %p140
    // Predicated region
    $region29: #{fcn_forward.11} parent=5 // pred_check
      _
    $region30: #{fcn_forward.11} parent=5 // pred_check_branch
      %143 = sbr.rel (%p140) target = $region32
    $region31: #{fcn_forward.11} parent=5 // pred_region
      %s144 = ssub.s32 %s9, 1
      %s145 = smul.u32 8, %s14
      %p146 = scmp.lt.s32.totalorder %s145, 15
      %s147 = scalar_select %p146, %s145, 15
      %s148 = smul.addr %s147, 3
      %s149 = smul.addr %s148, 4
      %s150 = scalar_lea.vmem %s0, %s149
      %p151 = pneg %p35
      %p152 = pneg %p32
      %p153 = pneg %p56
      %p154 = pneg %p53
      %p155 = pneg %p77
      %p156 = pneg %p74
      %p157 = pneg %p103
      %p158 = pneg %p100
      %s159 = smul.u32 8, %s14
      %p160 = scmp.lt.s32.totalorder %s159, 15
      %s161 = scalar_select %p160, %s159, 15
      %s162 = smul.addr %s161, 8
      %s163 = scalar_lea.vmem %s3, %s162
      %s164 = smul.u32 8, %s14
      %p165 = scmp.lt.s32.totalorder %s164, 15
      %s166 = scalar_select %p165, %s164, 15
      %s167 = smul.addr %s166, 3
      %s168 = smul.addr %s167, 4
      %s169 = scalar_lea.vmem %s0, %s168
      %s170 = smul.u32 8, %s14
      %s171 = smul.u32 8, %s14
      %p172 = scmp.lt.s32.totalorder %s171, 15
      %s173 = scalar_select %p172, %s171, 15
      %s174 = smul.addr %s173, 8
      %s175 = scalar_lea.vmem %s3, %s174
      %s176 = smul.u32 8, %s14
      %v178 = vld [vmem:[%s169] sm:$0xff]
      %v179 = vld [vmem:[%s169 + $0x8] sm:$0xf]
      %v180 = vld [vmem:[%s169 + $0xc] sm:$0xff]
      %v181 = vld [vmem:[%s169 + $0x14] sm:$0xf]
      %v182 = vld [vmem:[%s169 + $0x18] sm:$0xff]
      %v183 = vld [vmem:[%s169 + $0x20] sm:$0xf]
      %v184 = vld [vmem:[%s169 + $0x24] sm:$0xff]
      %v185 = vld [vmem:[%s169 + $0x2c] sm:$0xf]
      %v186 = vld [vmem:[%s169 + $0x30] sm:$0xff]
      %v187 = vld [vmem:[%s169 + $0x38] sm:$0xf]
      %v188 = vld [vmem:[%s169 + $0x3c] sm:$0xff]
      %v189 = vld [vmem:[%s169 + $0x44] sm:$0xf]
      %v190 = vld [vmem:[%s169 + $0x48] sm:$0xff]
      %v191 = vld [vmem:[%s169 + $0x50] sm:$0xf]
      %v192 = vld [vmem:[%s169 + $0x54] sm:$0xff]
      %v193 = vld [vmem:[%s169 + $0x5c] sm:$0xf]
      %v194 = vld [vmem:[%s1] sm:$0xf]
      %v195 = vld [vmem:[%s1 + $0x4] sm:$0xf]
      %v196 = vld [vmem:[%s1 + $0x8] sm:$0xf]
      %v197 = vld [vmem:[%s1 + $0xc] sm:$0xf]
      %v198 = vld [vmem:[%s1 + $0x10] sm:$0xf]
      %v199 = vld [vmem:[%s1 + $0x14] sm:$0xf]
      %v200 = vld [vmem:[%s1 + $0x18] sm:$0xf]
      %v201 = vld [vmem:[%s1 + $0x1c] sm:$0xf]
      %v202 = vld [vmem:[%s1 + $0x20] sm:$0xf]
      %v203 = vld [vmem:[%s1 + $0x24] sm:$0xf]
      %v204 = vld [vmem:[%s1 + $0x28] sm:$0xf]
      %v205 = vld [vmem:[%s1 + $0x2c] sm:$0xf]
      %v206 = vld [vmem:[%s1 + $0x30] sm:$0xf]
      %v207 = vld [vmem:[%s1 + $0x34] sm:$0xf]
      %v208 = vld [vmem:[%s1 + $0x38] sm:$0xf]
      %v209 = vld [vmem:[%s1 + $0x3c] sm:$0xf]
      %v210 = vld [vmem:[%s1 + $0x40] sm:$0xf]
      %v211 = vld [vmem:[%s1 + $0x44] sm:$0xf]
      %v212 = vld [vmem:[%s1 + $0x48] sm:$0xf]
      %v213 = vld [vmem:[%s1 + $0x4c] sm:$0xf]
      %v214 = vld [vmem:[%s1 + $0x50] sm:$0xf]
      %v215 = vld [vmem:[%s1 + $0x54] sm:$0xf]
      %v216 = vld [vmem:[%s1 + $0x58] sm:$0xf]
      %v217 = vld [vmem:[%s1 + $0x5c] sm:$0xf]
      %v218 = vld [vmem:[%s1 + $0x60] sm:$0xf]
      %v219 = vld [vmem:[%s1 + $0x64] sm:$0xf]
      %v220 = vld [vmem:[%s1 + $0x68] sm:$0xf]
      %v221 = vld [vmem:[%s1 + $0x6c] sm:$0xf]
      %v222 = vld [vmem:[%s1 + $0x70] sm:$0xf]
      %v223 = vld [vmem:[%s1 + $0x74] sm:$0xf]
      %v224 = vld [vmem:[%s1 + $0x78] sm:$0xf]
      %v225 = vld [vmem:[%s1 + $0x7c] sm:$0xf]
      %v226 = vld [vmem:[%s1 + $0x80] sm:$0xf]
      %v227 = vld [vmem:[%s1 + $0x84] sm:$0xf]
      %v228 = vld [vmem:[%s1 + $0x88] sm:$0xf]
      %v229 = vld [vmem:[%s1 + $0x8c] sm:$0xf]
      %v230 = vld [vmem:[%s2] sm:$0x1]
      %v232 = vlaneseq
      %v233 = vshrl.u32 %v232, 7
      %v234 = vsub.s32 0, %v233
      %v235 = vrot.slane %v230, %v234
      %v253 = vunpack.c.l.b16 %v178
      %v254 = vunpack.c.h.b16 %v178
      %v255 = vunpack.c.l.b16 %v179
      %v256 = vunpack.c.l.b16 %v180
      %v257 = vunpack.c.h.b16 %v180
      %v258 = vunpack.c.l.b16 %v181
      %v259 = vunpack.c.l.b16 %v182
      %v260 = vunpack.c.h.b16 %v182
      %v261 = vunpack.c.l.b16 %v183
      %v262 = vunpack.c.l.b16 %v184
      %v263 = vunpack.c.h.b16 %v184
      %v264 = vunpack.c.l.b16 %v185
      %v265 = vunpack.c.l.b16 %v186
      %v266 = vunpack.c.h.b16 %v186
      %v267 = vunpack.c.l.b16 %v187
      %v268 = vunpack.c.l.b16 %v188
      %v269 = vunpack.c.h.b16 %v188
      %v270 = vunpack.c.l.b16 %v189
      %v271 = vunpack.c.l.b16 %v190
      %v272 = vunpack.c.h.b16 %v190
      %v273 = vunpack.c.l.b16 %v191
      %v274 = vunpack.c.l.b16 %v192
      %v275 = vunpack.c.h.b16 %v192
      %v276 = vunpack.c.l.b16 %v193
      %v277 = vpack.c.b16 %v256, %v253
      %v278 = vpack.c.b16 %v257, %v254
      %v279 = vpack.c.b16 %v258, %v255
      %v280 = vpack.c.b16 %v262, %v259
      %v281 = vpack.c.b16 %v263, %v260
      %v282 = vpack.c.b16 %v264, %v261
      %v283 = vpack.c.b16 %v268, %v265
      %v284 = vpack.c.b16 %v269, %v266
      %v285 = vpack.c.b16 %v270, %v267
      %v286 = vpack.c.b16 %v274, %v271
      %v287 = vpack.c.b16 %v275, %v272
      %v288 = vpack.c.b16 %v276, %v273
      %v333 = vunpack.c.l.b16 %v194
      %v334 = vunpack.c.l.b16 %v195
      %v335 = vunpack.c.l.b16 %v196
      %v336 = vunpack.c.l.b16 %v197
      %v337 = vunpack.c.l.b16 %v198
      %v338 = vunpack.c.l.b16 %v199
      %v339 = vunpack.c.l.b16 %v200
      %v340 = vunpack.c.l.b16 %v201
      %v341 = vunpack.c.l.b16 %v202
      %v342 = vunpack.c.l.b16 %v203
      %v343 = vunpack.c.l.b16 %v204
      %v344 = vunpack.c.l.b16 %v205
      %v345 = vunpack.c.l.b16 %v206
      %v346 = vunpack.c.l.b16 %v207
      %v347 = vunpack.c.l.b16 %v208
      %v348 = vunpack.c.l.b16 %v209
      %v349 = vunpack.c.l.b16 %v210
      %v350 = vunpack.c.l.b16 %v211
      %v351 = vunpack.c.l.b16 %v212
      %v352 = vunpack.c.l.b16 %v213
      %v353 = vunpack.c.l.b16 %v214
      %v354 = vunpack.c.l.b16 %v215
      %v355 = vunpack.c.l.b16 %v216
      %v356 = vunpack.c.l.b16 %v217
      %v357 = vunpack.c.l.b16 %v218
      %v358 = vunpack.c.l.b16 %v219
      %v359 = vunpack.c.l.b16 %v220
      %v360 = vunpack.c.l.b16 %v221
      %v361 = vunpack.c.l.b16 %v222
      %v362 = vunpack.c.l.b16 %v223
      %v363 = vunpack.c.l.b16 %v224
      %v364 = vunpack.c.l.b16 %v225
      %v365 = vunpack.c.l.b16 %v226
      %v366 = vunpack.c.l.b16 %v227
      %v367 = vunpack.c.l.b16 %v228
      %v368 = vunpack.c.l.b16 %v229
      %v369 = vpack.c.b16 %v334, %v333
      %v370 = vpack.c.b16 %v336, %v335
      %v371 = vpack.c.b16 %v338, %v337
      %v372 = vpack.c.b16 %v340, %v339
      %v373 = vpack.c.b16 %v342, %v341
      %v374 = vpack.c.b16 %v344, %v343
      %v375 = vpack.c.b16 %v346, %v345
      %v376 = vpack.c.b16 %v348, %v347
      %v377 = vpack.c.b16 %v350, %v349
      %v378 = vpack.c.b16 %v352, %v351
      %v379 = vpack.c.b16 %v354, %v353
      %v380 = vpack.c.b16 %v356, %v355
      %v381 = vpack.c.b16 %v358, %v357
      %v382 = vpack.c.b16 %v360, %v359
      %v383 = vpack.c.b16 %v362, %v361
      %v384 = vpack.c.b16 %v364, %v363
      %v385 = vpack.c.b16 %v366, %v365
      %v386 = vpack.c.b16 %v368, %v367
      %vm405 = vcmask 261120
      %v407 = vsel %vm405, %v279, 0
      %v410 = vsel %vm405, %v282, 0
      %v413 = vsel %vm405, %v285, 0
      %v416 = vsel %vm405, %v288, 0
      %418 = vmatprep.subr.bf16.mxu0 0
      %419 = vmatpush1.bf16.msra.mxu0 %v369
      %420 = vmatprep.subr.bf16.mxu0 0
      %421 = vmatpush1.bf16.msra.mxu0 %v370
      %422 = vmatprep.subr.bf16.mxu0 0
      %423 = vmatpush1.bf16.msra.mxu0 %v371
      %424 = vmatprep.subr.bf16.mxu0 0
      %425 = vmatpush1.bf16.msra.mxu0 %v372
      %426 = vmatprep.subr.bf16.mxu0 0
      %427 = vmatpush1.bf16.msra.mxu0 %v373
      %428 = vmatprep.subr.bf16.mxu0 0
      %429 = vmatpush1.bf16.msra.mxu0 %v374
      %430 = vmatprep.subr.bf16.mxu0 0
      %431 = vmatpush1.bf16.msra.mxu0 %v375
      %432 = vmatprep.subr.bf16.mxu0 0
      %433 = vmatpush1.bf16.msra.mxu0 %v376
      %434 = vmatprep.subr.bf16.mxu0 0
      %435 = vmatpush1.bf16.msra.mxu0 %v377
      %436 = vmatprep.subr.bf16.mxu0 0
      %437 = vmatpush1.bf16.msra.mxu0 %v378
      %438 = vmatprep.subr.bf16.mxu0 0
      %439 = vmatpush1.bf16.msra.mxu0 %v379
      %440 = vmatprep.subr.bf16.mxu0 0
      %441 = vmatpush1.bf16.msra.mxu0 %v380
      %442 = vmatprep.subr.bf16.mxu0 0
      %443 = vmatpush1.bf16.msra.mxu0 %v381
      %444 = vmatprep.subr.bf16.mxu0 0
      %445 = vmatpush1.bf16.msra.mxu0 %v382
      %446 = vmatprep.subr.bf16.mxu0 0
      %447 = vmatpush1.bf16.msra.mxu0 %v383
      %448 = vmatprep.subr.bf16.mxu0 0
      %449 = vmatpush1.bf16.msra.mxu0 %v384
      %450 = vmatprep.mubr.bf16.mxu0 %v278
      %451 = vmatmul.mubr.bf16.gmra.mrb[0].mxu0 %v277
      %v452 = vpop.f32.mrb[0].mxu0
      %v453 = vadd.f32 %v235, %v452
      %v454 = vpop.f32.mrb[0].mxu0
      %v455 = vpop.f32.mrb[0].mxu0
      %v456 = vadd.f32 %v235, %v455
      %v457 = vpop.f32.mrb[0].mxu0
      %458 = vmatprep.mubr.bf16.mxu0 %v281
      %459 = vmatmul.mubr.bf16.gmra.mrb[0].mxu0 %v280
      %v460 = vpop.f32.mrb[0].mxu0
      %v461 = vadd.f32 %v235, %v460
      %v462 = vpop.f32.mrb[0].mxu0
      %v463 = vpop.f32.mrb[0].mxu0
      %v464 = vadd.f32 %v235, %v463
      %v465 = vpop.f32.mrb[0].mxu0
      %466 = vmatprep.mubr.bf16.mxu0 %v284
      %467 = vmatmul.mubr.bf16.gmra.mrb[0].mxu0 %v283
      %v468 = vpop.f32.mrb[0].mxu0
      %v469 = vadd.f32 %v235, %v468
      %v470 = vpop.f32.mrb[0].mxu0
      %v471 = vpop.f32.mrb[0].mxu0
      %v472 = vadd.f32 %v235, %v471
      %v473 = vpop.f32.mrb[0].mxu0
      %474 = vmatprep.mubr.bf16.mxu0 %v287
      %475 = vmatmul.mubr.bf16.gmra.mrb[0].mxu0 %v286
      %v476 = vpop.f32.mrb[0].mxu0
      %v477 = vadd.f32 %v235, %v476
      %v478 = vpop.f32.mrb[0].mxu0
      %v479 = vpop.f32.mrb[0].mxu0
      %v480 = vadd.f32 %v235, %v479
      %v481 = vpop.f32.mrb[0].mxu0
      %482 = vdwg.mxu0
      %483 = vmatprep.subr.bf16.mxu0 0
      %484 = vmatpush1.bf16.msra.mxu0 %v385
      %485 = vmatprep.subr.bf16.mxu0 0
      %486 = vmatpush1.bf16.msra.mxu0 %v386
      %487 = vmatprep.subr.bf16.mxu0 0
      %488 = vmatpush1.bf16.msra.mxu0 0
      %489 = vmatprep.subr.bf16.mxu0 0
      %490 = vmatpush1.bf16.msra.mxu0 0
      %491 = vmatprep.subr.bf16.mxu0 0
      %492 = vmatpush1.bf16.msra.mxu0 0
      %493 = vmatprep.subr.bf16.mxu0 0
      %494 = vmatpush1.bf16.msra.mxu0 0
      %495 = vmatprep.subr.bf16.mxu0 0
      %496 = vmatpush1.bf16.msra.mxu0 0
      %497 = vmatprep.subr.bf16.mxu0 0
      %498 = vmatpush1.bf16.msra.mxu0 0
      %499 = vmatprep.subr.bf16.mxu0 0
      %500 = vmatpush1.bf16.msra.mxu0 0
      %501 = vmatprep.subr.bf16.mxu0 0
      %502 = vmatpush1.bf16.msra.mxu0 0
      %503 = vmatprep.subr.bf16.mxu0 0
      %504 = vmatpush1.bf16.msra.mxu0 0
      %505 = vmatprep.subr.bf16.mxu0 0
      %506 = vmatpush1.bf16.msra.mxu0 0
      %507 = vmatprep.subr.bf16.mxu0 0
      %508 = vmatpush1.bf16.msra.mxu0 0
      %509 = vmatprep.subr.bf16.mxu0 0
      %510 = vmatpush1.bf16.msra.mxu0 0
      %511 = vmatprep.subr.bf16.mxu0 0
      %512 = vmatpush1.bf16.msra.mxu0 0
      %513 = vmatprep.subr.bf16.mxu0 0
      %514 = vmatpush1.bf16.msra.mxu0 0
      %515 = vmatprep.mubr.bf16.mxu0 0
      %516 = vmatmul.mubr.bf16.gmra.mrb[0].mxu0 %v407
      %v517 = vpop.f32.mrb[0].mxu0
      %v518 = vadd.f32 %v453, %v517
      %v519 = vpop.f32.mrb[0].mxu0
      %v520 = vpop.f32.mrb[0].mxu0
      %v521 = vadd.f32 %v456, %v520
      %v522 = vpop.f32.mrb[0].mxu0
      %523 = vmatprep.mubr.bf16.mxu0 0
      %524 = vmatmul.mubr.bf16.gmra.mrb[0].mxu0 %v410
      %v525 = vpop.f32.mrb[0].mxu0
      %v526 = vadd.f32 %v461, %v525
      %v527 = vpop.f32.mrb[0].mxu0
      %v528 = vpop.f32.mrb[0].mxu0
      %v529 = vadd.f32 %v464, %v528
      %v530 = vpop.f32.mrb[0].mxu0
      %531 = vmatprep.mubr.bf16.mxu0 0
      %532 = vmatmul.mubr.bf16.gmra.mrb[0].mxu0 %v413
      %v533 = vpop.f32.mrb[0].mxu0
      %v534 = vadd.f32 %v469, %v533
      %v535 = vpop.f32.mrb[0].mxu0
      %v536 = vpop.f32.mrb[0].mxu0
      %v537 = vadd.f32 %v472, %v536
      %v538 = vpop.f32.mrb[0].mxu0
      %539 = vmatprep.mubr.bf16.mxu0 0
      %540 = vmatmul.mubr.bf16.gmra.mrb[0].mxu0 %v416
      %v541 = vpop.f32.mrb[0].mxu0
      %v542 = vadd.f32 %v477, %v541
      %v543 = vpop.f32.mrb[0].mxu0
      %v544 = vpop.f32.mrb[0].mxu0
      %v545 = vadd.f32 %v480, %v544
      %v546 = vpop.f32.mrb[0].mxu0
      %547 = vdwg.mxu0
      %v548 = vmax.f32 %v518, 0.0
      %v549 = vmax.f32 %v521, 0.0
      %v550 = vmax.f32 %v526, 0.0
      %v551 = vmax.f32 %v529, 0.0
      %v552 = vmax.f32 %v534, 0.0
      %v553 = vmax.f32 %v537, 0.0
      %v554 = vmax.f32 %v542, 0.0
      %v555 = vmax.f32 %v545, 0.0
      %556 = vst [vmem:[%s175] sm:$0xff] %v548
      %557 = vst [vmem:[%s175 + $0x8] sm:$0xff] %v549
      %558 = vst [vmem:[%s175 + $0x10] sm:$0xff] %v550
      %559 = vst [vmem:[%s175 + $0x18] sm:$0xff] %v551
      %560 = vst [vmem:[%s175 + $0x20] sm:$0xff] %v552
      %561 = vst [vmem:[%s175 + $0x28] sm:$0xff] %v553
      %562 = vst [vmem:[%s175 + $0x30] sm:$0xff] %v554
      %563 = vst [vmem:[%s175 + $0x38] sm:$0xff] %v555
      %s564 = smul.u32 8, %s14
      %p565 = scmp.lt.s32.totalorder %s564, 15
      %s566 = scalar_select %p565, %s564, 15
      %s567 = smul.addr %s566, 8
      %s568 = scalar_lea.vmem %s3, %s567
      // Predicated region
      $region33: #{fcn_forward.11} parent=31 // pred_check
        %p569 = pneg %p100
      $region34: #{fcn_forward.11} parent=31 // pred_check_branch
        %571 = sbr.rel (%p569) target = $region36
      $region35: #{fcn_forward.11} parent=31 // pred_region
        %s572 = smul.u32 8, %s14
      $region36: #{fcn_forward.11} parent=31 // pred_fallthru
        _
    $region32: #{fcn_forward.11} parent=5 // pred_fallthru
      _
    %p573 = scmp.le.s32.totalorder 2, %s9
    // Predicated region
    $region37: #{fcn_forward.11} parent=5 // pred_check
      %p574 = pneg %p573
    $region38: #{fcn_forward.11} parent=5 // pred_check_branch
      %576 = sbr.rel (%p574) target = $region40
    $region39: #{fcn_forward.11} parent=5 // pred_region
      %s577 = ssub.s32 %s9, 2
      // Predicated region
      $region41: #{fcn_forward.11} parent=39 // pred_check
        %p578 = pneg %p106
      $region42: #{fcn_forward.11} parent=39 // pred_check_branch
        %580 = sbr.rel (%p578) target = $region44
      $region43: #{fcn_forward.11} parent=39 // pred_region
        %s581 = smul.u32 8, %s15
        %p582 = scmp.lt.s32.totalorder %s581, 15
        %s583 = scalar_select %p582, %s581, 15
        %s584 = smul.addr %s583, 8
        %s585 = scalar_lea.vmem %s3, %s584
      $region44: #{fcn_forward.11} parent=39 // pred_fallthru
        _
    $region40: #{fcn_forward.11} parent=5 // pred_fallthru
      _
  $region6: #{fcn_forward.11} parent=0 // loop_footer
    %s13 = sadd.s32 1, %s9
  $region7: #{fcn_forward.11} parent=0 // loop_footer_branch
    %8 = sbr.rel target = $region3
  $region8: #{fcn_forward.11} parent=0 // loop_exit
    _

// kernel: fcn_forward.12
$region0: #{fcn_forward.12}
  #allocation0 [shape = 'u32[]', space=smem, size = 0x4, offset = 0x4, fixed_abs, tag = 'smem constant byte address 0x4 - core index']
  #allocation1 [shape = 'u32[144,128]{1,0:T(1,128)}', space=vmem, size = 0x12000, scoped, tag = 'internal scratch']
  %s0 = inlined_call_operand.vmem [shape: bf16[512,144], index: 0, kind: input, shape index: {}]
  %s1 = inlined_call_operand.vmem [shape: bf16[144,128], index: 1, kind: input, shape index: {}]
  %s2 = inlined_call_operand.vmem [shape: f32[1,128], index: 2, kind: input, shape index: {}]
  %s3 = inlined_call_operand.vmem [shape: f32[512,128], index: 3, kind: output, shape index: {}]
  %s4 = sld [smem:[#allocation0]]
  $region45: #{fcn_forward.12} parent=0
    _
  %s6 = ssub.s32 1, %s4
  %s7 = scalar_select 0, %s6, %s4
  loop: start=0, step=1, limit=4
  $region2: #{fcn_forward.12} parent=0 // loop_pre_header
    _
  $region3: #{fcn_forward.12} parent=0 // loop_header
    %s9 = sphi 0, %s13
    %p10 = scmp.ge.s32.totalorder %s9, 4
    %s19 = sphi 0, %s21
    %s22 = sphi 0, %s19
    %s23 = sphi 0, %s22
    %s39 = sphi 0, %s23
    %s43 = sphi 0, %s43
    %s45 = sphi 0, %s43
    %s46 = sphi 0, %s45
    %s60 = sphi 0, %s46
    %s64 = sphi 0, %s64
    %s66 = sphi 0, %s64
    %s67 = sphi 0, %s66
    %s81 = sphi 0, %s67
    %s87 = sphi 0, %s89
    %s90 = sphi 0, %s87
    %s91 = sphi 0, %s90
    %s107 = sphi 0, %s91
  $region4: #{fcn_forward.12} parent=0 // loop_header_branch
    %12 = sbr.rel (%p10) target = $region8
  $region5: #{fcn_forward.12} parent=0 // loop_body
    %s14 = ssub.s32 %s9, 1
    %s15 = ssub.s32 %s9, 2
    %s16 = sadd.s32 %s9, 1
    %s17 = ssub.s32 %s9, %s16
    %p18 = scmp.eq.s32.totalorder %s17, 0
    %s20 = sadd.s32 %s19, 1
    %s21 = scalar_select %p18, %s19, %s20
    %p24 = pneg %p18
    %p25 = scmp.eq.s32.totalorder %s9, 1
    %p26 = por %p24, %p25
    %p27 = scmp.ne.s32.totalorder %s19, %s22
    %p28 = scmp.eq.s32.totalorder %s9, 0
    %p29 = por %p27, %p28
    %p30 = scmp.ne.s32.totalorder %s19, %s22
    %p31 = scmp.eq.s32.totalorder %s14, 1
    %p32 = por %p30, %p31
    %p33 = scmp.ne.s32.totalorder %s22, %s23
    %p34 = scmp.eq.s32.totalorder %s14, 0
    %p35 = por %p33, %p34
    %p36 = scmp.ne.s32.totalorder %s22, %s23
    %p37 = scmp.eq.s32.totalorder %s15, 1
    %p38 = por %p36, %p37
    %p40 = scmp.ne.s32.totalorder %s23, %s39
    %p41 = scmp.eq.s32.totalorder %s15, 0
    %p42 = por %p40, %p41
    %s44 = sadd.s32 %s43, 1
    %p47 = scmp.eq.s32.totalorder %s9, 1
    %p48 = scmp.ne.s32.totalorder %s43, %s45
    %p49 = scmp.eq.s32.totalorder %s9, 0
    %p50 = por %p48, %p49
    %p51 = scmp.ne.s32.totalorder %s43, %s45
    %p52 = scmp.eq.s32.totalorder %s14, 1
    %p53 = por %p51, %p52
    %p54 = scmp.ne.s32.totalorder %s45, %s46
    %p55 = scmp.eq.s32.totalorder %s14, 0
    %p56 = por %p54, %p55
    %p57 = scmp.ne.s32.totalorder %s45, %s46
    %p58 = scmp.eq.s32.totalorder %s15, 1
    %p59 = por %p57, %p58
    %p61 = scmp.ne.s32.totalorder %s46, %s60
    %p62 = scmp.eq.s32.totalorder %s15, 0
    %p63 = por %p61, %p62
    %s65 = sadd.s32 %s64, 1
    %p68 = scmp.eq.s32.totalorder %s9, 1
    %p69 = scmp.ne.s32.totalorder %s64, %s66
    %p70 = scmp.eq.s32.totalorder %s9, 0
    %p71 = por %p69, %p70
    %p72 = scmp.ne.s32.totalorder %s64, %s66
    %p73 = scmp.eq.s32.totalorder %s14, 1
    %p74 = por %p72, %p73
    %p75 = scmp.ne.s32.totalorder %s66, %s67
    %p76 = scmp.eq.s32.totalorder %s14, 0
    %p77 = por %p75, %p76
    %p78 = scmp.ne.s32.totalorder %s66, %s67
    %p79 = scmp.eq.s32.totalorder %s15, 1
    %p80 = por %p78, %p79
    %p82 = scmp.ne.s32.totalorder %s67, %s81
    %p83 = scmp.eq.s32.totalorder %s15, 0
    %p84 = por %p82, %p83
    %s85 = ssub.s32 %s9, %s16
    %p86 = scmp.eq.s32.totalorder %s85, 0
    %s88 = sadd.s32 %s87, 1
    %s89 = scalar_select %p86, %s87, %s88
    %p92 = pneg %p86
    %p93 = scmp.eq.s32.totalorder %s9, 1
    %p94 = por %p92, %p93
    %p95 = scmp.ne.s32.totalorder %s87, %s90
    %p96 = scmp.eq.s32.totalorder %s9, 0
    %p97 = por %p95, %p96
    %p98 = scmp.ne.s32.totalorder %s87, %s90
    %p99 = scmp.eq.s32.totalorder %s14, 1
    %p100 = por %p98, %p99
    %p101 = scmp.ne.s32.totalorder %s90, %s91
    %p102 = scmp.eq.s32.totalorder %s14, 0
    %p103 = por %p101, %p102
    %p104 = scmp.ne.s32.totalorder %s90, %s91
    %p105 = scmp.eq.s32.totalorder %s15, 1
    %p106 = por %p104, %p105
    %p108 = scmp.ne.s32.totalorder %s91, %s107
    %p109 = scmp.eq.s32.totalorder %s15, 0
    %p110 = por %p108, %p109
    %p111 = scmp.le.s32.totalorder 1, %s9
    %p112 = scmp.lt.s32.totalorder %s9, 3
    %p113 = pnand %p111, %p112
    %p114 = pneg %p113
    // Predicated region
    $region9: #{fcn_forward.12} parent=5 // pred_check
      _
    $region10: #{fcn_forward.12} parent=5 // pred_check_branch
      %116 = sbr.rel (%p113) target = $region12
    $region11: #{fcn_forward.12} parent=5 // pred_region
      %s117 = ssub.s32 %s9, 1
      // Predicated region
      $region13: #{fcn_forward.12} parent=11 // pred_check
        %p118 = pneg %p56
      $region14: #{fcn_forward.12} parent=11 // pred_check_branch
        %120 = sbr.rel (%p118) target = $region16
      $region15: #{fcn_forward.12} parent=11 // pred_region
        _
      $region16: #{fcn_forward.12} parent=11 // pred_fallthru
        _
      // Predicated region
      $region17: #{fcn_forward.12} parent=11 // pred_check
        %p121 = pneg %p77
      $region18: #{fcn_forward.12} parent=11 // pred_check_branch
        %123 = sbr.rel (%p121) target = $region20
      $region19: #{fcn_forward.12} parent=11 // pred_region
        _
      $region20: #{fcn_forward.12} parent=11 // pred_fallthru
        _
    $region12: #{fcn_forward.12} parent=5 // pred_fallthru
      _
    %p124 = scmp.lt.s32.totalorder %s9, 2
    // Predicated region
    $region21: #{fcn_forward.12} parent=5 // pred_check
      %p125 = pneg %p124
    $region22: #{fcn_forward.12} parent=5 // pred_check_branch
      %127 = sbr.rel (%p125) target = $region24
    $region23: #{fcn_forward.12} parent=5 // pred_region
      // Predicated region
      $region25: #{fcn_forward.12} parent=23 // pred_check
        %p128 = pneg %p29
      $region26: #{fcn_forward.12} parent=23 // pred_check_branch
        %130 = sbr.rel (%p128) target = $region28
      $region27: #{fcn_forward.12} parent=23 // pred_region
        %s131 = smul.u32 32, %s9
        %p132 = scmp.lt.s32.totalorder %s131, 63
        %s133 = scalar_select %p132, %s131, 63
        %s134 = smul.addr %s133, 2
        %s135 = smul.addr %s134, 4
        %s136 = scalar_lea.vmem %s0, %s135
        %s137 = smul.u32 32, %s9
      $region28: #{fcn_forward.12} parent=23 // pred_fallthru
        _
    $region24: #{fcn_forward.12} parent=5 // pred_fallthru
      _
    %p138 = scmp.le.s32.totalorder 1, %s9
    %p139 = scmp.lt.s32.totalorder %s9, 3
    %p140 = pnand %p138, %p139
    %p141 = pneg %p140
    // Predicated region
    $region29: #{fcn_forward.12} parent=5 // pred_check
      _
    $region30: #{fcn_forward.12} parent=5 // pred_check_branch
      %143 = sbr.rel (%p140) target = $region32
    $region31: #{fcn_forward.12} parent=5 // pred_region
      %s144 = ssub.s32 %s9, 1
      %s145 = smul.u32 32, %s14
      %p146 = scmp.lt.s32.totalorder %s145, 63
      %s147 = scalar_select %p146, %s145, 63
      %s148 = smul.addr %s147, 2
      %s149 = smul.addr %s148, 4
      %s150 = scalar_lea.vmem %s0, %s149
      %p151 = pneg %p35
      %p152 = pneg %p32
      %p153 = pneg %p56
      %p154 = pneg %p53
      %p155 = pneg %p77
      %p156 = pneg %p74
      %p157 = pneg %p103
      %p158 = pneg %p100
      %s159 = smul.u32 32, %s14
      %p160 = scmp.lt.s32.totalorder %s159, 63
      %s161 = scalar_select %p160, %s159, 63
      %s162 = smul.addr %s161, 8
      %s163 = scalar_lea.vmem %s3, %s162
      %s164 = smul.u32 32, %s14
      %p165 = scmp.lt.s32.totalorder %s164, 63
      %s166 = scalar_select %p165, %s164, 63
      %s167 = smul.addr %s166, 2
      %s168 = smul.addr %s167, 4
      %s169 = scalar_lea.vmem %s0, %s168
      %s170 = smul.u32 32, %s14
      %s171 = smul.u32 32, %s14
      %p172 = scmp.lt.s32.totalorder %s171, 63
      %s173 = scalar_select %p172, %s171, 63
      %s174 = smul.addr %s173, 8
      %s175 = scalar_lea.vmem %s3, %s174
      %s176 = smul.u32 32, %s14
      %v178 = vld [vmem:[%s169] sm:$0xff]
      %v179 = vld [vmem:[%s169 + $0x8] sm:$0xff]
      %v180 = vld [vmem:[%s169 + $0x10] sm:$0xff]
      %v181 = vld [vmem:[%s169 + $0x18] sm:$0xff]
      %v182 = vld [vmem:[%s169 + $0x20] sm:$0xff]
      %v183 = vld [vmem:[%s169 + $0x28] sm:$0xff]
      %v184 = vld [vmem:[%s169 + $0x30] sm:$0xff]
      %v185 = vld [vmem:[%s169 + $0x38] sm:$0xff]
      %v186 = vld [vmem:[%s169 + $0x40] sm:$0xff]
      %v187 = vld [vmem:[%s169 + $0x48] sm:$0xff]
      %v188 = vld [vmem:[%s169 + $0x50] sm:$0xff]
      %v189 = vld [vmem:[%s169 + $0x58] sm:$0xff]
      %v190 = vld [vmem:[%s169 + $0x60] sm:$0xff]
      %v191 = vld [vmem:[%s169 + $0x68] sm:$0xff]
      %v192 = vld [vmem:[%s169 + $0x70] sm:$0xff]
      %v193 = vld [vmem:[%s169 + $0x78] sm:$0xff]
      %v194 = vld [vmem:[%s169 + $0x80] sm:$0xff]
      %v195 = vld [vmem:[%s169 + $0x88] sm:$0xff]
      %v196 = vld [vmem:[%s169 + $0x90] sm:$0xff]
      %v197 = vld [vmem:[%s169 + $0x98] sm:$0xff]
      %v198 = vld [vmem:[%s169 + $0xa0] sm:$0xff]
      %v199 = vld [vmem:[%s169 + $0xa8] sm:$0xff]
      %v200 = vld [vmem:[%s169 + $0xb0] sm:$0xff]
      %v201 = vld [vmem:[%s169 + $0xb8] sm:$0xff]
      %v202 = vld [vmem:[%s169 + $0xc0] sm:$0xff]
      %v203 = vld [vmem:[%s169 + $0xc8] sm:$0xff]
      %v204 = vld [vmem:[%s169 + $0xd0] sm:$0xff]
      %v205 = vld [vmem:[%s169 + $0xd8] sm:$0xff]
      %v206 = vld [vmem:[%s169 + $0xe0] sm:$0xff]
      %v207 = vld [vmem:[%s169 + $0xe8] sm:$0xff]
      %v208 = vld [vmem:[%s169 + $0xf0] sm:$0xff]
      %v209 = vld [vmem:[%s169 + $0xf8] sm:$0xff]
      %v210 = vld [vmem:[%s1] sm:$0xf]
      %v211 = vld [vmem:[%s1 + $0x4] sm:$0xf]
      %v212 = vld [vmem:[%s1 + $0x8] sm:$0xf]
      %v213 = vld [vmem:[%s1 + $0xc] sm:$0xf]
      %v214 = vld [vmem:[%s1 + $0x10] sm:$0xf]
      %v215 = vld [vmem:[%s1 + $0x14] sm:$0xf]
      %v216 = vld [vmem:[%s1 + $0x18] sm:$0xf]
      %v217 = vld [vmem:[%s1 + $0x1c] sm:$0xf]
      %v218 = vld [vmem:[%s1 + $0x20] sm:$0xf]
      %v219 = vld [vmem:[%s1 + $0x24] sm:$0xf]
      %v220 = vld [vmem:[%s1 + $0x28] sm:$0xf]
      %v221 = vld [vmem:[%s1 + $0x2c] sm:$0xf]
      %v222 = vld [vmem:[%s1 + $0x30] sm:$0xf]
      %v223 = vld [vmem:[%s1 + $0x34] sm:$0xf]
      %v224 = vld [vmem:[%s1 + $0x38] sm:$0xf]
      %v225 = vld [vmem:[%s1 + $0x3c] sm:$0xf]
      %v226 = vld [vmem:[%s1 + $0x40] sm:$0xf]
      %v227 = vld [vmem:[%s1 + $0x44] sm:$0xf]
      %v228 = vld [vmem:[%s2] sm:$0x1]
      %v230 = vlaneseq
      %v231 = vshrl.u32 %v230, 7
      %v232 = vsub.s32 0, %v231
      %v233 = vrot.slane %v228, %v232
      %v267 = vunpack.c.l.b16 %v178
      %v268 = vunpack.c.h.b16 %v178
      %v269 = vunpack.c.l.b16 %v179
      %v270 = vunpack.c.h.b16 %v179
      %v271 = vunpack.c.l.b16 %v180
      %v272 = vunpack.c.h.b16 %v180
      %v273 = vunpack.c.l.b16 %v181
      %v274 = vunpack.c.h.b16 %v181
      %v275 = vunpack.c.l.b16 %v182
      %v276 = vunpack.c.h.b16 %v182
      %v277 = vunpack.c.l.b16 %v183
      %v278 = vunpack.c.h.b16 %v183
      %v279 = vunpack.c.l.b16 %v184
      %v280 = vunpack.c.h.b16 %v184
      %v281 = vunpack.c.l.b16 %v185
      %v282 = vunpack.c.h.b16 %v185
      %v283 = vunpack.c.l.b16 %v186
      %v284 = vunpack.c.h.b16 %v186
      %v285 = vunpack.c.l.b16 %v187
      %v286 = vunpack.c.h.b16 %v187
      %v287 = vunpack.c.l.b16 %v188
      %v288 = vunpack.c.h.b16 %v188
      %v289 = vunpack.c.l.b16 %v189
      %v290 = vunpack.c.h.b16 %v189
      %v291 = vunpack.c.l.b16 %v190
      %v292 = vunpack.c.h.b16 %v190
      %v293 = vunpack.c.l.b16 %v191
      %v294 = vunpack.c.h.b16 %v191
      %v295 = vunpack.c.l.b16 %v192
      %v296 = vunpack.c.h.b16 %v192
      %v297 = vunpack.c.l.b16 %v193
      %v298 = vunpack.c.h.b16 %v193
      %v299 = vunpack.c.l.b16 %v194
      %v300 = vunpack.c.h.b16 %v194
      %v301 = vunpack.c.l.b16 %v195
      %v302 = vunpack.c.h.b16 %v195
      %v303 = vunpack.c.l.b16 %v196
      %v304 = vunpack.c.h.b16 %v196
      %v305 = vunpack.c.l.b16 %v197
      %v306 = vunpack.c.h.b16 %v197
      %v307 = vunpack.c.l.b16 %v198
      %v308 = vunpack.c.h.b16 %v198
      %v309 = vunpack.c.l.b16 %v199
      %v310 = vunpack.c.h.b16 %v199
      %v311 = vunpack.c.l.b16 %v200
      %v312 = vunpack.c.h.b16 %v200
      %v313 = vunpack.c.l.b16 %v201
      %v314 = vunpack.c.h.b16 %v201
      %v315 = vunpack.c.l.b16 %v202
      %v316 = vunpack.c.h.b16 %v202
      %v317 = vunpack.c.l.b16 %v203
      %v318 = vunpack.c.h.b16 %v203
      %v319 = vunpack.c.l.b16 %v204
      %v320 = vunpack.c.h.b16 %v204
      %v321 = vunpack.c.l.b16 %v205
      %v322 = vunpack.c.h.b16 %v205
      %v323 = vunpack.c.l.b16 %v206
      %v324 = vunpack.c.h.b16 %v206
      %v325 = vunpack.c.l.b16 %v207
      %v326 = vunpack.c.h.b16 %v207
      %v327 = vunpack.c.l.b16 %v208
      %v328 = vunpack.c.h.b16 %v208
      %v329 = vunpack.c.l.b16 %v209
      %v330 = vunpack.c.h.b16 %v209
      %v331 = vpack.c.b16 %v269, %v267
      %v332 = vpack.c.b16 %v270, %v268
      %v333 = vpack.c.b16 %v273, %v271
      %v334 = vpack.c.b16 %v274, %v272
      %v335 = vpack.c.b16 %v277, %v275
      %v336 = vpack.c.b16 %v278, %v276
      %v337 = vpack.c.b16 %v281, %v279
      %v338 = vpack.c.b16 %v282, %v280
      %v339 = vpack.c.b16 %v285, %v283
      %v340 = vpack.c.b16 %v286, %v284
      %v341 = vpack.c.b16 %v289, %v287
      %v342 = vpack.c.b16 %v290, %v288
      %v343 = vpack.c.b16 %v293, %v291
      %v344 = vpack.c.b16 %v294, %v292
      %v345 = vpack.c.b16 %v297, %v295
      %v346 = vpack.c.b16 %v298, %v296
      %v347 = vpack.c.b16 %v301, %v299
      %v348 = vpack.c.b16 %v302, %v300
      %v349 = vpack.c.b16 %v305, %v303
      %v350 = vpack.c.b16 %v306, %v304
      %v351 = vpack.c.b16 %v309, %v307
      %v352 = vpack.c.b16 %v310, %v308
      %v353 = vpack.c.b16 %v313, %v311
      %v354 = vpack.c.b16 %v314, %v312
      %v355 = vpack.c.b16 %v317, %v315
      %v356 = vpack.c.b16 %v318, %v316
      %v357 = vpack.c.b16 %v321, %v319
      %v358 = vpack.c.b16 %v322, %v320
      %v359 = vpack.c.b16 %v325, %v323
      %v360 = vpack.c.b16 %v326, %v324
      %v361 = vpack.c.b16 %v329, %v327
      %v362 = vpack.c.b16 %v330, %v328
      %v397 = vunpack.c.l.b16 %v210
      %v398 = vunpack.c.l.b16 %v211
      %v399 = vunpack.c.l.b16 %v212
      %v400 = vunpack.c.l.b16 %v213
      %v401 = vunpack.c.l.b16 %v214
      %v402 = vunpack.c.l.b16 %v215
      %v403 = vunpack.c.l.b16 %v216
      %v404 = vunpack.c.l.b16 %v217
      %v405 = vunpack.c.l.b16 %v218
      %v406 = vunpack.c.l.b16 %v219
      %v407 = vunpack.c.l.b16 %v220
      %v408 = vunpack.c.l.b16 %v221
      %v409 = vunpack.c.l.b16 %v222
      %v410 = vunpack.c.l.b16 %v223
      %v411 = vunpack.c.l.b16 %v224
      %v412 = vunpack.c.l.b16 %v225
      %v413 = vunpack.c.l.b16 %v226
      %v414 = vunpack.c.l.b16 %v227
      %v415 = vpack.c.b16 %v398, %v397
      %v416 = vpack.c.b16 %v400, %v399
      %v417 = vpack.c.b16 %v402, %v401
      %v418 = vpack.c.b16 %v404, %v403
      %v419 = vpack.c.b16 %v406, %v405
      %v420 = vpack.c.b16 %v408, %v407
      %v421 = vpack.c.b16 %v410, %v409
      %v422 = vpack.c.b16 %v412, %v411
      %v423 = vpack.c.b16 %v414, %v413
      %vm433 = vcmask 130048
      %v435 = vsel %vm433, %v332, 0
      %v438 = vsel %vm433, %v334, 0
      %v441 = vsel %vm433, %v336, 0
      %v444 = vsel %vm433, %v338, 0
      %v447 = vsel %vm433, %v340, 0
      %v450 = vsel %vm433, %v342, 0
      %v453 = vsel %vm433, %v344, 0
      %v456 = vsel %vm433, %v346, 0
      %v459 = vsel %vm433, %v348, 0
      %v462 = vsel %vm433, %v350, 0
      %v465 = vsel %vm433, %v352, 0
      %v468 = vsel %vm433, %v354, 0
      %v471 = vsel %vm433, %v356, 0
      %v474 = vsel %vm433, %v358, 0
      %v477 = vsel %vm433, %v360, 0
      %v480 = vsel %vm433, %v362, 0
      %482 = vmatprep.subr.bf16.mxu0 0
      %483 = vmatpush1.bf16.msra.mxu0 %v415
      %484 = vmatprep.subr.bf16.mxu0 0
      %485 = vmatpush1.bf16.msra.mxu0 %v416
      %486 = vmatprep.subr.bf16.mxu0 0
      %487 = vmatpush1.bf16.msra.mxu0 %v417
      %488 = vmatprep.subr.bf16.mxu0 0
      %489 = vmatpush1.bf16.msra.mxu0 %v418
      %490 = vmatprep.subr.bf16.mxu0 0
      %491 = vmatpush1.bf16.msra.mxu0 %v419
      %492 = vmatprep.subr.bf16.mxu0 0
      %493 = vmatpush1.bf16.msra.mxu0 %v420
      %494 = vmatprep.subr.bf16.mxu0 0
      %495 = vmatpush1.bf16.msra.mxu0 %v421
      %496 = vmatprep.subr.bf16.mxu0 0
      %497 = vmatpush1.bf16.msra.mxu0 %v422
      %498 = vmatprep.subr.bf16.mxu0 0
      %499 = vmatpush1.bf16.msra.mxu0 %v423
      %500 = vmatprep.subr.bf16.mxu0 0
      %501 = vmatpush1.bf16.msra.mxu0 0
      %502 = vmatprep.subr.bf16.mxu0 0
      %503 = vmatpush1.bf16.msra.mxu0 0
      %504 = vmatprep.subr.bf16.mxu0 0
      %505 = vmatpush1.bf16.msra.mxu0 0
      %506 = vmatprep.subr.bf16.mxu0 0
      %507 = vmatpush1.bf16.msra.mxu0 0
      %508 = vmatprep.subr.bf16.mxu0 0
      %509 = vmatpush1.bf16.msra.mxu0 0
      %510 = vmatprep.subr.bf16.mxu0 0
      %511 = vmatpush1.bf16.msra.mxu0 0
      %512 = vmatprep.subr.bf16.mxu0 0
      %513 = vmatpush1.bf16.msra.mxu0 0
      %514 = vmatprep.mubr.bf16.mxu0 %v435
      %515 = vmatmul.mubr.bf16.gmra.mrb[0].mxu0 %v331
      %v516 = vpop.f32.mrb[0].mxu0
      %v517 = vadd.f32 %v233, %v516
      %v518 = vpop.f32.mrb[0].mxu0
      %v519 = vpop.f32.mrb[0].mxu0
      %v520 = vadd.f32 %v233, %v519
      %v521 = vpop.f32.mrb[0].mxu0
      %522 = vmatprep.mubr.bf16.mxu0 %v438
      %523 = vmatmul.mubr.bf16.gmra.mrb[0].mxu0 %v333
      %v524 = vpop.f32.mrb[0].mxu0
      %v525 = vadd.f32 %v233, %v524
      %v526 = vpop.f32.mrb[0].mxu0
      %v527 = vpop.f32.mrb[0].mxu0
      %v528 = vadd.f32 %v233, %v527
      %v529 = vpop.f32.mrb[0].mxu0
      %530 = vmatprep.mubr.bf16.mxu0 %v441
      %531 = vmatmul.mubr.bf16.gmra.mrb[0].mxu0 %v335
      %v532 = vpop.f32.mrb[0].mxu0
      %v533 = vadd.f32 %v233, %v532
      %v534 = vpop.f32.mrb[0].mxu0
      %v535 = vpop.f32.mrb[0].mxu0
      %v536 = vadd.f32 %v233, %v535
      %v537 = vpop.f32.mrb[0].mxu0
      %538 = vmatprep.mubr.bf16.mxu0 %v444
      %539 = vmatmul.mubr.bf16.gmra.mrb[0].mxu0 %v337
      %v540 = vpop.f32.mrb[0].mxu0
      %v541 = vadd.f32 %v233, %v540
      %v542 = vpop.f32.mrb[0].mxu0
      %v543 = vpop.f32.mrb[0].mxu0
      %v544 = vadd.f32 %v233, %v543
      %v545 = vpop.f32.mrb[0].mxu0
      %546 = vmatprep.mubr.bf16.mxu0 %v447
      %547 = vmatmul.mubr.bf16.gmra.mrb[0].mxu0 %v339
      %v548 = vpop.f32.mrb[0].mxu0
      %v549 = vadd.f32 %v233, %v548
      %v550 = vpop.f32.mrb[0].mxu0
      %v551 = vpop.f32.mrb[0].mxu0
      %v552 = vadd.f32 %v233, %v551
      %v553 = vpop.f32.mrb[0].mxu0
      %554 = vmatprep.mubr.bf16.mxu0 %v450
      %555 = vmatmul.mubr.bf16.gmra.mrb[0].mxu0 %v341
      %v556 = vpop.f32.mrb[0].mxu0
      %v557 = vadd.f32 %v233, %v556
      %v558 = vpop.f32.mrb[0].mxu0
      %v559 = vpop.f32.mrb[0].mxu0
      %v560 = vadd.f32 %v233, %v559
      %v561 = vpop.f32.mrb[0].mxu0
      %562 = vmatprep.mubr.bf16.mxu0 %v453
      %563 = vmatmul.mubr.bf16.gmra.mrb[0].mxu0 %v343
      %v564 = vpop.f32.mrb[0].mxu0
      %v565 = vadd.f32 %v233, %v564
      %v566 = vpop.f32.mrb[0].mxu0
      %v567 = vpop.f32.mrb[0].mxu0
      %v568 = vadd.f32 %v233, %v567
      %v569 = vpop.f32.mrb[0].mxu0
      %570 = vmatprep.mubr.bf16.mxu0 %v456
      %571 = vmatmul.mubr.bf16.gmra.mrb[0].mxu0 %v345
      %v572 = vpop.f32.mrb[0].mxu0
      %v573 = vadd.f32 %v233, %v572
      %v574 = vpop.f32.mrb[0].mxu0
      %v575 = vpop.f32.mrb[0].mxu0
      %v576 = vadd.f32 %v233, %v575
      %v577 = vpop.f32.mrb[0].mxu0
      %578 = vmatprep.mubr.bf16.mxu0 %v459
      %579 = vmatmul.mubr.bf16.gmra.mrb[0].mxu0 %v347
      %v580 = vpop.f32.mrb[0].mxu0
      %v581 = vadd.f32 %v233, %v580
      %v582 = vpop.f32.mrb[0].mxu0
      %v583 = vpop.f32.mrb[0].mxu0
      %v584 = vadd.f32 %v233, %v583
      %v585 = vpop.f32.mrb[0].mxu0
      %586 = vmatprep.mubr.bf16.mxu0 %v462
      %587 = vmatmul.mubr.bf16.gmra.mrb[0].mxu0 %v349
      %v588 = vpop.f32.mrb[0].mxu0
      %v589 = vadd.f32 %v233, %v588
      %v590 = vpop.f32.mrb[0].mxu0
      %v591 = vpop.f32.mrb[0].mxu0
      %v592 = vadd.f32 %v233, %v591
      %v593 = vpop.f32.mrb[0].mxu0
      %594 = vmatprep.mubr.bf16.mxu0 %v465
      %595 = vmatmul.mubr.bf16.gmra.mrb[0].mxu0 %v351
      %v596 = vpop.f32.mrb[0].mxu0
      %v597 = vadd.f32 %v233, %v596
      %v598 = vpop.f32.mrb[0].mxu0
      %v599 = vpop.f32.mrb[0].mxu0
      %v600 = vadd.f32 %v233, %v599
      %v601 = vpop.f32.mrb[0].mxu0
      %602 = vmatprep.mubr.bf16.mxu0 %v468
      %603 = vmatmul.mubr.bf16.gmra.mrb[0].mxu0 %v353
      %v604 = vpop.f32.mrb[0].mxu0
      %v605 = vadd.f32 %v233, %v604
      %v606 = vpop.f32.mrb[0].mxu0
      %v607 = vpop.f32.mrb[0].mxu0
      %v608 = vadd.f32 %v233, %v607
      %v609 = vpop.f32.mrb[0].mxu0
      %610 = vmatprep.mubr.bf16.mxu0 %v471
      %611 = vmatmul.mubr.bf16.gmra.mrb[0].mxu0 %v355
      %v612 = vpop.f32.mrb[0].mxu0
      %v613 = vadd.f32 %v233, %v612
      %v614 = vpop.f32.mrb[0].mxu0
      %v615 = vpop.f32.mrb[0].mxu0
      %v616 = vadd.f32 %v233, %v615
      %v617 = vpop.f32.mrb[0].mxu0
      %618 = vmatprep.mubr.bf16.mxu0 %v474
      %619 = vmatmul.mubr.bf16.gmra.mrb[0].mxu0 %v357
      %v620 = vpop.f32.mrb[0].mxu0
      %v621 = vadd.f32 %v233, %v620
      %v622 = vpop.f32.mrb[0].mxu0
      %v623 = vpop.f32.mrb[0].mxu0
      %v624 = vadd.f32 %v233, %v623
      %v625 = vpop.f32.mrb[0].mxu0
      %626 = vmatprep.mubr.bf16.mxu0 %v477
      %627 = vmatmul.mubr.bf16.gmra.mrb[0].mxu0 %v359
      %v628 = vpop.f32.mrb[0].mxu0
      %v629 = vadd.f32 %v233, %v628
      %v630 = vpop.f32.mrb[0].mxu0
      %v631 = vpop.f32.mrb[0].mxu0
      %v632 = vadd.f32 %v233, %v631
      %v633 = vpop.f32.mrb[0].mxu0
      %634 = vmatprep.mubr.bf16.mxu0 %v480
      %635 = vmatmul.mubr.bf16.gmra.mrb[0].mxu0 %v361
      %v636 = vpop.f32.mrb[0].mxu0
      %v637 = vadd.f32 %v233, %v636
      %v638 = vpop.f32.mrb[0].mxu0
      %v639 = vpop.f32.mrb[0].mxu0
      %v640 = vadd.f32 %v233, %v639
      %v641 = vpop.f32.mrb[0].mxu0
      %642 = vdwg.mxu0
      %v643 = vmax.f32 %v517, 0.0
      %v644 = vmax.f32 %v520, 0.0
      %v645 = vmax.f32 %v525, 0.0
      %v646 = vmax.f32 %v528, 0.0
      %v647 = vmax.f32 %v533, 0.0
      %v648 = vmax.f32 %v536, 0.0
      %v649 = vmax.f32 %v541, 0.0
      %v650 = vmax.f32 %v544, 0.0
      %v651 = vmax.f32 %v549, 0.0
      %v652 = vmax.f32 %v552, 0.0
      %v653 = vmax.f32 %v557, 0.0
      %v654 = vmax.f32 %v560, 0.0
      %v655 = vmax.f32 %v565, 0.0
      %v656 = vmax.f32 %v568, 0.0
      %v657 = vmax.f32 %v573, 0.0
      %v658 = vmax.f32 %v576, 0.0
      %v659 = vmax.f32 %v581, 0.0
      %v660 = vmax.f32 %v584, 0.0
      %v661 = vmax.f32 %v589, 0.0
      %v662 = vmax.f32 %v592, 0.0
      %v663 = vmax.f32 %v597, 0.0
      %v664 = vmax.f32 %v600, 0.0
      %v665 = vmax.f32 %v605, 0.0
      %v666 = vmax.f32 %v608, 0.0
      %v667 = vmax.f32 %v613, 0.0
      %v668 = vmax.f32 %v616, 0.0
      %v669 = vmax.f32 %v621, 0.0
      %v670 = vmax.f32 %v624, 0.0
      %v671 = vmax.f32 %v629, 0.0
      %v672 = vmax.f32 %v632, 0.0
      %v673 = vmax.f32 %v637, 0.0
      %v674 = vmax.f32 %v640, 0.0
      %675 = vst [vmem:[%s175] sm:$0xff] %v643
      %676 = vst [vmem:[%s175 + $0x8] sm:$0xff] %v644
      %677 = vst [vmem:[%s175 + $0x10] sm:$0xff] %v645
      %678 = vst [vmem:[%s175 + $0x18] sm:$0xff] %v646
      %679 = vst [vmem:[%s175 + $0x20] sm:$0xff] %v647
      %680 = vst [vmem:[%s175 + $0x28] sm:$0xff] %v648
      %681 = vst [vmem:[%s175 + $0x30] sm:$0xff] %v649
      %682 = vst [vmem:[%s175 + $0x38] sm:$0xff] %v650
      %683 = vst [vmem:[%s175 + $0x40] sm:$0xff] %v651
      %684 = vst [vmem:[%s175 + $0x48] sm:$0xff] %v652
      %685 = vst [vmem:[%s175 + $0x50] sm:$0xff] %v653
      %686 = vst [vmem:[%s175 + $0x58] sm:$0xff] %v654
      %687 = vst [vmem:[%s175 + $0x60] sm:$0xff] %v655
      %688 = vst [vmem:[%s175 + $0x68] sm:$0xff] %v656
      %689 = vst [vmem:[%s175 + $0x70] sm:$0xff] %v657
      %690 = vst [vmem:[%s175 + $0x78] sm:$0xff] %v658
      %691 = vst [vmem:[%s175 + $0x80] sm:$0xff] %v659
      %692 = vst [vmem:[%s175 + $0x88] sm:$0xff] %v660
      %693 = vst [vmem:[%s175 + $0x90] sm:$0xff] %v661
      %694 = vst [vmem:[%s175 + $0x98] sm:$0xff] %v662
      %695 = vst [vmem:[%s175 + $0xa0] sm:$0xff] %v663
      %696 = vst [vmem:[%s175 + $0xa8] sm:$0xff] %v664
      %697 = vst [vmem:[%s175 + $0xb0] sm:$0xff] %v665
      %698 = vst [vmem:[%s175 + $0xb8] sm:$0xff] %v666
      %699 = vst [vmem:[%s175 + $0xc0] sm:$0xff] %v667
      %700 = vst [vmem:[%s175 + $0xc8] sm:$0xff] %v668
      %701 = vst [vmem:[%s175 + $0xd0] sm:$0xff] %v669
      %702 = vst [vmem:[%s175 + $0xd8] sm:$0xff] %v670
      %703 = vst [vmem:[%s175 + $0xe0] sm:$0xff] %v671
      %704 = vst [vmem:[%s175 + $0xe8] sm:$0xff] %v672
      %705 = vst [vmem:[%s175 + $0xf0] sm:$0xff] %v673
      %706 = vst [vmem:[%s175 + $0xf8] sm:$0xff] %v674
      %s707 = smul.u32 32, %s14
      %p708 = scmp.lt.s32.totalorder %s707, 63
      %s709 = scalar_select %p708, %s707, 63
      %s710 = smul.addr %s709, 8
      %s711 = scalar_lea.vmem %s3, %s710
      // Predicated region
      $region33: #{fcn_forward.12} parent=31 // pred_check
        %p712 = pneg %p100
      $region34: #{fcn_forward.12} parent=31 // pred_check_branch
        %714 = sbr.rel (%p712) target = $region36
      $region35: #{fcn_forward.12} parent=31 // pred_region
        %s715 = smul.u32 32, %s14
      $region36: #{fcn_forward.12} parent=31 // pred_fallthru
        _
    $region32: #{fcn_forward.12} parent=5 // pred_fallthru
      _
    %p716 = scmp.le.s32.totalorder 2, %s9
    // Predicated region
    $region37: #{fcn_forward.12} parent=5 // pred_check
      %p717 = pneg %p716
    $region38: #{fcn_forward.12} parent=5 // pred_check_branch
      %719 = sbr.rel (%p717) target = $region40
    $region39: #{fcn_forward.12} parent=5 // pred_region
      %s720 = ssub.s32 %s9, 2
      // Predicated region
      $region41: #{fcn_forward.12} parent=39 // pred_check
        %p721 = pneg %p106
      $region42: #{fcn_forward.12} parent=39 // pred_check_branch
        %723 = sbr.rel (%p721) target = $region44
      $region43: #{fcn_forward.12} parent=39 // pred_region
        %s724 = smul.u32 32, %s15
        %p725 = scmp.lt.s32.totalorder %s724, 63
        %s726 = scalar_select %p725, %s724, 63
        %s727 = smul.addr %s726, 8
        %s728 = scalar_lea.vmem %s3, %s727
      $region44: #{fcn_forward.12} parent=39 // pred_fallthru
        _
    $region40: #{fcn_forward.12} parent=5 // pred_fallthru
      _
  $region6: #{fcn_forward.12} parent=0 // loop_footer
    %s13 = sadd.s32 1, %s9
  $region7: #{fcn_forward.12} parent=0 // loop_footer_branch
    %8 = sbr.rel target = $region3
  $region8: #{fcn_forward.12} parent=0 // loop_exit
    _

// kernel: fcn_forward.13
$region0: #{fcn_forward.13}
  #allocation0 [shape = 'u32[]', space=smem, size = 0x4, offset = 0x4, fixed_abs, tag = 'smem constant byte address 0x4 - core index']
  #allocation1 [shape = 'u32[144,128]{1,0:T(1,128)}', space=vmem, size = 0x12000, scoped, tag = 'internal scratch']
  %s0 = inlined_call_operand.vmem [shape: bf16[2048,4], index: 0, kind: input, shape index: {}]
  %s1 = inlined_call_operand.vmem [shape: bf16[4,128], index: 1, kind: input, shape index: {}]
  %s2 = inlined_call_operand.vmem [shape: f32[1,128], index: 2, kind: input, shape index: {}]
  %s3 = inlined_call_operand.vmem [shape: f32[2048,128], index: 3, kind: output, shape index: {}]
  %s4 = sld [smem:[#allocation0]]
  $region45: #{fcn_forward.13} parent=0
    _
  %s6 = ssub.s32 1, %s4
  %s7 = scalar_select 0, %s6, %s4
  loop: start=0, step=1, limit=4
  $region2: #{fcn_forward.13} parent=0 // loop_pre_header
    _
  $region3: #{fcn_forward.13} parent=0 // loop_header
    %s9 = sphi 0, %s13
    %p10 = scmp.ge.s32.totalorder %s9, 4
    %s19 = sphi 0, %s21
    %s22 = sphi 0, %s19
    %s23 = sphi 0, %s22
    %s39 = sphi 0, %s23
    %s43 = sphi 0, %s43
    %s45 = sphi 0, %s43
    %s46 = sphi 0, %s45
    %s60 = sphi 0, %s46
    %s64 = sphi 0, %s64
    %s66 = sphi 0, %s64
    %s67 = sphi 0, %s66
    %s81 = sphi 0, %s67
    %s87 = sphi 0, %s89
    %s90 = sphi 0, %s87
    %s91 = sphi 0, %s90
    %s107 = sphi 0, %s91
  $region4: #{fcn_forward.13} parent=0 // loop_header_branch
    %12 = sbr.rel (%p10) target = $region8
  $region5: #{fcn_forward.13} parent=0 // loop_body
    %s14 = ssub.s32 %s9, 1
    %s15 = ssub.s32 %s9, 2
    %s16 = sadd.s32 %s9, 1
    %s17 = ssub.s32 %s9, %s16
    %p18 = scmp.eq.s32.totalorder %s17, 0
    %s20 = sadd.s32 %s19, 1
    %s21 = scalar_select %p18, %s19, %s20
    %p24 = pneg %p18
    %p25 = scmp.eq.s32.totalorder %s9, 1
    %p26 = por %p24, %p25
    %p27 = scmp.ne.s32.totalorder %s19, %s22
    %p28 = scmp.eq.s32.totalorder %s9, 0
    %p29 = por %p27, %p28
    %p30 = scmp.ne.s32.totalorder %s19, %s22
    %p31 = scmp.eq.s32.totalorder %s14, 1
    %p32 = por %p30, %p31
    %p33 = scmp.ne.s32.totalorder %s22, %s23
    %p34 = scmp.eq.s32.totalorder %s14, 0
    %p35 = por %p33, %p34
    %p36 = scmp.ne.s32.totalorder %s22, %s23
    %p37 = scmp.eq.s32.totalorder %s15, 1
    %p38 = por %p36, %p37
    %p40 = scmp.ne.s32.totalorder %s23, %s39
    %p41 = scmp.eq.s32.totalorder %s15, 0
    %p42 = por %p40, %p41
    %s44 = sadd.s32 %s43, 1
    %p47 = scmp.eq.s32.totalorder %s9, 1
    %p48 = scmp.ne.s32.totalorder %s43, %s45
    %p49 = scmp.eq.s32.totalorder %s9, 0
    %p50 = por %p48, %p49
    %p51 = scmp.ne.s32.totalorder %s43, %s45
    %p52 = scmp.eq.s32.totalorder %s14, 1
    %p53 = por %p51, %p52
    %p54 = scmp.ne.s32.totalorder %s45, %s46
    %p55 = scmp.eq.s32.totalorder %s14, 0
    %p56 = por %p54, %p55
    %p57 = scmp.ne.s32.totalorder %s45, %s46
    %p58 = scmp.eq.s32.totalorder %s15, 1
    %p59 = por %p57, %p58
    %p61 = scmp.ne.s32.totalorder %s46, %s60
    %p62 = scmp.eq.s32.totalorder %s15, 0
    %p63 = por %p61, %p62
    %s65 = sadd.s32 %s64, 1
    %p68 = scmp.eq.s32.totalorder %s9, 1
    %p69 = scmp.ne.s32.totalorder %s64, %s66
    %p70 = scmp.eq.s32.totalorder %s9, 0
    %p71 = por %p69, %p70
    %p72 = scmp.ne.s32.totalorder %s64, %s66
    %p73 = scmp.eq.s32.totalorder %s14, 1
    %p74 = por %p72, %p73
    %p75 = scmp.ne.s32.totalorder %s66, %s67
    %p76 = scmp.eq.s32.totalorder %s14, 0
    %p77 = por %p75, %p76
    %p78 = scmp.ne.s32.totalorder %s66, %s67
    %p79 = scmp.eq.s32.totalorder %s15, 1
    %p80 = por %p78, %p79
    %p82 = scmp.ne.s32.totalorder %s67, %s81
    %p83 = scmp.eq.s32.totalorder %s15, 0
    %p84 = por %p82, %p83
    %s85 = ssub.s32 %s9, %s16
    %p86 = scmp.eq.s32.totalorder %s85, 0
    %s88 = sadd.s32 %s87, 1
    %s89 = scalar_select %p86, %s87, %s88
    %p92 = pneg %p86
    %p93 = scmp.eq.s32.totalorder %s9, 1
    %p94 = por %p92, %p93
    %p95 = scmp.ne.s32.totalorder %s87, %s90
    %p96 = scmp.eq.s32.totalorder %s9, 0
    %p97 = por %p95, %p96
    %p98 = scmp.ne.s32.totalorder %s87, %s90
    %p99 = scmp.eq.s32.totalorder %s14, 1
    %p100 = por %p98, %p99
    %p101 = scmp.ne.s32.totalorder %s90, %s91
    %p102 = scmp.eq.s32.totalorder %s14, 0
    %p103 = por %p101, %p102
    %p104 = scmp.ne.s32.totalorder %s90, %s91
    %p105 = scmp.eq.s32.totalorder %s15, 1
    %p106 = por %p104, %p105
    %p108 = scmp.ne.s32.totalorder %s91, %s107
    %p109 = scmp.eq.s32.totalorder %s15, 0
    %p110 = por %p108, %p109
    %p111 = scmp.le.s32.totalorder 1, %s9
    %p112 = scmp.lt.s32.totalorder %s9, 3
    %p113 = pnand %p111, %p112
    %p114 = pneg %p113
    // Predicated region
    $region9: #{fcn_forward.13} parent=5 // pred_check
      _
    $region10: #{fcn_forward.13} parent=5 // pred_check_branch
      %116 = sbr.rel (%p113) target = $region12
    $region11: #{fcn_forward.13} parent=5 // pred_region
      %s117 = ssub.s32 %s9, 1
      // Predicated region
      $region13: #{fcn_forward.13} parent=11 // pred_check
        %p118 = pneg %p56
      $region14: #{fcn_forward.13} parent=11 // pred_check_branch
        %120 = sbr.rel (%p118) target = $region16
      $region15: #{fcn_forward.13} parent=11 // pred_region
        _
      $region16: #{fcn_forward.13} parent=11 // pred_fallthru
        _
      // Predicated region
      $region17: #{fcn_forward.13} parent=11 // pred_check
        %p121 = pneg %p77
      $region18: #{fcn_forward.13} parent=11 // pred_check_branch
        %123 = sbr.rel (%p121) target = $region20
      $region19: #{fcn_forward.13} parent=11 // pred_region
        _
      $region20: #{fcn_forward.13} parent=11 // pred_fallthru
        _
    $region12: #{fcn_forward.13} parent=5 // pred_fallthru
      _
    %p124 = scmp.lt.s32.totalorder %s9, 2
    // Predicated region
    $region21: #{fcn_forward.13} parent=5 // pred_check
      %p125 = pneg %p124
    $region22: #{fcn_forward.13} parent=5 // pred_check_branch
      %127 = sbr.rel (%p125) target = $region24
    $region23: #{fcn_forward.13} parent=5 // pred_region
      // Predicated region
      $region25: #{fcn_forward.13} parent=23 // pred_check
        %p128 = pneg %p29
      $region26: #{fcn_forward.13} parent=23 // pred_check_branch
        %130 = sbr.rel (%p128) target = $region28
      $region27: #{fcn_forward.13} parent=23 // pred_region
        %s131 = smul.u32 128, %s9
        %p132 = scmp.lt.s32.totalorder %s131, 255
        %s133 = scalar_select %p132, %s131, 255
        %s134 = smul.addr %s133, 4
        %s135 = scalar_lea.vmem %s0, %s134
        %s136 = smul.u32 128, %s9
      $region28: #{fcn_forward.13} parent=23 // pred_fallthru
        _
    $region24: #{fcn_forward.13} parent=5 // pred_fallthru
      _
    %p137 = scmp.le.s32.totalorder 1, %s9
    %p138 = scmp.lt.s32.totalorder %s9, 3
    %p139 = pnand %p137, %p138
    %p140 = pneg %p139
    // Predicated region
    $region29: #{fcn_forward.13} parent=5 // pred_check
      _
    $region30: #{fcn_forward.13} parent=5 // pred_check_branch
      %142 = sbr.rel (%p139) target = $region32
    $region31: #{fcn_forward.13} parent=5 // pred_region
      %s143 = ssub.s32 %s9, 1
      %s144 = smul.u32 128, %s14
      %p145 = scmp.lt.s32.totalorder %s144, 255
      %s146 = scalar_select %p145, %s144, 255
      %s147 = smul.addr %s146, 4
      %s148 = scalar_lea.vmem %s0, %s147
      %p149 = pneg %p35
      %p150 = pneg %p32
      %p151 = pneg %p56
      %p152 = pneg %p53
      %p153 = pneg %p77
      %p154 = pneg %p74
      %p155 = pneg %p103
      %p156 = pneg %p100
      %s157 = smul.u32 128, %s14
      %p158 = scmp.lt.s32.totalorder %s157, 255
      %s159 = scalar_select %p158, %s157, 255
      %s160 = smul.addr %s159, 8
      %s161 = scalar_lea.vmem %s3, %s160
      %s162 = smul.u32 128, %s14
      %p163 = scmp.lt.s32.totalorder %s162, 255
      %s164 = scalar_select %p163, %s162, 255
      %s165 = smul.addr %s164, 4
      %s166 = scalar_lea.vmem %s0, %s165
      %s167 = smul.u32 128, %s14
      %s168 = smul.u32 128, %s14
      %p169 = scmp.lt.s32.totalorder %s168, 255
      %s170 = scalar_select %p169, %s168, 255
      %s171 = smul.addr %s170, 8
      %s172 = scalar_lea.vmem %s3, %s171
      %s173 = smul.u32 128, %s14
      %v175 = vld [vmem:[%s166] sm:$0xf]
      %v176 = vld [vmem:[%s166 + $0x4] sm:$0xf]
      %v177 = vld [vmem:[%s166 + $0x8] sm:$0xf]
      %v178 = vld [vmem:[%s166 + $0xc] sm:$0xf]
      %v179 = vld [vmem:[%s166 + $0x10] sm:$0xf]
      %v180 = vld [vmem:[%s166 + $0x14] sm:$0xf]
      %v181 = vld [vmem:[%s166 + $0x18] sm:$0xf]
      %v182 = vld [vmem:[%s166 + $0x1c] sm:$0xf]
      %v183 = vld [vmem:[%s166 + $0x20] sm:$0xf]
      %v184 = vld [vmem:[%s166 + $0x24] sm:$0xf]
      %v185 = vld [vmem:[%s166 + $0x28] sm:$0xf]
      %v186 = vld [vmem:[%s166 + $0x2c] sm:$0xf]
      %v187 = vld [vmem:[%s166 + $0x30] sm:$0xf]
      %v188 = vld [vmem:[%s166 + $0x34] sm:$0xf]
      %v189 = vld [vmem:[%s166 + $0x38] sm:$0xf]
      %v190 = vld [vmem:[%s166 + $0x3c] sm:$0xf]
      %v191 = vld [vmem:[%s166 + $0x40] sm:$0xf]
      %v192 = vld [vmem:[%s166 + $0x44] sm:$0xf]
      %v193 = vld [vmem:[%s166 + $0x48] sm:$0xf]
      %v194 = vld [vmem:[%s166 + $0x4c] sm:$0xf]
      %v195 = vld [vmem:[%s166 + $0x50] sm:$0xf]
      %v196 = vld [vmem:[%s166 + $0x54] sm:$0xf]
      %v197 = vld [vmem:[%s166 + $0x58] sm:$0xf]
      %v198 = vld [vmem:[%s166 + $0x5c] sm:$0xf]
      %v199 = vld [vmem:[%s166 + $0x60] sm:$0xf]
      %v200 = vld [vmem:[%s166 + $0x64] sm:$0xf]
      %v201 = vld [vmem:[%s166 + $0x68] sm:$0xf]
      %v202 = vld [vmem:[%s166 + $0x6c] sm:$0xf]
      %v203 = vld [vmem:[%s166 + $0x70] sm:$0xf]
      %v204 = vld [vmem:[%s166 + $0x74] sm:$0xf]
      %v205 = vld [vmem:[%s166 + $0x78] sm:$0xf]
      %v206 = vld [vmem:[%s166 + $0x7c] sm:$0xf]
      %v207 = vld [vmem:[%s166 + $0x80] sm:$0xf]
      %v208 = vld [vmem:[%s166 + $0x84] sm:$0xf]
      %v209 = vld [vmem:[%s166 + $0x88] sm:$0xf]
      %v210 = vld [vmem:[%s166 + $0x8c] sm:$0xf]
      %v211 = vld [vmem:[%s166 + $0x90] sm:$0xf]
      %v212 = vld [vmem:[%s166 + $0x94] sm:$0xf]
      %v213 = vld [vmem:[%s166 + $0x98] sm:$0xf]
      %v214 = vld [vmem:[%s166 + $0x9c] sm:$0xf]
      %v215 = vld [vmem:[%s166 + $0xa0] sm:$0xf]
      %v216 = vld [vmem:[%s166 + $0xa4] sm:$0xf]
      %v217 = vld [vmem:[%s166 + $0xa8] sm:$0xf]
      %v218 = vld [vmem:[%s166 + $0xac] sm:$0xf]
      %v219 = vld [vmem:[%s166 + $0xb0] sm:$0xf]
      %v220 = vld [vmem:[%s166 + $0xb4] sm:$0xf]
      %v221 = vld [vmem:[%s166 + $0xb8] sm:$0xf]
      %v222 = vld [vmem:[%s166 + $0xbc] sm:$0xf]
      %v223 = vld [vmem:[%s166 + $0xc0] sm:$0xf]
      %v224 = vld [vmem:[%s166 + $0xc4] sm:$0xf]
      %v225 = vld [vmem:[%s166 + $0xc8] sm:$0xf]
      %v226 = vld [vmem:[%s166 + $0xcc] sm:$0xf]
      %v227 = vld [vmem:[%s166 + $0xd0] sm:$0xf]
      %v228 = vld [vmem:[%s166 + $0xd4] sm:$0xf]
      %v229 = vld [vmem:[%s166 + $0xd8] sm:$0xf]
      %v230 = vld [vmem:[%s166 + $0xdc] sm:$0xf]
      %v231 = vld [vmem:[%s166 + $0xe0] sm:$0xf]
      %v232 = vld [vmem:[%s166 + $0xe4] sm:$0xf]
      %v233 = vld [vmem:[%s166 + $0xe8] sm:$0xf]
      %v234 = vld [vmem:[%s166 + $0xec] sm:$0xf]
      %v235 = vld [vmem:[%s166 + $0xf0] sm:$0xf]
      %v236 = vld [vmem:[%s166 + $0xf4] sm:$0xf]
      %v237 = vld [vmem:[%s166 + $0xf8] sm:$0xf]
      %v238 = vld [vmem:[%s166 + $0xfc] sm:$0xf]
      %v239 = vld [vmem:[%s166 + $0x100] sm:$0xf]
      %v240 = vld [vmem:[%s166 + $0x104] sm:$0xf]
      %v241 = vld [vmem:[%s166 + $0x108] sm:$0xf]
      %v242 = vld [vmem:[%s166 + $0x10c] sm:$0xf]
      %v243 = vld [vmem:[%s166 + $0x110] sm:$0xf]
      %v244 = vld [vmem:[%s166 + $0x114] sm:$0xf]
      %v245 = vld [vmem:[%s166 + $0x118] sm:$0xf]
      %v246 = vld [vmem:[%s166 + $0x11c] sm:$0xf]
      %v247 = vld [vmem:[%s166 + $0x120] sm:$0xf]
      %v248 = vld [vmem:[%s166 + $0x124] sm:$0xf]
      %v249 = vld [vmem:[%s166 + $0x128] sm:$0xf]
      %v250 = vld [vmem:[%s166 + $0x12c] sm:$0xf]
      %v251 = vld [vmem:[%s166 + $0x130] sm:$0xf]
      %v252 = vld [vmem:[%s166 + $0x134] sm:$0xf]
      %v253 = vld [vmem:[%s166 + $0x138] sm:$0xf]
      %v254 = vld [vmem:[%s166 + $0x13c] sm:$0xf]
      %v255 = vld [vmem:[%s166 + $0x140] sm:$0xf]
      %v256 = vld [vmem:[%s166 + $0x144] sm:$0xf]
      %v257 = vld [vmem:[%s166 + $0x148] sm:$0xf]
      %v258 = vld [vmem:[%s166 + $0x14c] sm:$0xf]
      %v259 = vld [vmem:[%s166 + $0x150] sm:$0xf]
      %v260 = vld [vmem:[%s166 + $0x154] sm:$0xf]
      %v261 = vld [vmem:[%s166 + $0x158] sm:$0xf]
      %v262 = vld [vmem:[%s166 + $0x15c] sm:$0xf]
      %v263 = vld [vmem:[%s166 + $0x160] sm:$0xf]
      %v264 = vld [vmem:[%s166 + $0x164] sm:$0xf]
      %v265 = vld [vmem:[%s166 + $0x168] sm:$0xf]
      %v266 = vld [vmem:[%s166 + $0x16c] sm:$0xf]
      %v267 = vld [vmem:[%s166 + $0x170] sm:$0xf]
      %v268 = vld [vmem:[%s166 + $0x174] sm:$0xf]
      %v269 = vld [vmem:[%s166 + $0x178] sm:$0xf]
      %v270 = vld [vmem:[%s166 + $0x17c] sm:$0xf]
      %v271 = vld [vmem:[%s166 + $0x180] sm:$0xf]
      %v272 = vld [vmem:[%s166 + $0x184] sm:$0xf]
      %v273 = vld [vmem:[%s166 + $0x188] sm:$0xf]
      %v274 = vld [vmem:[%s166 + $0x18c] sm:$0xf]
      %v275 = vld [vmem:[%s166 + $0x190] sm:$0xf]
      %v276 = vld [vmem:[%s166 + $0x194] sm:$0xf]
      %v277 = vld [vmem:[%s166 + $0x198] sm:$0xf]
      %v278 = vld [vmem:[%s166 + $0x19c] sm:$0xf]
      %v279 = vld [vmem:[%s166 + $0x1a0] sm:$0xf]
      %v280 = vld [vmem:[%s166 + $0x1a4] sm:$0xf]
      %v281 = vld [vmem:[%s166 + $0x1a8] sm:$0xf]
      %v282 = vld [vmem:[%s166 + $0x1ac] sm:$0xf]
      %v283 = vld [vmem:[%s166 + $0x1b0] sm:$0xf]
      %v284 = vld [vmem:[%s166 + $0x1b4] sm:$0xf]
      %v285 = vld [vmem:[%s166 + $0x1b8] sm:$0xf]
      %v286 = vld [vmem:[%s166 + $0x1bc] sm:$0xf]
      %v287 = vld [vmem:[%s166 + $0x1c0] sm:$0xf]
      %v288 = vld [vmem:[%s166 + $0x1c4] sm:$0xf]
      %v289 = vld [vmem:[%s166 + $0x1c8] sm:$0xf]
      %v290 = vld [vmem:[%s166 + $0x1cc] sm:$0xf]
      %v291 = vld [vmem:[%s166 + $0x1d0] sm:$0xf]
      %v292 = vld [vmem:[%s166 + $0x1d4] sm:$0xf]
      %v293 = vld [vmem:[%s166 + $0x1d8] sm:$0xf]
      %v294 = vld [vmem:[%s166 + $0x1dc] sm:$0xf]
      %v295 = vld [vmem:[%s166 + $0x1e0] sm:$0xf]
      %v296 = vld [vmem:[%s166 + $0x1e4] sm:$0xf]
      %v297 = vld [vmem:[%s166 + $0x1e8] sm:$0xf]
      %v298 = vld [vmem:[%s166 + $0x1ec] sm:$0xf]
      %v299 = vld [vmem:[%s166 + $0x1f0] sm:$0xf]
      %v300 = vld [vmem:[%s166 + $0x1f4] sm:$0xf]
      %v301 = vld [vmem:[%s166 + $0x1f8] sm:$0xf]
      %v302 = vld [vmem:[%s166 + $0x1fc] sm:$0xf]
      %v303 = vld [vmem:[%s1] sm:$0x3]
      %v304 = vld [vmem:[%s2] sm:$0x1]
      %v306 = vlaneseq
      %v307 = vshrl.u32 %v306, 7
      %v308 = vsub.s32 0, %v307
      %v309 = vrot.slane %v304, %v308
      %v439 = vunpack.c.l.b16 %v175
      %v440 = vunpack.c.l.b16 %v176
      %v441 = vunpack.c.l.b16 %v177
      %v442 = vunpack.c.l.b16 %v178
      %v443 = vunpack.c.l.b16 %v179
      %v444 = vunpack.c.l.b16 %v180
      %v445 = vunpack.c.l.b16 %v181
      %v446 = vunpack.c.l.b16 %v182
      %v447 = vunpack.c.l.b16 %v183
      %v448 = vunpack.c.l.b16 %v184
      %v449 = vunpack.c.l.b16 %v185
      %v450 = vunpack.c.l.b16 %v186
      %v451 = vunpack.c.l.b16 %v187
      %v452 = vunpack.c.l.b16 %v188
      %v453 = vunpack.c.l.b16 %v189
      %v454 = vunpack.c.l.b16 %v190
      %v455 = vunpack.c.l.b16 %v191
      %v456 = vunpack.c.l.b16 %v192
      %v457 = vunpack.c.l.b16 %v193
      %v458 = vunpack.c.l.b16 %v194
      %v459 = vunpack.c.l.b16 %v195
      %v460 = vunpack.c.l.b16 %v196
      %v461 = vunpack.c.l.b16 %v197
      %v462 = vunpack.c.l.b16 %v198
      %v463 = vunpack.c.l.b16 %v199
      %v464 = vunpack.c.l.b16 %v200
      %v465 = vunpack.c.l.b16 %v201
      %v466 = vunpack.c.l.b16 %v202
      %v467 = vunpack.c.l.b16 %v203
      %v468 = vunpack.c.l.b16 %v204
      %v469 = vunpack.c.l.b16 %v205
      %v470 = vunpack.c.l.b16 %v206
      %v471 = vunpack.c.l.b16 %v207
      %v472 = vunpack.c.l.b16 %v208
      %v473 = vunpack.c.l.b16 %v209
      %v474 = vunpack.c.l.b16 %v210
      %v475 = vunpack.c.l.b16 %v211
      %v476 = vunpack.c.l.b16 %v212
      %v477 = vunpack.c.l.b16 %v213
      %v478 = vunpack.c.l.b16 %v214
      %v479 = vunpack.c.l.b16 %v215
      %v480 = vunpack.c.l.b16 %v216
      %v481 = vunpack.c.l.b16 %v217
      %v482 = vunpack.c.l.b16 %v218
      %v483 = vunpack.c.l.b16 %v219
      %v484 = vunpack.c.l.b16 %v220
      %v485 = vunpack.c.l.b16 %v221
      %v486 = vunpack.c.l.b16 %v222
      %v487 = vunpack.c.l.b16 %v223
      %v488 = vunpack.c.l.b16 %v224
      %v489 = vunpack.c.l.b16 %v225
      %v490 = vunpack.c.l.b16 %v226
      %v491 = vunpack.c.l.b16 %v227
      %v492 = vunpack.c.l.b16 %v228
      %v493 = vunpack.c.l.b16 %v229
      %v494 = vunpack.c.l.b16 %v230
      %v495 = vunpack.c.l.b16 %v231
      %v496 = vunpack.c.l.b16 %v232
      %v497 = vunpack.c.l.b16 %v233
      %v498 = vunpack.c.l.b16 %v234
      %v499 = vunpack.c.l.b16 %v235
      %v500 = vunpack.c.l.b16 %v236
      %v501 = vunpack.c.l.b16 %v237
      %v502 = vunpack.c.l.b16 %v238
      %v503 = vunpack.c.l.b16 %v239
      %v504 = vunpack.c.l.b16 %v240
      %v505 = vunpack.c.l.b16 %v241
      %v506 = vunpack.c.l.b16 %v242
      %v507 = vunpack.c.l.b16 %v243
      %v508 = vunpack.c.l.b16 %v244
      %v509 = vunpack.c.l.b16 %v245
      %v510 = vunpack.c.l.b16 %v246
      %v511 = vunpack.c.l.b16 %v247
      %v512 = vunpack.c.l.b16 %v248
      %v513 = vunpack.c.l.b16 %v249
      %v514 = vunpack.c.l.b16 %v250
      %v515 = vunpack.c.l.b16 %v251
      %v516 = vunpack.c.l.b16 %v252
      %v517 = vunpack.c.l.b16 %v253
      %v518 = vunpack.c.l.b16 %v254
      %v519 = vunpack.c.l.b16 %v255
      %v520 = vunpack.c.l.b16 %v256
      %v521 = vunpack.c.l.b16 %v257
      %v522 = vunpack.c.l.b16 %v258
      %v523 = vunpack.c.l.b16 %v259
      %v524 = vunpack.c.l.b16 %v260
      %v525 = vunpack.c.l.b16 %v261
      %v526 = vunpack.c.l.b16 %v262
      %v527 = vunpack.c.l.b16 %v263
      %v528 = vunpack.c.l.b16 %v264
      %v529 = vunpack.c.l.b16 %v265
      %v530 = vunpack.c.l.b16 %v266
      %v531 = vunpack.c.l.b16 %v267
      %v532 = vunpack.c.l.b16 %v268
      %v533 = vunpack.c.l.b16 %v269
      %v534 = vunpack.c.l.b16 %v270
      %v535 = vunpack.c.l.b16 %v271
      %v536 = vunpack.c.l.b16 %v272
      %v537 = vunpack.c.l.b16 %v273
      %v538 = vunpack.c.l.b16 %v274
      %v539 = vunpack.c.l.b16 %v275
      %v540 = vunpack.c.l.b16 %v276
      %v541 = vunpack.c.l.b16 %v277
      %v542 = vunpack.c.l.b16 %v278
      %v543 = vunpack.c.l.b16 %v279
      %v544 = vunpack.c.l.b16 %v280
      %v545 = vunpack.c.l.b16 %v281
      %v546 = vunpack.c.l.b16 %v282
      %v547 = vunpack.c.l.b16 %v283
      %v548 = vunpack.c.l.b16 %v284
      %v549 = vunpack.c.l.b16 %v285
      %v550 = vunpack.c.l.b16 %v286
      %v551 = vunpack.c.l.b16 %v287
      %v552 = vunpack.c.l.b16 %v288
      %v553 = vunpack.c.l.b16 %v289
      %v554 = vunpack.c.l.b16 %v290
      %v555 = vunpack.c.l.b16 %v291
      %v556 = vunpack.c.l.b16 %v292
      %v557 = vunpack.c.l.b16 %v293
      %v558 = vunpack.c.l.b16 %v294
      %v559 = vunpack.c.l.b16 %v295
      %v560 = vunpack.c.l.b16 %v296
      %v561 = vunpack.c.l.b16 %v297
      %v562 = vunpack.c.l.b16 %v298
      %v563 = vunpack.c.l.b16 %v299
      %v564 = vunpack.c.l.b16 %v300
      %v565 = vunpack.c.l.b16 %v301
      %v566 = vunpack.c.l.b16 %v302
      %v567 = vpack.c.b16 %v440, %v439
      %v568 = vpack.c.b16 %v442, %v441
      %v569 = vpack.c.b16 %v444, %v443
      %v570 = vpack.c.b16 %v446, %v445
      %v571 = vpack.c.b16 %v448, %v447
      %v572 = vpack.c.b16 %v450, %v449
      %v573 = vpack.c.b16 %v452, %v451
      %v574 = vpack.c.b16 %v454, %v453
      %v575 = vpack.c.b16 %v456, %v455
      %v576 = vpack.c.b16 %v458, %v457
      %v577 = vpack.c.b16 %v460, %v459
      %v578 = vpack.c.b16 %v462, %v461
      %v579 = vpack.c.b16 %v464, %v463
      %v580 = vpack.c.b16 %v466, %v465
      %v581 = vpack.c.b16 %v468, %v467
      %v582 = vpack.c.b16 %v470, %v469
      %v583 = vpack.c.b16 %v472, %v471
      %v584 = vpack.c.b16 %v474, %v473
      %v585 = vpack.c.b16 %v476, %v475
      %v586 = vpack.c.b16 %v478, %v477
      %v587 = vpack.c.b16 %v480, %v479
      %v588 = vpack.c.b16 %v482, %v481
      %v589 = vpack.c.b16 %v484, %v483
      %v590 = vpack.c.b16 %v486, %v485
      %v591 = vpack.c.b16 %v488, %v487
      %v592 = vpack.c.b16 %v490, %v489
      %v593 = vpack.c.b16 %v492, %v491
      %v594 = vpack.c.b16 %v494, %v493
      %v595 = vpack.c.b16 %v496, %v495
      %v596 = vpack.c.b16 %v498, %v497
      %v597 = vpack.c.b16 %v500, %v499
      %v598 = vpack.c.b16 %v502, %v501
      %v599 = vpack.c.b16 %v504, %v503
      %v600 = vpack.c.b16 %v506, %v505
      %v601 = vpack.c.b16 %v508, %v507
      %v602 = vpack.c.b16 %v510, %v509
      %v603 = vpack.c.b16 %v512, %v511
      %v604 = vpack.c.b16 %v514, %v513
      %v605 = vpack.c.b16 %v516, %v515
      %v606 = vpack.c.b16 %v518, %v517
      %v607 = vpack.c.b16 %v520, %v519
      %v608 = vpack.c.b16 %v522, %v521
      %v609 = vpack.c.b16 %v524, %v523
      %v610 = vpack.c.b16 %v526, %v525
      %v611 = vpack.c.b16 %v528, %v527
      %v612 = vpack.c.b16 %v530, %v529
      %v613 = vpack.c.b16 %v532, %v531
      %v614 = vpack.c.b16 %v534, %v533
      %v615 = vpack.c.b16 %v536, %v535
      %v616 = vpack.c.b16 %v538, %v537
      %v617 = vpack.c.b16 %v540, %v539
      %v618 = vpack.c.b16 %v542, %v541
      %v619 = vpack.c.b16 %v544, %v543
      %v620 = vpack.c.b16 %v546, %v545
      %v621 = vpack.c.b16 %v548, %v547
      %v622 = vpack.c.b16 %v550, %v549
      %v623 = vpack.c.b16 %v552, %v551
      %v624 = vpack.c.b16 %v554, %v553
      %v625 = vpack.c.b16 %v556, %v555
      %v626 = vpack.c.b16 %v558, %v557
      %v627 = vpack.c.b16 %v560, %v559
      %v628 = vpack.c.b16 %v562, %v561
      %v629 = vpack.c.b16 %v564, %v563
      %v630 = vpack.c.b16 %v566, %v565
      %vm631 = vcmask 31744
      %v633 = vsel %vm631, %v567, 0
      %v636 = vsel %vm631, %v568, 0
      %v639 = vsel %vm631, %v569, 0
      %v642 = vsel %vm631, %v570, 0
      %v645 = vsel %vm631, %v571, 0
      %v648 = vsel %vm631, %v572, 0
      %v651 = vsel %vm631, %v573, 0
      %v654 = vsel %vm631, %v574, 0
      %v657 = vsel %vm631, %v575, 0
      %v660 = vsel %vm631, %v576, 0
      %v663 = vsel %vm631, %v577, 0
      %v666 = vsel %vm631, %v578, 0
      %v669 = vsel %vm631, %v579, 0
      %v672 = vsel %vm631, %v580, 0
      %v675 = vsel %vm631, %v581, 0
      %v678 = vsel %vm631, %v582, 0
      %v681 = vsel %vm631, %v583, 0
      %v684 = vsel %vm631, %v584, 0
      %v687 = vsel %vm631, %v585, 0
      %v690 = vsel %vm631, %v586, 0
      %v693 = vsel %vm631, %v587, 0
      %v696 = vsel %vm631, %v588, 0
      %v699 = vsel %vm631, %v589, 0
      %v702 = vsel %vm631, %v590, 0
      %v705 = vsel %vm631, %v591, 0
      %v708 = vsel %vm631, %v592, 0
      %v711 = vsel %vm631, %v593, 0
      %v714 = vsel %vm631, %v594, 0
      %v717 = vsel %vm631, %v595, 0
      %v720 = vsel %vm631, %v596, 0
      %v723 = vsel %vm631, %v597, 0
      %v726 = vsel %vm631, %v598, 0
      %v729 = vsel %vm631, %v599, 0
      %v732 = vsel %vm631, %v600, 0
      %v735 = vsel %vm631, %v601, 0
      %v738 = vsel %vm631, %v602, 0
      %v741 = vsel %vm631, %v603, 0
      %v744 = vsel %vm631, %v604, 0
      %v747 = vsel %vm631, %v605, 0
      %v750 = vsel %vm631, %v606, 0
      %v753 = vsel %vm631, %v607, 0
      %v756 = vsel %vm631, %v608, 0
      %v759 = vsel %vm631, %v609, 0
      %v762 = vsel %vm631, %v610, 0
      %v765 = vsel %vm631, %v611, 0
      %v768 = vsel %vm631, %v612, 0
      %v771 = vsel %vm631, %v613, 0
      %v774 = vsel %vm631, %v614, 0
      %v777 = vsel %vm631, %v615, 0
      %v780 = vsel %vm631, %v616, 0
      %v783 = vsel %vm631, %v617, 0
      %v786 = vsel %vm631, %v618, 0
      %v789 = vsel %vm631, %v619, 0
      %v792 = vsel %vm631, %v620, 0
      %v795 = vsel %vm631, %v621, 0
      %v798 = vsel %vm631, %v622, 0
      %v801 = vsel %vm631, %v623, 0
      %v804 = vsel %vm631, %v624, 0
      %v807 = vsel %vm631, %v625, 0
      %v810 = vsel %vm631, %v626, 0
      %v813 = vsel %vm631, %v627, 0
      %v816 = vsel %vm631, %v628, 0
      %v819 = vsel %vm631, %v629, 0
      %v822 = vsel %vm631, %v630, 0
      %vm824 = vcmask 1041408
      %v826 = vsel %vm824, %v303, 0
      %828 = vmatprep.subr.bf16.mxu0 0
      %829 = vmatpush1.bf16.msra.mxu0 %v826
      %830 = vmatprep.subr.bf16.mxu0 0
      %831 = vmatpush1.bf16.msra.mxu0 0
      %832 = vmatprep.subr.bf16.mxu0 0
      %833 = vmatpush1.bf16.msra.mxu0 0
      %834 = vmatprep.subr.bf16.mxu0 0
      %835 = vmatpush1.bf16.msra.mxu0 0
      %836 = vmatprep.subr.bf16.mxu0 0
      %837 = vmatpush1.bf16.msra.mxu0 0
      %838 = vmatprep.subr.bf16.mxu0 0
      %839 = vmatpush1.bf16.msra.mxu0 0
      %840 = vmatprep.subr.bf16.mxu0 0
      %841 = vmatpush1.bf16.msra.mxu0 0
      %842 = vmatprep.subr.bf16.mxu0 0
      %843 = vmatpush1.bf16.msra.mxu0 0
      %844 = vmatprep.subr.bf16.mxu0 0
      %845 = vmatpush1.bf16.msra.mxu0 0
      %846 = vmatprep.subr.bf16.mxu0 0
      %847 = vmatpush1.bf16.msra.mxu0 0
      %848 = vmatprep.subr.bf16.mxu0 0
      %849 = vmatpush1.bf16.msra.mxu0 0
      %850 = vmatprep.subr.bf16.mxu0 0
      %851 = vmatpush1.bf16.msra.mxu0 0
      %852 = vmatprep.subr.bf16.mxu0 0
      %853 = vmatpush1.bf16.msra.mxu0 0
      %854 = vmatprep.subr.bf16.mxu0 0
      %855 = vmatpush1.bf16.msra.mxu0 0
      %856 = vmatprep.subr.bf16.mxu0 0
      %857 = vmatpush1.bf16.msra.mxu0 0
      %858 = vmatprep.subr.bf16.mxu0 0
      %859 = vmatpush1.bf16.msra.mxu0 0
      %860 = vmatprep.mubr.bf16.mxu0 0
      %861 = vmatmul.mubr.bf16.gmra.mrb[0].mxu0 %v633
      %v862 = vpop.f32.mrb[0].mxu0
      %v863 = vadd.f32 %v309, %v862
      %v864 = vpop.f32.mrb[0].mxu0
      %v865 = vpop.f32.mrb[0].mxu0
      %v866 = vadd.f32 %v309, %v865
      %v867 = vpop.f32.mrb[0].mxu0
      %868 = vmatprep.mubr.bf16.mxu0 0
      %869 = vmatmul.mubr.bf16.gmra.mrb[0].mxu0 %v636
      %v870 = vpop.f32.mrb[0].mxu0
      %v871 = vadd.f32 %v309, %v870
      %v872 = vpop.f32.mrb[0].mxu0
      %v873 = vpop.f32.mrb[0].mxu0
      %v874 = vadd.f32 %v309, %v873
      %v875 = vpop.f32.mrb[0].mxu0
      %876 = vmatprep.mubr.bf16.mxu0 0
      %877 = vmatmul.mubr.bf16.gmra.mrb[0].mxu0 %v639
      %v878 = vpop.f32.mrb[0].mxu0
      %v879 = vadd.f32 %v309, %v878
      %v880 = vpop.f32.mrb[0].mxu0
      %v881 = vpop.f32.mrb[0].mxu0
      %v882 = vadd.f32 %v309, %v881
      %v883 = vpop.f32.mrb[0].mxu0
      %884 = vmatprep.mubr.bf16.mxu0 0
      %885 = vmatmul.mubr.bf16.gmra.mrb[0].mxu0 %v642
      %v886 = vpop.f32.mrb[0].mxu0
      %v887 = vadd.f32 %v309, %v886
      %v888 = vpop.f32.mrb[0].mxu0
      %v889 = vpop.f32.mrb[0].mxu0
      %v890 = vadd.f32 %v309, %v889
      %v891 = vpop.f32.mrb[0].mxu0
      %892 = vmatprep.mubr.bf16.mxu0 0
      %893 = vmatmul.mubr.bf16.gmra.mrb[0].mxu0 %v645
      %v894 = vpop.f32.mrb[0].mxu0
      %v895 = vadd.f32 %v309, %v894
      %v896 = vpop.f32.mrb[0].mxu0
      %v897 = vpop.f32.mrb[0].mxu0
      %v898 = vadd.f32 %v309, %v897
      %v899 = vpop.f32.mrb[0].mxu0
      %900 = vmatprep.mubr.bf16.mxu0 0
      %901 = vmatmul.mubr.bf16.gmra.mrb[0].mxu0 %v648
      %v902 = vpop.f32.mrb[0].mxu0
      %v903 = vadd.f32 %v309, %v902
      %v904 = vpop.f32.mrb[0].mxu0
      %v905 = vpop.f32.mrb[0].mxu0
      %v906 = vadd.f32 %v309, %v905
      %v907 = vpop.f32.mrb[0].mxu0
      %908 = vmatprep.mubr.bf16.mxu0 0
      %909 = vmatmul.mubr.bf16.gmra.mrb[0].mxu0 %v651
      %v910 = vpop.f32.mrb[0].mxu0
      %v911 = vadd.f32 %v309, %v910
      %v912 = vpop.f32.mrb[0].mxu0
      %v913 = vpop.f32.mrb[0].mxu0
      %v914 = vadd.f32 %v309, %v913
      %v915 = vpop.f32.mrb[0].mxu0
      %916 = vmatprep.mubr.bf16.mxu0 0
      %917 = vmatmul.mubr.bf16.gmra.mrb[0].mxu0 %v654
      %v918 = vpop.f32.mrb[0].mxu0
      %v919 = vadd.f32 %v309, %v918
      %v920 = vpop.f32.mrb[0].mxu0
      %v921 = vpop.f32.mrb[0].mxu0
      %v922 = vadd.f32 %v309, %v921
      %v923 = vpop.f32.mrb[0].mxu0
      %924 = vmatprep.mubr.bf16.mxu0 0
      %925 = vmatmul.mubr.bf16.gmra.mrb[0].mxu0 %v657
      %v926 = vpop.f32.mrb[0].mxu0
      %v927 = vadd.f32 %v309, %v926
      %v928 = vpop.f32.mrb[0].mxu0
      %v929 = vpop.f32.mrb[0].mxu0
      %v930 = vadd.f32 %v309, %v929
      %v931 = vpop.f32.mrb[0].mxu0
      %932 = vmatprep.mubr.bf16.mxu0 0
      %933 = vmatmul.mubr.bf16.gmra.mrb[0].mxu0 %v660
      %v934 = vpop.f32.mrb[0].mxu0
      %v935 = vadd.f32 %v309, %v934
      %v936 = vpop.f32.mrb[0].mxu0
      %v937 = vpop.f32.mrb[0].mxu0
      %v938 = vadd.f32 %v309, %v937
      %v939 = vpop.f32.mrb[0].mxu0
      %940 = vmatprep.mubr.bf16.mxu0 0
      %941 = vmatmul.mubr.bf16.gmra.mrb[0].mxu0 %v663
      %v942 = vpop.f32.mrb[0].mxu0
      %v943 = vadd.f32 %v309, %v942
      %v944 = vpop.f32.mrb[0].mxu0
      %v945 = vpop.f32.mrb[0].mxu0
      %v946 = vadd.f32 %v309, %v945
      %v947 = vpop.f32.mrb[0].mxu0
      %948 = vmatprep.mubr.bf16.mxu0 0
      %949 = vmatmul.mubr.bf16.gmra.mrb[0].mxu0 %v666
      %v950 = vpop.f32.mrb[0].mxu0
      %v951 = vadd.f32 %v309, %v950
      %v952 = vpop.f32.mrb[0].mxu0
      %v953 = vpop.f32.mrb[0].mxu0
      %v954 = vadd.f32 %v309, %v953
      %v955 = vpop.f32.mrb[0].mxu0
      %956 = vmatprep.mubr.bf16.mxu0 0
      %957 = vmatmul.mubr.bf16.gmra.mrb[0].mxu0 %v669
      %v958 = vpop.f32.mrb[0].mxu0
      %v959 = vadd.f32 %v309, %v958
      %v960 = vpop.f32.mrb[0].mxu0
      %v961 = vpop.f32.mrb[0].mxu0
      %v962 = vadd.f32 %v309, %v961
      %v963 = vpop.f32.mrb[0].mxu0
      %964 = vmatprep.mubr.bf16.mxu0 0
      %965 = vmatmul.mubr.bf16.gmra.mrb[0].mxu0 %v672
      %v966 = vpop.f32.mrb[0].mxu0
      %v967 = vadd.f32 %v309, %v966
      %v968 = vpop.f32.mrb[0].mxu0
      %v969 = vpop.f32.mrb[0].mxu0
      %v970 = vadd.f32 %v309, %v969
      %v971 = vpop.f32.mrb[0].mxu0
      %972 = vmatprep.mubr.bf16.mxu0 0
      %973 = vmatmul.mubr.bf16.gmra.mrb[0].mxu0 %v675
      %v974 = vpop.f32.mrb[0].mxu0
      %v975 = vadd.f32 %v309, %v974
      %v976 = vpop.f32.mrb[0].mxu0
      %v977 = vpop.f32.mrb[0].mxu0
      %v978 = vadd.f32 %v309, %v977
      %v979 = vpop.f32.mrb[0].mxu0
      %980 = vmatprep.mubr.bf16.mxu0 0
      %981 = vmatmul.mubr.bf16.gmra.mrb[0].mxu0 %v678
      %v982 = vpop.f32.mrb[0].mxu0
      %v983 = vadd.f32 %v309, %v982
      %v984 = vpop.f32.mrb[0].mxu0
      %v985 = vpop.f32.mrb[0].mxu0
      %v986 = vadd.f32 %v309, %v985
      %v987 = vpop.f32.mrb[0].mxu0
      %988 = vmatprep.mubr.bf16.mxu0 0
      %989 = vmatmul.mubr.bf16.gmra.mrb[0].mxu0 %v681
      %v990 = vpop.f32.mrb[0].mxu0
      %v991 = vadd.f32 %v309, %v990
      %v992 = vpop.f32.mrb[0].mxu0
      %v993 = vpop.f32.mrb[0].mxu0
      %v994 = vadd.f32 %v309, %v993
      %v995 = vpop.f32.mrb[0].mxu0
      %996 = vmatprep.mubr.bf16.mxu0 0
      %997 = vmatmul.mubr.bf16.gmra.mrb[0].mxu0 %v684
      %v998 = vpop.f32.mrb[0].mxu0
      %v999 = vadd.f32 %v309, %v998
      %v1000 = vpop.f32.mrb[0].mxu0
      %v1001 = vpop.f32.mrb[0].mxu0
      %v1002 = vadd.f32 %v309, %v1001
      %v1003 = vpop.f32.mrb[0].mxu0
      %1004 = vmatprep.mubr.bf16.mxu0 0
      %1005 = vmatmul.mubr.bf16.gmra.mrb[0].mxu0 %v687
      %v1006 = vpop.f32.mrb[0].mxu0
      %v1007 = vadd.f32 %v309, %v1006
      %v1008 = vpop.f32.mrb[0].mxu0
      %v1009 = vpop.f32.mrb[0].mxu0
      %v1010 = vadd.f32 %v309, %v1009
      %v1011 = vpop.f32.mrb[0].mxu0
      %1012 = vmatprep.mubr.bf16.mxu0 0
      %1013 = vmatmul.mubr.bf16.gmra.mrb[0].mxu0 %v690
      %v1014 = vpop.f32.mrb[0].mxu0
      %v1015 = vadd.f32 %v309, %v1014
      %v1016 = vpop.f32.mrb[0].mxu0
      %v1017 = vpop.f32.mrb[0].mxu0
      %v1018 = vadd.f32 %v309, %v1017
      %v1019 = vpop.f32.mrb[0].mxu0
      %1020 = vmatprep.mubr.bf16.mxu0 0
      %1021 = vmatmul.mubr.bf16.gmra.mrb[0].mxu0 %v693
      %v1022 = vpop.f32.mrb[0].mxu0
      %v1023 = vadd.f32 %v309, %v1022
      %v1024 = vpop.f32.mrb[0].mxu0
      %v1025 = vpop.f32.mrb[0].mxu0
      %v1026 = vadd.f32 %v309, %v1025
      %v1027 = vpop.f32.mrb[0].mxu0
      %1028 = vmatprep.mubr.bf16.mxu0 0
      %1029 = vmatmul.mubr.bf16.gmra.mrb[0].mxu0 %v696
      %v1030 = vpop.f32.mrb[0].mxu0
      %v1031 = vadd.f32 %v309, %v1030
      %v1032 = vpop.f32.mrb[0].mxu0
      %v1033 = vpop.f32.mrb[0].mxu0
      %v1034 = vadd.f32 %v309, %v1033
      %v1035 = vpop.f32.mrb[0].mxu0
      %1036 = vmatprep.mubr.bf16.mxu0 0
      %1037 = vmatmul.mubr.bf16.gmra.mrb[0].mxu0 %v699
      %v1038 = vpop.f32.mrb[0].mxu0
      %v1039 = vadd.f32 %v309, %v1038
      %v1040 = vpop.f32.mrb[0].mxu0
      %v1041 = vpop.f32.mrb[0].mxu0
      %v1042 = vadd.f32 %v309, %v1041
      %v1043 = vpop.f32.mrb[0].mxu0
      %1044 = vmatprep.mubr.bf16.mxu0 0
      %1045 = vmatmul.mubr.bf16.gmra.mrb[0].mxu0 %v702
      %v1046 = vpop.f32.mrb[0].mxu0
      %v1047 = vadd.f32 %v309, %v1046
      %v1048 = vpop.f32.mrb[0].mxu0
      %v1049 = vpop.f32.mrb[0].mxu0
      %v1050 = vadd.f32 %v309, %v1049
      %v1051 = vpop.f32.mrb[0].mxu0
      %1052 = vmatprep.mubr.bf16.mxu0 0
      %1053 = vmatmul.mubr.bf16.gmra.mrb[0].mxu0 %v705
      %v1054 = vpop.f32.mrb[0].mxu0
      %v1055 = vadd.f32 %v309, %v1054
      %v1056 = vpop.f32.mrb[0].mxu0
      %v1057 = vpop.f32.mrb[0].mxu0
      %v1058 = vadd.f32 %v309, %v1057
      %v1059 = vpop.f32.mrb[0].mxu0
      %1060 = vmatprep.mubr.bf16.mxu0 0
      %1061 = vmatmul.mubr.bf16.gmra.mrb[0].mxu0 %v708
      %v1062 = vpop.f32.mrb[0].mxu0
      %v1063 = vadd.f32 %v309, %v1062
      %v1064 = vpop.f32.mrb[0].mxu0
      %v1065 = vpop.f32.mrb[0].mxu0
      %v1066 = vadd.f32 %v309, %v1065
      %v1067 = vpop.f32.mrb[0].mxu0
      %1068 = vmatprep.mubr.bf16.mxu0 0
      %1069 = vmatmul.mubr.bf16.gmra.mrb[0].mxu0 %v711
      %v1070 = vpop.f32.mrb[0].mxu0
      %v1071 = vadd.f32 %v309, %v1070
      %v1072 = vpop.f32.mrb[0].mxu0
      %v1073 = vpop.f32.mrb[0].mxu0
      %v1074 = vadd.f32 %v309, %v1073
      %v1075 = vpop.f32.mrb[0].mxu0
      %1076 = vmatprep.mubr.bf16.mxu0 0
      %1077 = vmatmul.mubr.bf16.gmra.mrb[0].mxu0 %v714
      %v1078 = vpop.f32.mrb[0].mxu0
      %v1079 = vadd.f32 %v309, %v1078
      %v1080 = vpop.f32.mrb[0].mxu0
      %v1081 = vpop.f32.mrb[0].mxu0
      %v1082 = vadd.f32 %v309, %v1081
      %v1083 = vpop.f32.mrb[0].mxu0
      %1084 = vmatprep.mubr.bf16.mxu0 0
      %1085 = vmatmul.mubr.bf16.gmra.mrb[0].mxu0 %v717
      %v1086 = vpop.f32.mrb[0].mxu0
      %v1087 = vadd.f32 %v309, %v1086
      %v1088 = vpop.f32.mrb[0].mxu0
      %v1089 = vpop.f32.mrb[0].mxu0
      %v1090 = vadd.f32 %v309, %v1089
      %v1091 = vpop.f32.mrb[0].mxu0
      %1092 = vmatprep.mubr.bf16.mxu0 0
      %1093 = vmatmul.mubr.bf16.gmra.mrb[0].mxu0 %v720
      %v1094 = vpop.f32.mrb[0].mxu0
      %v1095 = vadd.f32 %v309, %v1094
      %v1096 = vpop.f32.mrb[0].mxu0
      %v1097 = vpop.f32.mrb[0].mxu0
      %v1098 = vadd.f32 %v309, %v1097
      %v1099 = vpop.f32.mrb[0].mxu0
      %1100 = vmatprep.mubr.bf16.mxu0 0
      %1101 = vmatmul.mubr.bf16.gmra.mrb[0].mxu0 %v723
      %v1102 = vpop.f32.mrb[0].mxu0
      %v1103 = vadd.f32 %v309, %v1102
      %v1104 = vpop.f32.mrb[0].mxu0
      %v1105 = vpop.f32.mrb[0].mxu0
      %v1106 = vadd.f32 %v309, %v1105
      %v1107 = vpop.f32.mrb[0].mxu0
      %1108 = vmatprep.mubr.bf16.mxu0 0
      %1109 = vmatmul.mubr.bf16.gmra.mrb[0].mxu0 %v726
      %v1110 = vpop.f32.mrb[0].mxu0
      %v1111 = vadd.f32 %v309, %v1110
      %v1112 = vpop.f32.mrb[0].mxu0
      %v1113 = vpop.f32.mrb[0].mxu0
      %v1114 = vadd.f32 %v309, %v1113
      %v1115 = vpop.f32.mrb[0].mxu0
      %1116 = vmatprep.mubr.bf16.mxu0 0
      %1117 = vmatmul.mubr.bf16.gmra.mrb[0].mxu0 %v729
      %v1118 = vpop.f32.mrb[0].mxu0
      %v1119 = vadd.f32 %v309, %v1118
      %v1120 = vpop.f32.mrb[0].mxu0
      %v1121 = vpop.f32.mrb[0].mxu0
      %v1122 = vadd.f32 %v309, %v1121
      %v1123 = vpop.f32.mrb[0].mxu0
      %1124 = vmatprep.mubr.bf16.mxu0 0
      %1125 = vmatmul.mubr.bf16.gmra.mrb[0].mxu0 %v732
      %v1126 = vpop.f32.mrb[0].mxu0
      %v1127 = vadd.f32 %v309, %v1126
      %v1128 = vpop.f32.mrb[0].mxu0
      %v1129 = vpop.f32.mrb[0].mxu0
      %v1130 = vadd.f32 %v309, %v1129
      %v1131 = vpop.f32.mrb[0].mxu0
      %1132 = vmatprep.mubr.bf16.mxu0 0
      %1133 = vmatmul.mubr.bf16.gmra.mrb[0].mxu0 %v735
      %v1134 = vpop.f32.mrb[0].mxu0
      %v1135 = vadd.f32 %v309, %v1134
      %v1136 = vpop.f32.mrb[0].mxu0
      %v1137 = vpop.f32.mrb[0].mxu0
      %v1138 = vadd.f32 %v309, %v1137
      %v1139 = vpop.f32.mrb[0].mxu0
      %1140 = vmatprep.mubr.bf16.mxu0 0
      %1141 = vmatmul.mubr.bf16.gmra.mrb[0].mxu0 %v738
      %v1142 = vpop.f32.mrb[0].mxu0
      %v1143 = vadd.f32 %v309, %v1142
      %v1144 = vpop.f32.mrb[0].mxu0
      %v1145 = vpop.f32.mrb[0].mxu0
      %v1146 = vadd.f32 %v309, %v1145
      %v1147 = vpop.f32.mrb[0].mxu0
      %1148 = vmatprep.mubr.bf16.mxu0 0
      %1149 = vmatmul.mubr.bf16.gmra.mrb[0].mxu0 %v741
      %v1150 = vpop.f32.mrb[0].mxu0
      %v1151 = vadd.f32 %v309, %v1150
      %v1152 = vpop.f32.mrb[0].mxu0
      %v1153 = vpop.f32.mrb[0].mxu0
      %v1154 = vadd.f32 %v309, %v1153
      %v1155 = vpop.f32.mrb[0].mxu0
      %1156 = vmatprep.mubr.bf16.mxu0 0
      %1157 = vmatmul.mubr.bf16.gmra.mrb[0].mxu0 %v744
      %v1158 = vpop.f32.mrb[0].mxu0
      %v1159 = vadd.f32 %v309, %v1158
      %v1160 = vpop.f32.mrb[0].mxu0
      %v1161 = vpop.f32.mrb[0].mxu0
      %v1162 = vadd.f32 %v309, %v1161
      %v1163 = vpop.f32.mrb[0].mxu0
      %1164 = vmatprep.mubr.bf16.mxu0 0
      %1165 = vmatmul.mubr.bf16.gmra.mrb[0].mxu0 %v747
      %v1166 = vpop.f32.mrb[0].mxu0
      %v1167 = vadd.f32 %v309, %v1166
      %v1168 = vpop.f32.mrb[0].mxu0
      %v1169 = vpop.f32.mrb[0].mxu0
      %v1170 = vadd.f32 %v309, %v1169
      %v1171 = vpop.f32.mrb[0].mxu0
      %1172 = vmatprep.mubr.bf16.mxu0 0
      %1173 = vmatmul.mubr.bf16.gmra.mrb[0].mxu0 %v750
      %v1174 = vpop.f32.mrb[0].mxu0
      %v1175 = vadd.f32 %v309, %v1174
      %v1176 = vpop.f32.mrb[0].mxu0
      %v1177 = vpop.f32.mrb[0].mxu0
      %v1178 = vadd.f32 %v309, %v1177
      %v1179 = vpop.f32.mrb[0].mxu0
      %1180 = vmatprep.mubr.bf16.mxu0 0
      %1181 = vmatmul.mubr.bf16.gmra.mrb[0].mxu0 %v753
      %v1182 = vpop.f32.mrb[0].mxu0
      %v1183 = vadd.f32 %v309, %v1182
      %v1184 = vpop.f32.mrb[0].mxu0
      %v1185 = vpop.f32.mrb[0].mxu0
      %v1186 = vadd.f32 %v309, %v1185
      %v1187 = vpop.f32.mrb[0].mxu0
      %1188 = vmatprep.mubr.bf16.mxu0 0
      %1189 = vmatmul.mubr.bf16.gmra.mrb[0].mxu0 %v756
      %v1190 = vpop.f32.mrb[0].mxu0
      %v1191 = vadd.f32 %v309, %v1190
      %v1192 = vpop.f32.mrb[0].mxu0
      %v1193 = vpop.f32.mrb[0].mxu0
      %v1194 = vadd.f32 %v309, %v1193
      %v1195 = vpop.f32.mrb[0].mxu0
      %1196 = vmatprep.mubr.bf16.mxu0 0
      %1197 = vmatmul.mubr.bf16.gmra.mrb[0].mxu0 %v759
      %v1198 = vpop.f32.mrb[0].mxu0
      %v1199 = vadd.f32 %v309, %v1198
      %v1200 = vpop.f32.mrb[0].mxu0
      %v1201 = vpop.f32.mrb[0].mxu0
      %v1202 = vadd.f32 %v309, %v1201
      %v1203 = vpop.f32.mrb[0].mxu0
      %1204 = vmatprep.mubr.bf16.mxu0 0
      %1205 = vmatmul.mubr.bf16.gmra.mrb[0].mxu0 %v762
      %v1206 = vpop.f32.mrb[0].mxu0
      %v1207 = vadd.f32 %v309, %v1206
      %v1208 = vpop.f32.mrb[0].mxu0
      %v1209 = vpop.f32.mrb[0].mxu0
      %v1210 = vadd.f32 %v309, %v1209
      %v1211 = vpop.f32.mrb[0].mxu0
      %1212 = vmatprep.mubr.bf16.mxu0 0
      %1213 = vmatmul.mubr.bf16.gmra.mrb[0].mxu0 %v765
      %v1214 = vpop.f32.mrb[0].mxu0
      %v1215 = vadd.f32 %v309, %v1214
      %v1216 = vpop.f32.mrb[0].mxu0
      %v1217 = vpop.f32.mrb[0].mxu0
      %v1218 = vadd.f32 %v309, %v1217
      %v1219 = vpop.f32.mrb[0].mxu0
      %1220 = vmatprep.mubr.bf16.mxu0 0
      %1221 = vmatmul.mubr.bf16.gmra.mrb[0].mxu0 %v768
      %v1222 = vpop.f32.mrb[0].mxu0
      %v1223 = vadd.f32 %v309, %v1222
      %v1224 = vpop.f32.mrb[0].mxu0
      %v1225 = vpop.f32.mrb[0].mxu0
      %v1226 = vadd.f32 %v309, %v1225
      %v1227 = vpop.f32.mrb[0].mxu0
      %1228 = vmatprep.mubr.bf16.mxu0 0
      %1229 = vmatmul.mubr.bf16.gmra.mrb[0].mxu0 %v771
      %v1230 = vpop.f32.mrb[0].mxu0
      %v1231 = vadd.f32 %v309, %v1230
      %v1232 = vpop.f32.mrb[0].mxu0
      %v1233 = vpop.f32.mrb[0].mxu0
      %v1234 = vadd.f32 %v309, %v1233
      %v1235 = vpop.f32.mrb[0].mxu0
      %1236 = vmatprep.mubr.bf16.mxu0 0
      %1237 = vmatmul.mubr.bf16.gmra.mrb[0].mxu0 %v774
      %v1238 = vpop.f32.mrb[0].mxu0
      %v1239 = vadd.f32 %v309, %v1238
      %v1240 = vpop.f32.mrb[0].mxu0
      %v1241 = vpop.f32.mrb[0].mxu0
      %v1242 = vadd.f32 %v309, %v1241
      %v1243 = vpop.f32.mrb[0].mxu0
      %1244 = vmatprep.mubr.bf16.mxu0 0
      %1245 = vmatmul.mubr.bf16.gmra.mrb[0].mxu0 %v777
      %v1246 = vpop.f32.mrb[0].mxu0
      %v1247 = vadd.f32 %v309, %v1246
      %v1248 = vpop.f32.mrb[0].mxu0
      %v1249 = vpop.f32.mrb[0].mxu0
      %v1250 = vadd.f32 %v309, %v1249
      %v1251 = vpop.f32.mrb[0].mxu0
      %1252 = vmatprep.mubr.bf16.mxu0 0
      %1253 = vmatmul.mubr.bf16.gmra.mrb[0].mxu0 %v780
      %v1254 = vpop.f32.mrb[0].mxu0
      %v1255 = vadd.f32 %v309, %v1254
      %v1256 = vpop.f32.mrb[0].mxu0
      %v1257 = vpop.f32.mrb[0].mxu0
      %v1258 = vadd.f32 %v309, %v1257
      %v1259 = vpop.f32.mrb[0].mxu0
      %1260 = vmatprep.mubr.bf16.mxu0 0
      %1261 = vmatmul.mubr.bf16.gmra.mrb[0].mxu0 %v783
      %v1262 = vpop.f32.mrb[0].mxu0
      %v1263 = vadd.f32 %v309, %v1262
      %v1264 = vpop.f32.mrb[0].mxu0
      %v1265 = vpop.f32.mrb[0].mxu0
      %v1266 = vadd.f32 %v309, %v1265
      %v1267 = vpop.f32.mrb[0].mxu0
      %1268 = vmatprep.mubr.bf16.mxu0 0
      %1269 = vmatmul.mubr.bf16.gmra.mrb[0].mxu0 %v786
      %v1270 = vpop.f32.mrb[0].mxu0
      %v1271 = vadd.f32 %v309, %v1270
      %v1272 = vpop.f32.mrb[0].mxu0
      %v1273 = vpop.f32.mrb[0].mxu0
      %v1274 = vadd.f32 %v309, %v1273
      %v1275 = vpop.f32.mrb[0].mxu0
      %1276 = vmatprep.mubr.bf16.mxu0 0
      %1277 = vmatmul.mubr.bf16.gmra.mrb[0].mxu0 %v789
      %v1278 = vpop.f32.mrb[0].mxu0
      %v1279 = vadd.f32 %v309, %v1278
      %v1280 = vpop.f32.mrb[0].mxu0
      %v1281 = vpop.f32.mrb[0].mxu0
      %v1282 = vadd.f32 %v309, %v1281
      %v1283 = vpop.f32.mrb[0].mxu0
      %1284 = vmatprep.mubr.bf16.mxu0 0
      %1285 = vmatmul.mubr.bf16.gmra.mrb[0].mxu0 %v792
      %v1286 = vpop.f32.mrb[0].mxu0
      %v1287 = vadd.f32 %v309, %v1286
      %v1288 = vpop.f32.mrb[0].mxu0
      %v1289 = vpop.f32.mrb[0].mxu0
      %v1290 = vadd.f32 %v309, %v1289
      %v1291 = vpop.f32.mrb[0].mxu0
      %1292 = vmatprep.mubr.bf16.mxu0 0
      %1293 = vmatmul.mubr.bf16.gmra.mrb[0].mxu0 %v795
      %v1294 = vpop.f32.mrb[0].mxu0
      %v1295 = vadd.f32 %v309, %v1294
      %v1296 = vpop.f32.mrb[0].mxu0
      %v1297 = vpop.f32.mrb[0].mxu0
      %v1298 = vadd.f32 %v309, %v1297
      %v1299 = vpop.f32.mrb[0].mxu0
      %1300 = vmatprep.mubr.bf16.mxu0 0
      %1301 = vmatmul.mubr.bf16.gmra.mrb[0].mxu0 %v798
      %v1302 = vpop.f32.mrb[0].mxu0
      %v1303 = vadd.f32 %v309, %v1302
      %v1304 = vpop.f32.mrb[0].mxu0
      %v1305 = vpop.f32.mrb[0].mxu0
      %v1306 = vadd.f32 %v309, %v1305
      %v1307 = vpop.f32.mrb[0].mxu0
      %1308 = vmatprep.mubr.bf16.mxu0 0
      %1309 = vmatmul.mubr.bf16.gmra.mrb[0].mxu0 %v801
      %v1310 = vpop.f32.mrb[0].mxu0
      %v1311 = vadd.f32 %v309, %v1310
      %v1312 = vpop.f32.mrb[0].mxu0
      %v1313 = vpop.f32.mrb[0].mxu0
      %v1314 = vadd.f32 %v309, %v1313
      %v1315 = vpop.f32.mrb[0].mxu0
      %1316 = vmatprep.mubr.bf16.mxu0 0
      %1317 = vmatmul.mubr.bf16.gmra.mrb[0].mxu0 %v804
      %v1318 = vpop.f32.mrb[0].mxu0
      %v1319 = vadd.f32 %v309, %v1318
      %v1320 = vpop.f32.mrb[0].mxu0
      %v1321 = vpop.f32.mrb[0].mxu0
      %v1322 = vadd.f32 %v309, %v1321
      %v1323 = vpop.f32.mrb[0].mxu0
      %1324 = vmatprep.mubr.bf16.mxu0 0
      %1325 = vmatmul.mubr.bf16.gmra.mrb[0].mxu0 %v807
      %v1326 = vpop.f32.mrb[0].mxu0
      %v1327 = vadd.f32 %v309, %v1326
      %v1328 = vpop.f32.mrb[0].mxu0
      %v1329 = vpop.f32.mrb[0].mxu0
      %v1330 = vadd.f32 %v309, %v1329
      %v1331 = vpop.f32.mrb[0].mxu0
      %1332 = vmatprep.mubr.bf16.mxu0 0
      %1333 = vmatmul.mubr.bf16.gmra.mrb[0].mxu0 %v810
      %v1334 = vpop.f32.mrb[0].mxu0
      %v1335 = vadd.f32 %v309, %v1334
      %v1336 = vpop.f32.mrb[0].mxu0
      %v1337 = vpop.f32.mrb[0].mxu0
      %v1338 = vadd.f32 %v309, %v1337
      %v1339 = vpop.f32.mrb[0].mxu0
      %1340 = vmatprep.mubr.bf16.mxu0 0
      %1341 = vmatmul.mubr.bf16.gmra.mrb[0].mxu0 %v813
      %v1342 = vpop.f32.mrb[0].mxu0
      %v1343 = vadd.f32 %v309, %v1342
      %v1344 = vpop.f32.mrb[0].mxu0
      %v1345 = vpop.f32.mrb[0].mxu0
      %v1346 = vadd.f32 %v309, %v1345
      %v1347 = vpop.f32.mrb[0].mxu0
      %1348 = vmatprep.mubr.bf16.mxu0 0
      %1349 = vmatmul.mubr.bf16.gmra.mrb[0].mxu0 %v816
      %v1350 = vpop.f32.mrb[0].mxu0
      %v1351 = vadd.f32 %v309, %v1350
      %v1352 = vpop.f32.mrb[0].mxu0
      %v1353 = vpop.f32.mrb[0].mxu0
      %v1354 = vadd.f32 %v309, %v1353
      %v1355 = vpop.f32.mrb[0].mxu0
      %1356 = vmatprep.mubr.bf16.mxu0 0
      %1357 = vmatmul.mubr.bf16.gmra.mrb[0].mxu0 %v819
      %v1358 = vpop.f32.mrb[0].mxu0
      %v1359 = vadd.f32 %v309, %v1358
      %v1360 = vpop.f32.mrb[0].mxu0
      %v1361 = vpop.f32.mrb[0].mxu0
      %v1362 = vadd.f32 %v309, %v1361
      %v1363 = vpop.f32.mrb[0].mxu0
      %1364 = vmatprep.mubr.bf16.mxu0 0
      %1365 = vmatmul.mubr.bf16.gmra.mrb[0].mxu0 %v822
      %v1366 = vpop.f32.mrb[0].mxu0
      %v1367 = vadd.f32 %v309, %v1366
      %v1368 = vpop.f32.mrb[0].mxu0
      %v1369 = vpop.f32.mrb[0].mxu0
      %v1370 = vadd.f32 %v309, %v1369
      %v1371 = vpop.f32.mrb[0].mxu0
      %1372 = vdwg.mxu0
      %1373 = vst [vmem:[%s172] sm:$0xff] %v863
      %1374 = vst [vmem:[%s172 + $0x8] sm:$0xff] %v866
      %1375 = vst [vmem:[%s172 + $0x10] sm:$0xff] %v871
      %1376 = vst [vmem:[%s172 + $0x18] sm:$0xff] %v874
      %1377 = vst [vmem:[%s172 + $0x20] sm:$0xff] %v879
      %1378 = vst [vmem:[%s172 + $0x28] sm:$0xff] %v882
      %1379 = vst [vmem:[%s172 + $0x30] sm:$0xff] %v887
      %1380 = vst [vmem:[%s172 + $0x38] sm:$0xff] %v890
      %1381 = vst [vmem:[%s172 + $0x40] sm:$0xff] %v895
      %1382 = vst [vmem:[%s172 + $0x48] sm:$0xff] %v898
      %1383 = vst [vmem:[%s172 + $0x50] sm:$0xff] %v903
      %1384 = vst [vmem:[%s172 + $0x58] sm:$0xff] %v906
      %1385 = vst [vmem:[%s172 + $0x60] sm:$0xff] %v911
      %1386 = vst [vmem:[%s172 + $0x68] sm:$0xff] %v914
      %1387 = vst [vmem:[%s172 + $0x70] sm:$0xff] %v919
      %1388 = vst [vmem:[%s172 + $0x78] sm:$0xff] %v922
      %1389 = vst [vmem:[%s172 + $0x80] sm:$0xff] %v927
      %1390 = vst [vmem:[%s172 + $0x88] sm:$0xff] %v930
      %1391 = vst [vmem:[%s172 + $0x90] sm:$0xff] %v935
      %1392 = vst [vmem:[%s172 + $0x98] sm:$0xff] %v938
      %1393 = vst [vmem:[%s172 + $0xa0] sm:$0xff] %v943
      %1394 = vst [vmem:[%s172 + $0xa8] sm:$0xff] %v946
      %1395 = vst [vmem:[%s172 + $0xb0] sm:$0xff] %v951
      %1396 = vst [vmem:[%s172 + $0xb8] sm:$0xff] %v954
      %1397 = vst [vmem:[%s172 + $0xc0] sm:$0xff] %v959
      %1398 = vst [vmem:[%s172 + $0xc8] sm:$0xff] %v962
      %1399 = vst [vmem:[%s172 + $0xd0] sm:$0xff] %v967
      %1400 = vst [vmem:[%s172 + $0xd8] sm:$0xff] %v970
      %1401 = vst [vmem:[%s172 + $0xe0] sm:$0xff] %v975
      %1402 = vst [vmem:[%s172 + $0xe8] sm:$0xff] %v978
      %1403 = vst [vmem:[%s172 + $0xf0] sm:$0xff] %v983
      %1404 = vst [vmem:[%s172 + $0xf8] sm:$0xff] %v986
      %1405 = vst [vmem:[%s172 + $0x100] sm:$0xff] %v991
      %1406 = vst [vmem:[%s172 + $0x108] sm:$0xff] %v994
      %1407 = vst [vmem:[%s172 + $0x110] sm:$0xff] %v999
      %1408 = vst [vmem:[%s172 + $0x118] sm:$0xff] %v1002
      %1409 = vst [vmem:[%s172 + $0x120] sm:$0xff] %v1007
      %1410 = vst [vmem:[%s172 + $0x128] sm:$0xff] %v1010
      %1411 = vst [vmem:[%s172 + $0x130] sm:$0xff] %v1015
      %1412 = vst [vmem:[%s172 + $0x138] sm:$0xff] %v1018
      %1413 = vst [vmem:[%s172 + $0x140] sm:$0xff] %v1023
      %1414 = vst [vmem:[%s172 + $0x148] sm:$0xff] %v1026
      %1415 = vst [vmem:[%s172 + $0x150] sm:$0xff] %v1031
      %1416 = vst [vmem:[%s172 + $0x158] sm:$0xff] %v1034
      %1417 = vst [vmem:[%s172 + $0x160] sm:$0xff] %v1039
      %1418 = vst [vmem:[%s172 + $0x168] sm:$0xff] %v1042
      %1419 = vst [vmem:[%s172 + $0x170] sm:$0xff] %v1047
      %1420 = vst [vmem:[%s172 + $0x178] sm:$0xff] %v1050
      %1421 = vst [vmem:[%s172 + $0x180] sm:$0xff] %v1055
      %1422 = vst [vmem:[%s172 + $0x188] sm:$0xff] %v1058
      %1423 = vst [vmem:[%s172 + $0x190] sm:$0xff] %v1063
      %1424 = vst [vmem:[%s172 + $0x198] sm:$0xff] %v1066
      %1425 = vst [vmem:[%s172 + $0x1a0] sm:$0xff] %v1071
      %1426 = vst [vmem:[%s172 + $0x1a8] sm:$0xff] %v1074
      %1427 = vst [vmem:[%s172 + $0x1b0] sm:$0xff] %v1079
      %1428 = vst [vmem:[%s172 + $0x1b8] sm:$0xff] %v1082
      %1429 = vst [vmem:[%s172 + $0x1c0] sm:$0xff] %v1087
      %1430 = vst [vmem:[%s172 + $0x1c8] sm:$0xff] %v1090
      %1431 = vst [vmem:[%s172 + $0x1d0] sm:$0xff] %v1095
      %1432 = vst [vmem:[%s172 + $0x1d8] sm:$0xff] %v1098
      %1433 = vst [vmem:[%s172 + $0x1e0] sm:$0xff] %v1103
      %1434 = vst [vmem:[%s172 + $0x1e8] sm:$0xff] %v1106
      %1435 = vst [vmem:[%s172 + $0x1f0] sm:$0xff] %v1111
      %1436 = vst [vmem:[%s172 + $0x1f8] sm:$0xff] %v1114
      %1437 = vst [vmem:[%s172 + $0x200] sm:$0xff] %v1119
      %1438 = vst [vmem:[%s172 + $0x208] sm:$0xff] %v1122
      %1439 = vst [vmem:[%s172 + $0x210] sm:$0xff] %v1127
      %1440 = vst [vmem:[%s172 + $0x218] sm:$0xff] %v1130
      %1441 = vst [vmem:[%s172 + $0x220] sm:$0xff] %v1135
      %1442 = vst [vmem:[%s172 + $0x228] sm:$0xff] %v1138
      %1443 = vst [vmem:[%s172 + $0x230] sm:$0xff] %v1143
      %1444 = vst [vmem:[%s172 + $0x238] sm:$0xff] %v1146
      %1445 = vst [vmem:[%s172 + $0x240] sm:$0xff] %v1151
      %1446 = vst [vmem:[%s172 + $0x248] sm:$0xff] %v1154
      %1447 = vst [vmem:[%s172 + $0x250] sm:$0xff] %v1159
      %1448 = vst [vmem:[%s172 + $0x258] sm:$0xff] %v1162
      %1449 = vst [vmem:[%s172 + $0x260] sm:$0xff] %v1167
      %1450 = vst [vmem:[%s172 + $0x268] sm:$0xff] %v1170
      %1451 = vst [vmem:[%s172 + $0x270] sm:$0xff] %v1175
      %1452 = vst [vmem:[%s172 + $0x278] sm:$0xff] %v1178
      %1453 = vst [vmem:[%s172 + $0x280] sm:$0xff] %v1183
      %1454 = vst [vmem:[%s172 + $0x288] sm:$0xff] %v1186
      %1455 = vst [vmem:[%s172 + $0x290] sm:$0xff] %v1191
      %1456 = vst [vmem:[%s172 + $0x298] sm:$0xff] %v1194
      %1457 = vst [vmem:[%s172 + $0x2a0] sm:$0xff] %v1199
      %1458 = vst [vmem:[%s172 + $0x2a8] sm:$0xff] %v1202
      %1459 = vst [vmem:[%s172 + $0x2b0] sm:$0xff] %v1207
      %1460 = vst [vmem:[%s172 + $0x2b8] sm:$0xff] %v1210
      %1461 = vst [vmem:[%s172 + $0x2c0] sm:$0xff] %v1215
      %1462 = vst [vmem:[%s172 + $0x2c8] sm:$0xff] %v1218
      %1463 = vst [vmem:[%s172 + $0x2d0] sm:$0xff] %v1223
      %1464 = vst [vmem:[%s172 + $0x2d8] sm:$0xff] %v1226
      %1465 = vst [vmem:[%s172 + $0x2e0] sm:$0xff] %v1231
      %1466 = vst [vmem:[%s172 + $0x2e8] sm:$0xff] %v1234
      %1467 = vst [vmem:[%s172 + $0x2f0] sm:$0xff] %v1239
      %1468 = vst [vmem:[%s172 + $0x2f8] sm:$0xff] %v1242
      %1469 = vst [vmem:[%s172 + $0x300] sm:$0xff] %v1247
      %1470 = vst [vmem:[%s172 + $0x308] sm:$0xff] %v1250
      %1471 = vst [vmem:[%s172 + $0x310] sm:$0xff] %v1255
      %1472 = vst [vmem:[%s172 + $0x318] sm:$0xff] %v1258
      %1473 = vst [vmem:[%s172 + $0x320] sm:$0xff] %v1263
      %1474 = vst [vmem:[%s172 + $0x328] sm:$0xff] %v1266
      %1475 = vst [vmem:[%s172 + $0x330] sm:$0xff] %v1271
      %1476 = vst [vmem:[%s172 + $0x338] sm:$0xff] %v1274
      %1477 = vst [vmem:[%s172 + $0x340] sm:$0xff] %v1279
      %1478 = vst [vmem:[%s172 + $0x348] sm:$0xff] %v1282
      %1479 = vst [vmem:[%s172 + $0x350] sm:$0xff] %v1287
      %1480 = vst [vmem:[%s172 + $0x358] sm:$0xff] %v1290
      %1481 = vst [vmem:[%s172 + $0x360] sm:$0xff] %v1295
      %1482 = vst [vmem:[%s172 + $0x368] sm:$0xff] %v1298
      %1483 = vst [vmem:[%s172 + $0x370] sm:$0xff] %v1303
      %1484 = vst [vmem:[%s172 + $0x378] sm:$0xff] %v1306
      %1485 = vst [vmem:[%s172 + $0x380] sm:$0xff] %v1311
      %1486 = vst [vmem:[%s172 + $0x388] sm:$0xff] %v1314
      %1487 = vst [vmem:[%s172 + $0x390] sm:$0xff] %v1319
      %1488 = vst [vmem:[%s172 + $0x398] sm:$0xff] %v1322
      %1489 = vst [vmem:[%s172 + $0x3a0] sm:$0xff] %v1327
      %1490 = vst [vmem:[%s172 + $0x3a8] sm:$0xff] %v1330
      %1491 = vst [vmem:[%s172 + $0x3b0] sm:$0xff] %v1335
      %1492 = vst [vmem:[%s172 + $0x3b8] sm:$0xff] %v1338
      %1493 = vst [vmem:[%s172 + $0x3c0] sm:$0xff] %v1343
      %1494 = vst [vmem:[%s172 + $0x3c8] sm:$0xff] %v1346
      %1495 = vst [vmem:[%s172 + $0x3d0] sm:$0xff] %v1351
      %1496 = vst [vmem:[%s172 + $0x3d8] sm:$0xff] %v1354
      %1497 = vst [vmem:[%s172 + $0x3e0] sm:$0xff] %v1359
      %1498 = vst [vmem:[%s172 + $0x3e8] sm:$0xff] %v1362
      %1499 = vst [vmem:[%s172 + $0x3f0] sm:$0xff] %v1367
      %1500 = vst [vmem:[%s172 + $0x3f8] sm:$0xff] %v1370
      %s1501 = smul.u32 128, %s14
      %p1502 = scmp.lt.s32.totalorder %s1501, 255
      %s1503 = scalar_select %p1502, %s1501, 255
      %s1504 = smul.addr %s1503, 8
      %s1505 = scalar_lea.vmem %s3, %s1504
      // Predicated region
      $region33: #{fcn_forward.13} parent=31 // pred_check
        %p1506 = pneg %p100
      $region34: #{fcn_forward.13} parent=31 // pred_check_branch
        %1508 = sbr.rel (%p1506) target = $region36
      $region35: #{fcn_forward.13} parent=31 // pred_region
        %s1509 = smul.u32 128, %s14
      $region36: #{fcn_forward.13} parent=31 // pred_fallthru
        _
    $region32: #{fcn_forward.13} parent=5 // pred_fallthru
      _
    %p1510 = scmp.le.s32.totalorder 2, %s9
    // Predicated region
    $region37: #{fcn_forward.13} parent=5 // pred_check
      %p1511 = pneg %p1510
    $region38: #{fcn_forward.13} parent=5 // pred_check_branch
      %1513 = sbr.rel (%p1511) target = $region40
    $region39: #{fcn_forward.13} parent=5 // pred_region
      %s1514 = ssub.s32 %s9, 2
      // Predicated region
      $region41: #{fcn_forward.13} parent=39 // pred_check
        %p1515 = pneg %p106
      $region42: #{fcn_forward.13} parent=39 // pred_check_branch
        %1517 = sbr.rel (%p1515) target = $region44
      $region43: #{fcn_forward.13} parent=39 // pred_region
        %s1518 = smul.u32 128, %s15
        %p1519 = scmp.lt.s32.totalorder %s1518, 255
        %s1520 = scalar_select %p1519, %s1518, 255
        %s1521 = smul.addr %s1520, 8
        %s1522 = scalar_lea.vmem %s3, %s1521
      $region44: #{fcn_forward.13} parent=39 // pred_fallthru
        _
    $region40: #{fcn_forward.13} parent=5 // pred_fallthru
      _
  $region6: #{fcn_forward.13} parent=0 // loop_footer
    %s13 = sadd.s32 1, %s9
  $region7: #{fcn_forward.13} parent=0 // loop_footer_branch
    %8 = sbr.rel target = $region3
  $region8: #{fcn_forward.13} parent=0 // loop_exit
    _

</llo_original>
